<compile_context>
chip_gen: v7x
topology: tpu7x:2x2x1
jax: 0.10.0
libtpu: 0.0.40
codegen_flags: <defaults>
</compile_context>

<pallas_src>
import jax
import jax.numpy as jnp
from jax.experimental import pallas as pl
from jax.experimental.pallas import tpu as pltpu

LANES = 128
PACK1 = LANES // 16   # 8 conv1 output pixels packed per stored row -> 128 lanes
PACK2 = LANES // 32   # 4 conv2 output pixels packed per stored row -> 128 lanes


# ----------------------------------------------------------------------------
# Pallas kernels
# ----------------------------------------------------------------------------
def _conv_pool_kernel(a0_ref, a1_ref, a2_ref, a3_ref, w_ref, b_ref, o_ref):
    """out = relu(max_q(a_q @ W) + bias); a_q are the 4 pool-quadrant im2col
    blocks (packed, block-diagonal weight) -> conv+bias+ReLU+maxpool fused."""
    w = w_ref[...]
    m0 = jnp.dot(a0_ref[...], w, preferred_element_type=jnp.float32)
    m1 = jnp.dot(a1_ref[...], w, preferred_element_type=jnp.float32)
    m2 = jnp.dot(a2_ref[...], w, preferred_element_type=jnp.float32)
    m3 = jnp.dot(a3_ref[...], w, preferred_element_type=jnp.float32)
    pooled = jnp.maximum(jnp.maximum(m0, m1), jnp.maximum(m2, m3))
    o_ref[...] = jnp.maximum(pooled + b_ref[...], 0.0).astype(o_ref.dtype)


def conv_pool_fused(quads, w_big, b_big, *, n_row_tiles=2):
    """quads: 4 arrays (M, K); w_big: (K, 128); b_big: (128,). Returns (M, 128)."""
    M, K = quads[0].shape
    Kw, Nc = w_big.shape
    assert K == Kw
    g = n_row_tiles
    if M % g != 0 or (M // g) % 8 != 0:
        g = 1
    tm = M // g
    a_spec = pl.BlockSpec((tm, K), lambda i: (i, 0))
    return pl.pallas_call(
        _conv_pool_kernel,
        out_shape=jax.ShapeDtypeStruct((M, Nc), jnp.float32),
        grid_spec=pltpu.PrefetchScalarGridSpec(
            num_scalar_prefetch=0,
            grid=(g,),
            in_specs=[a_spec, a_spec, a_spec, a_spec,
                      pl.BlockSpec((K, Nc), lambda i: (0, 0)),
                      pl.BlockSpec((1, Nc), lambda i: (0, 0))],
            out_specs=pl.BlockSpec((tm, Nc), lambda i: (i, 0)),
        ),
        compiler_params=pltpu.CompilerParams(
            dimension_semantics=("parallel",),
        ),
    )(*quads, w_big, b_big.reshape(1, Nc))


def _mlp_kernel(x_ref, w1_ref, b1_ref, w2_ref, b2_ref, o_ref, acc_ref):
    """Fused fc1(+ReLU)+fc2, with fc1's K dimension tiled over the grid."""
    k = pl.program_id(0)

    @pl.when(k == 0)
    def _():
        acc_ref[...] = jnp.zeros_like(acc_ref)

    acc_ref[...] += jnp.dot(x_ref[...], w1_ref[...],
                            preferred_element_type=jnp.float32)

    @pl.when(k == pl.num_programs(0) - 1)
    def _():
        h = jnp.maximum(acc_ref[...] + b1_ref[...], 0.0)
        o_ref[...] = (jnp.dot(h, w2_ref[...], preferred_element_type=jnp.float32)
                      + b2_ref[...]).astype(o_ref.dtype)


def mlp_fused(x, w1_t, b1, w2_t, b2, *, tk=1024):
    """out = (relu(x @ w1_t + b1)) @ w2_t + b2.  x:(B,K) w1_t:(K,H) w2_t:(H,O)."""
    B, K = x.shape
    K1, H = w1_t.shape
    H2, O = w2_t.shape
    assert K == K1 and H == H2
    if K % tk != 0:
        tk = K
    grid = (K // tk,)
    return pl.pallas_call(
        _mlp_kernel,
        out_shape=jax.ShapeDtypeStruct((B, O), jnp.float32),
        grid_spec=pltpu.PrefetchScalarGridSpec(
            num_scalar_prefetch=0,
            grid=grid,
            in_specs=[
                pl.BlockSpec((B, tk), lambda k: (0, k)),
                pl.BlockSpec((tk, H), lambda k: (k, 0)),
                pl.BlockSpec((1, H), lambda k: (0, 0)),
                pl.BlockSpec((H, O), lambda k: (0, 0)),
                pl.BlockSpec((1, O), lambda k: (0, 0)),
            ],
            out_specs=pl.BlockSpec((B, O), lambda k: (0, 0)),
            scratch_shapes=[pltpu.VMEM((B, H), jnp.float32)],
        ),
        compiler_params=pltpu.CompilerParams(
            dimension_semantics=("arbitrary",),
        ),
    )(x, w1_t, b1.reshape(1, H), w2_t, b2.reshape(1, O))


# ----------------------------------------------------------------------------
# Glue: quadrant im2col (pure indexing / reshape, no compute)
# ----------------------------------------------------------------------------
def im2col_pool_quadrants(x):
    """x: NHWC (N,H,W,C), 3x3 SAME conv followed by 2x2/2 pool geometry.
    Returns 4 arrays (N*Ho*Wo, 9*C), one per pool quadrant (dy,dx).
    Row i of quadrant q is the im2col patch of conv output (2*ho+dy, 2*wo+dx)."""
    N, H, W, C = x.shape
    Ho, Wo = H // 2, W // 2
    xp = jnp.pad(x, ((0, 0), (1, 1), (1, 1), (0, 0)))
    quads = []
    for dy in range(2):
        for dx in range(2):
            parts = []
            for kh in range(3):
                for kw in range(3):
                    parts.append(xp[:, dy + kh: dy + kh + H: 2,
                                       dx + kw: dx + kw + W: 2, :])
            quads.append(jnp.concatenate(parts, axis=-1)
                         .reshape(N * Ho * Wo, 9 * C))
    return quads


def conv_weight_to_matrix(w):
    """PyTorch OIHW (Cout,Cin,KH,KW) -> (KH*KW*Cin, Cout) matching im2col order."""
    cout, cin, kh, kw = w.shape
    return jnp.transpose(w, (2, 3, 1, 0)).reshape(kh * kw * cin, cout)


def block_diag_pack(wmat, bias, pack):
    """(K,Cout) weight -> (pack*K, pack*Cout) block-diagonal, bias tiled.
    Lets the matmul emit `pack` consecutive output pixels per stored row so the
    stored last dim is pack*Cout = 128 lanes (lane-dense stores)."""
    K, Cout = wmat.shape
    wb = jnp.zeros((pack * K, pack * Cout), wmat.dtype)
    for p in range(pack):
        wb = wb.at[p * K:(p + 1) * K, p * Cout:(p + 1) * Cout].set(wmat)
    return wb, jnp.tile(bias, pack)


# ----------------------------------------------------------------------------
# Params (torch layout) and one-time kernel-ready prep
# ----------------------------------------------------------------------------
def init_params(key):
    ks = jax.random.split(key, 8)
    s = 0.05
    return {
        "conv1_w": s * jax.random.normal(ks[0], (16, 3, 3, 3), jnp.float32),
        "conv1_b": s * jax.random.normal(ks[1], (16,), jnp.float32),
        "conv2_w": s * jax.random.normal(ks[2], (32, 16, 3, 3), jnp.float32),
        "conv2_b": s * jax.random.normal(ks[3], (32,), jnp.float32),
        "fc1_w": s * jax.random.normal(ks[4], (256, 32 * 16 * 16), jnp.float32),
        "fc1_b": s * jax.random.normal(ks[5], (256,), jnp.float32),
        "fc2_w": s * jax.random.normal(ks[6], (2, 256), jnp.float32),
        "fc2_b": s * jax.random.normal(ks[7], (2,), jnp.float32),
    }


def prepare_params(params):
    """One-time prep: block-diag packed conv weights, pre-transposed FC weights
    with the torch NCHW-flatten permutation folded into fc1's columns."""
    w1m = conv_weight_to_matrix(params["conv1_w"])        # (27, 16)
    w2m = conv_weight_to_matrix(params["conv2_w"])        # (144, 32)
    c1_wb, c1_bb = block_diag_pack(w1m, params["conv1_b"], PACK1)  # (216,128),(128,)
    c2_wb, c2_bb = block_diag_pack(w2m, params["conv2_b"], PACK2)  # (576,128),(128,)

    # fc1_w is (256, 32*16*16) indexed by f = c*256 + h*16 + w (NCHW flatten).
    # Our conv2 output is NHWC-contiguous: g = (h*16 + w)*32 + c. Permute
    # fc1 columns once so the kernel can consume the NHWC flatten directly,
    # and pre-transpose to (K, 256).
    fc1_perm = (params["fc1_w"].reshape(256, 32, 16, 16)
                .transpose(0, 2, 3, 1).reshape(256, 32 * 16 * 16))
    return {
        "c1_wb": c1_wb, "c1_bb": c1_bb,
        "c2_wb": c2_wb, "c2_bb": c2_bb,
        "fc1_wt": fc1_perm.T,              # (8192, 256)
        "fc1_b": params["fc1_b"],
        "fc2_wt": params["fc2_w"].T,       # (256, 2)
        "fc2_b": params["fc2_b"],
    }


# ----------------------------------------------------------------------------
# Forward
# ----------------------------------------------------------------------------
def bloodstain_forward(x_nchw, kp):
    x = jnp.transpose(x_nchw, (0, 2, 3, 1)).astype(jnp.float32)  # NHWC (N,64,64,3)
    N, H, W, _ = x.shape

    # conv1 + ReLU + 2x2 maxpool (one fused kernel)
    q1 = im2col_pool_quadrants(x)                                  # 4 x (N*1024, 27)
    M1 = q1[0].shape[0]
    q1 = [q.reshape(M1 // PACK1, PACK1 * q.shape[1]) for q in q1]  # (N*128, 216)
    y1 = conv_pool_fused(q1, kp["c1_wb"], kp["c1_bb"])             # (N*128, 128)
    y1 = y1.reshape(N, H // 2, W // 2, 16)                         # NHWC (N,32,32,16)

    # conv2 + ReLU + 2x2 maxpool (one fused kernel)
    q2 = im2col_pool_quadrants(y1)                                 # 4 x (N*256, 144)
    M2 = q2[0].shape[0]
    q2 = [q.reshape(M2 // PACK2, PACK2 * q.shape[1]) for q in q2]  # (N*64, 576)
    y2 = conv_pool_fused(q2, kp["c2_wb"], kp["c2_bb"])             # (N*64, 128)

    # NHWC-contiguous flatten; the NCHW permutation is already folded into fc1.
    flat = y2.reshape(N, 32 * 16 * 16)                             # (N, 8192)

    # fc1 + ReLU + fc2 (one fused kernel, K-tiled fc1)
    return mlp_fused(flat, kp["fc1_wt"], kp["fc1_b"],
                     kp["fc2_wt"], kp["fc2_b"], tk=1024)           # (N, 2)


# ----------------------------------------------------------------------------
# Pure-JAX reference (independent path: lax conv + reshape pool, NCHW)
# ----------------------------------------------------------------------------
def bloodstain_forward_ref(x_nchw, params):
    x = x_nchw.astype(jnp.float32)

    def conv(xin, w, b):
        y = jax.lax.conv_general_dilated(
            xin, w, window_strides=(1, 1), padding=[(1, 1), (1, 1)],
            dimension_numbers=("NCHW", "OIHW", "NCHW"))
        return jax.nn.relu(y + b[None, :, None, None])

    def pool(xin):
        n, c, h, w = xin.shape
        return jnp.max(xin.reshape(n, c, h // 2, 2, w // 2, 2), axis=(3, 5))

    y = pool(conv(x, params["conv1_w"], params["conv1_b"]))
    y = pool(conv(y, params["conv2_w"], params["conv2_b"]))
    flat = y.reshape(y.shape[0], -1)                       # NCHW flatten (torch view)
    h = jax.nn.relu(flat @ params["fc1_w"].T + params["fc1_b"])
    return h @ params["fc2_w"].T + params["fc2_b"]


if __name__ == "__main__":
    key = jax.random.PRNGKey(0)
    k_x, k_p = jax.random.split(key)
    # Spatial size must be 64x64 so 32*16*16 matches fc1's input features.
    x = jax.random.normal(k_x, (2, 3, 64, 64), jnp.float32)
    params = init_params(k_p)
    kparams = prepare_params(params)   # one-time weight prep (no per-call .T)

    fwd = jax.jit(bloodstain_forward)
    out = jax.block_until_ready(fwd(x, kparams))
    ref = jax.block_until_ready(bloodstain_forward_ref(x, params))

    assert out.shape == (2, 2), out.shape
    assert jnp.all(jnp.isfinite(out))
    assert jnp.allclose(out, ref, atol=1e-4, rtol=1e-4), (out, ref)
    print("KERNEL_OK")
</pallas_src>

<mosaic_0001>
module attributes {stable_mosaic.version = 11 : i64} {
  func.func @_conv_pool_kernel(%arg0: i32, %arg1: memref<128x216xf32, #tpu.memory_space<vmem>>, %arg2: memref<128x216xf32, #tpu.memory_space<vmem>>, %arg3: memref<128x216xf32, #tpu.memory_space<vmem>>, %arg4: memref<128x216xf32, #tpu.memory_space<vmem>>, %arg5: memref<216x128xf32, #tpu.memory_space<vmem>>, %arg6: memref<1x128xf32, #tpu.memory_space<vmem>>, %arg7: memref<128x128xf32, #tpu.memory_space<vmem>>) attributes {dimension_semantics = [#tpu.dimension_semantics<parallel>], iteration_bounds = array<i64: 2>, scalar_prefetch = 0 : i64, scratch_operands = 0 : i64, tpu.core_type = #tpu.core_type<tc>, window_params = [{transform_indices = @transform_0, window_bounds = array<i64: 128, 216>}, {transform_indices = @transform_1, window_bounds = array<i64: 128, 216>}, {transform_indices = @transform_2, window_bounds = array<i64: 128, 216>}, {transform_indices = @transform_3, window_bounds = array<i64: 128, 216>}, {pipeline_mode = #tpu.pipeline_mode<synchronous>, transform_indices = @transform_4, window_bounds = array<i64: 216, 128>}, {pipeline_mode = #tpu.pipeline_mode<synchronous>, transform_indices = @transform_5, window_bounds = array<i64: 1, 128>}, {transform_indices = @transform_6, window_bounds = array<i64: 128, 128>}]} {
    %c0 = arith.constant 0 : index
    %c0_0 = arith.constant 0 : index
    %0 = vector.load %arg5[%c0, %c0_0] : memref<216x128xf32, #tpu.memory_space<vmem>>, vector<216x128xf32>
    %c0_1 = arith.constant 0 : index
    %c0_2 = arith.constant 0 : index
    %1 = vector.load %arg1[%c0_1, %c0_2] : memref<128x216xf32, #tpu.memory_space<vmem>>, vector<128x216xf32>
    %cst = arith.constant dense<0.000000e+00> : vector<128x128xf32>
    %2 = tpu.matmul %1, %0, %cst {dimension_numbers = #tpu.dot_dimension_numbers<[1], [0], [0], [1], [0, 0, 1, 1], [], []>} : vector<128x216xf32>, vector<216x128xf32>, vector<128x128xf32> -> vector<128x128xf32>
    %c0_3 = arith.constant 0 : index
    %c0_4 = arith.constant 0 : index
    %3 = vector.load %arg2[%c0_3, %c0_4] : memref<128x216xf32, #tpu.memory_space<vmem>>, vector<128x216xf32>
    %cst_5 = arith.constant dense<0.000000e+00> : vector<128x128xf32>
    %4 = tpu.matmul %3, %0, %cst_5 {dimension_numbers = #tpu.dot_dimension_numbers<[1], [0], [0], [1], [0, 0, 1, 1], [], []>} : vector<128x216xf32>, vector<216x128xf32>, vector<128x128xf32> -> vector<128x128xf32>
    %c0_6 = arith.constant 0 : index
    %c0_7 = arith.constant 0 : index
    %5 = vector.load %arg3[%c0_6, %c0_7] : memref<128x216xf32, #tpu.memory_space<vmem>>, vector<128x216xf32>
    %cst_8 = arith.constant dense<0.000000e+00> : vector<128x128xf32>
    %6 = tpu.matmul %5, %0, %cst_8 {dimension_numbers = #tpu.dot_dimension_numbers<[1], [0], [0], [1], [0, 0, 1, 1], [], []>} : vector<128x216xf32>, vector<216x128xf32>, vector<128x128xf32> -> vector<128x128xf32>
    %c0_9 = arith.constant 0 : index
    %c0_10 = arith.constant 0 : index
    %7 = vector.load %arg4[%c0_9, %c0_10] : memref<128x216xf32, #tpu.memory_space<vmem>>, vector<128x216xf32>
    %cst_11 = arith.constant dense<0.000000e+00> : vector<128x128xf32>
    %8 = tpu.matmul %7, %0, %cst_11 {dimension_numbers = #tpu.dot_dimension_numbers<[1], [0], [0], [1], [0, 0, 1, 1], [], []>} : vector<128x216xf32>, vector<216x128xf32>, vector<128x128xf32> -> vector<128x128xf32>
    %9 = arith.maximumf %2, %4 : vector<128x128xf32>
    %10 = arith.maximumf %6, %8 : vector<128x128xf32>
    %11 = arith.maximumf %9, %10 : vector<128x128xf32>
    %c0_12 = arith.constant 0 : index
    %c0_13 = arith.constant 0 : index
    %12 = vector.load %arg6[%c0_12, %c0_13] : memref<1x128xf32, #tpu.memory_space<vmem>>, vector<1x128xf32>
    %13 = vector.broadcast %12 : vector<1x128xf32> to vector<128x128xf32>
    %14 = arith.addf %11, %13 : vector<128x128xf32>
    %cst_14 = arith.constant 0.000000e+00 : f32
    %15 = vector.broadcast %cst_14 : f32 to vector<128x128xf32>
    %16 = arith.maximumf %14, %15 : vector<128x128xf32>
    %c0_15 = arith.constant 0 : index
    %c0_16 = arith.constant 0 : index
    %17 = vector.load %arg7[%c0_15, %c0_16] : memref<128x128xf32, #tpu.memory_space<vmem>>, vector<128x128xf32>
    tpu.vector_store %arg7[%c0_15, %c0_16], %16 {strides = array<i32>} : memref<128x128xf32, #tpu.memory_space<vmem>>, vector<128x128xf32>,
    return
  }
  func.func @transform_0(%arg0: i32) -> (i32, i32) {
    %c0_i32 = arith.constant 0 : i32
    %c0_i32_0 = arith.constant 0 : i32
    return %arg0, %c0_i32 : i32, i32
  }
  func.func @transform_1(%arg0: i32) -> (i32, i32) {
    %c0_i32 = arith.constant 0 : i32
    %c0_i32_0 = arith.constant 0 : i32
    return %arg0, %c0_i32 : i32, i32
  }
  func.func @transform_2(%arg0: i32) -> (i32, i32) {
    %c0_i32 = arith.constant 0 : i32
    %c0_i32_0 = arith.constant 0 : i32
    return %arg0, %c0_i32 : i32, i32
  }
  func.func @transform_3(%arg0: i32) -> (i32, i32) {
    %c0_i32 = arith.constant 0 : i32
    %c0_i32_0 = arith.constant 0 : i32
    return %arg0, %c0_i32 : i32, i32
  }
  func.func @transform_4(%arg0: i32) -> (i32, i32) {
    %c0_i32 = arith.constant 0 : i32
    %c0_i32_0 = arith.constant 0 : i32
    %c0_i32_1 = arith.constant 0 : i32
    return %c0_i32, %c0_i32_0 : i32, i32
  }
  func.func @transform_5(%arg0: i32) -> (i32, i32) {
    %c0_i32 = arith.constant 0 : i32
    %c0_i32_0 = arith.constant 0 : i32
    %c0_i32_1 = arith.constant 0 : i32
    return %c0_i32, %c0_i32_0 : i32, i32
  }
  func.func @transform_6(%arg0: i32) -> (i32, i32) {
    %c0_i32 = arith.constant 0 : i32
    %c0_i32_0 = arith.constant 0 : i32
    return %arg0, %c0_i32 : i32, i32
  }
}

module attributes {stable_mosaic.version = 11 : i64} {
  func.func @_conv_pool_kernel(%arg0: i32, %arg1: memref<64x576xf32, #tpu.memory_space<vmem>>, %arg2: memref<64x576xf32, #tpu.memory_space<vmem>>, %arg3: memref<64x576xf32, #tpu.memory_space<vmem>>, %arg4: memref<64x576xf32, #tpu.memory_space<vmem>>, %arg5: memref<576x128xf32, #tpu.memory_space<vmem>>, %arg6: memref<1x128xf32, #tpu.memory_space<vmem>>, %arg7: memref<64x128xf32, #tpu.memory_space<vmem>>) attributes {dimension_semantics = [#tpu.dimension_semantics<parallel>], iteration_bounds = array<i64: 2>, scalar_prefetch = 0 : i64, scratch_operands = 0 : i64, tpu.core_type = #tpu.core_type<tc>, window_params = [{transform_indices = @transform_0, window_bounds = array<i64: 64, 576>}, {transform_indices = @transform_1, window_bounds = array<i64: 64, 576>}, {transform_indices = @transform_2, window_bounds = array<i64: 64, 576>}, {transform_indices = @transform_3, window_bounds = array<i64: 64, 576>}, {pipeline_mode = #tpu.pipeline_mode<synchronous>, transform_indices = @transform_4, window_bounds = array<i64: 576, 128>}, {pipeline_mode = #tpu.pipeline_mode<synchronous>, transform_indices = @transform_5, window_bounds = array<i64: 1, 128>}, {transform_indices = @transform_6, window_bounds = array<i64: 64, 128>}]} {
    %c0 = arith.constant 0 : index
    %c0_0 = arith.constant 0 : index
    %0 = vector.load %arg5[%c0, %c0_0] : memref<576x128xf32, #tpu.memory_space<vmem>>, vector<576x128xf32>
    %c0_1 = arith.constant 0 : index
    %c0_2 = arith.constant 0 : index
    %1 = vector.load %arg1[%c0_1, %c0_2] : memref<64x576xf32, #tpu.memory_space<vmem>>, vector<64x576xf32>
    %cst = arith.constant dense<0.000000e+00> : vector<64x128xf32>
    %2 = tpu.matmul %1, %0, %cst {dimension_numbers = #tpu.dot_dimension_numbers<[1], [0], [0], [1], [0, 0, 1, 1], [], []>} : vector<64x576xf32>, vector<576x128xf32>, vector<64x128xf32> -> vector<64x128xf32>
    %c0_3 = arith.constant 0 : index
    %c0_4 = arith.constant 0 : index
    %3 = vector.load %arg2[%c0_3, %c0_4] : memref<64x576xf32, #tpu.memory_space<vmem>>, vector<64x576xf32>
    %cst_5 = arith.constant dense<0.000000e+00> : vector<64x128xf32>
    %4 = tpu.matmul %3, %0, %cst_5 {dimension_numbers = #tpu.dot_dimension_numbers<[1], [0], [0], [1], [0, 0, 1, 1], [], []>} : vector<64x576xf32>, vector<576x128xf32>, vector<64x128xf32> -> vector<64x128xf32>
    %c0_6 = arith.constant 0 : index
    %c0_7 = arith.constant 0 : index
    %5 = vector.load %arg3[%c0_6, %c0_7] : memref<64x576xf32, #tpu.memory_space<vmem>>, vector<64x576xf32>
    %cst_8 = arith.constant dense<0.000000e+00> : vector<64x128xf32>
    %6 = tpu.matmul %5, %0, %cst_8 {dimension_numbers = #tpu.dot_dimension_numbers<[1], [0], [0], [1], [0, 0, 1, 1], [], []>} : vector<64x576xf32>, vector<576x128xf32>, vector<64x128xf32> -> vector<64x128xf32>
    %c0_9 = arith.constant 0 : index
    %c0_10 = arith.constant 0 : index
    %7 = vector.load %arg4[%c0_9, %c0_10] : memref<64x576xf32, #tpu.memory_space<vmem>>, vector<64x576xf32>
    %cst_11 = arith.constant dense<0.000000e+00> : vector<64x128xf32>
    %8 = tpu.matmul %7, %0, %cst_11 {dimension_numbers = #tpu.dot_dimension_numbers<[1], [0], [0], [1], [0, 0, 1, 1], [], []>} : vector<64x576xf32>, vector<576x128xf32>, vector<64x128xf32> -> vector<64x128xf32>
    %9 = arith.maximumf %2, %4 : vector<64x128xf32>
    %10 = arith.maximumf %6, %8 : vector<64x128xf32>
    %11 = arith.maximumf %9, %10 : vector<64x128xf32>
    %c0_12 = arith.constant 0 : index
    %c0_13 = arith.constant 0 : index
    %12 = vector.load %arg6[%c0_12, %c0_13] : memref<1x128xf32, #tpu.memory_space<vmem>>, vector<1x128xf32>
    %13 = vector.broadcast %12 : vector<1x128xf32> to vector<64x128xf32>
    %14 = arith.addf %11, %13 : vector<64x128xf32>
    %cst_14 = arith.constant 0.000000e+00 : f32
    %15 = vector.broadcast %cst_14 : f32 to vector<64x128xf32>
    %16 = arith.maximumf %14, %15 : vector<64x128xf32>
    %c0_15 = arith.constant 0 : index
    %c0_16 = arith.constant 0 : index
    %17 = vector.load %arg7[%c0_15, %c0_16] : memref<64x128xf32, #tpu.memory_space<vmem>>, vector<64x128xf32>
    tpu.vector_store %arg7[%c0_15, %c0_16], %16 {strides = array<i32>} : memref<64x128xf32, #tpu.memory_space<vmem>>, vector<64x128xf32>,
    return
  }
  func.func @transform_0(%arg0: i32) -> (i32, i32) {
    %c0_i32 = arith.constant 0 : i32
    %c0_i32_0 = arith.constant 0 : i32
    return %arg0, %c0_i32 : i32, i32
  }
  func.func @transform_1(%arg0: i32) -> (i32, i32) {
    %c0_i32 = arith.constant 0 : i32
    %c0_i32_0 = arith.constant 0 : i32
    return %arg0, %c0_i32 : i32, i32
  }
  func.func @transform_2(%arg0: i32) -> (i32, i32) {
    %c0_i32 = arith.constant 0 : i32
    %c0_i32_0 = arith.constant 0 : i32
    return %arg0, %c0_i32 : i32, i32
  }
  func.func @transform_3(%arg0: i32) -> (i32, i32) {
    %c0_i32 = arith.constant 0 : i32
    %c0_i32_0 = arith.constant 0 : i32
    return %arg0, %c0_i32 : i32, i32
  }
  func.func @transform_4(%arg0: i32) -> (i32, i32) {
    %c0_i32 = arith.constant 0 : i32
    %c0_i32_0 = arith.constant 0 : i32
    %c0_i32_1 = arith.constant 0 : i32
    return %c0_i32, %c0_i32_0 : i32, i32
  }
  func.func @transform_5(%arg0: i32) -> (i32, i32) {
    %c0_i32 = arith.constant 0 : i32
    %c0_i32_0 = arith.constant 0 : i32
    %c0_i32_1 = arith.constant 0 : i32
    return %c0_i32, %c0_i32_0 : i32, i32
  }
  func.func @transform_6(%arg0: i32) -> (i32, i32) {
    %c0_i32 = arith.constant 0 : i32
    %c0_i32_0 = arith.constant 0 : i32
    return %arg0, %c0_i32 : i32, i32
  }
}

module attributes {stable_mosaic.version = 11 : i64} {
  func.func @_mlp_kernel(%arg0: i32, %arg1: memref<2x1024xf32, #tpu.memory_space<vmem>>, %arg2: memref<1024x256xf32, #tpu.memory_space<vmem>>, %arg3: memref<1x256xf32, #tpu.memory_space<vmem>>, %arg4: memref<256x2xf32, #tpu.memory_space<vmem>>, %arg5: memref<1x2xf32, #tpu.memory_space<vmem>>, %arg6: memref<2x2xf32, #tpu.memory_space<vmem>>, %arg7: memref<2x256xf32, #tpu.memory_space<vmem>>) attributes {dimension_semantics = [#tpu.dimension_semantics<arbitrary>], iteration_bounds = array<i64: 8>, scalar_prefetch = 0 : i64, scratch_operands = 1 : i64, tpu.core_type = #tpu.core_type<tc>, window_params = [{transform_indices = @transform_0, window_bounds = array<i64: 2, 1024>}, {transform_indices = @transform_1, window_bounds = array<i64: 1024, 256>}, {pipeline_mode = #tpu.pipeline_mode<synchronous>, transform_indices = @transform_2, window_bounds = array<i64: 1, 256>}, {pipeline_mode = #tpu.pipeline_mode<synchronous>, transform_indices = @transform_3, window_bounds = array<i64: 256, 2>}, {pipeline_mode = #tpu.pipeline_mode<synchronous>, transform_indices = @transform_4, window_bounds = array<i64: 1, 2>}, {pipeline_mode = #tpu.pipeline_mode<synchronous>, transform_indices = @transform_5, window_bounds = array<i64: 2, 2>}]} {
    %c0_i32 = arith.constant 0 : i32
    %0 = arith.cmpi eq, %arg0, %c0_i32 : i32
    %1 = arith.extui %0 : i1 to i32
    %c0_i32_0 = arith.constant 0 : i32
    %2 = arith.cmpi ne, %1, %c0_i32_0 : i32
    scf.if %2 {
      %cst_9 = arith.constant 0.000000e+00 : f32
      %12 = vector.broadcast %cst_9 : f32 to vector<2x256xf32>
      %c0_10 = arith.constant 0 : index
      %c0_11 = arith.constant 0 : index
      %13 = vector.load %arg7[%c0_10, %c0_11] : memref<2x256xf32, #tpu.memory_space<vmem>>, vector<2x256xf32>
      tpu.vector_store %arg7[%c0_10, %c0_11], %12 {strides = array<i32>} : memref<2x256xf32, #tpu.memory_space<vmem>>, vector<2x256xf32>,
    } else {
    }
    %c0 = arith.constant 0 : index
    %c0_1 = arith.constant 0 : index
    %3 = vector.load %arg7[%c0, %c0_1] : memref<2x256xf32, #tpu.memory_space<vmem>>, vector<2x256xf32>
    %c0_2 = arith.constant 0 : index
    %c0_3 = arith.constant 0 : index
    %4 = vector.load %arg1[%c0_2, %c0_3] : memref<2x1024xf32, #tpu.memory_space<vmem>>, vector<2x1024xf32>
    %c0_4 = arith.constant 0 : index
    %c0_5 = arith.constant 0 : index
    %5 = vector.load %arg2[%c0_4, %c0_5] : memref<1024x256xf32, #tpu.memory_space<vmem>>, vector<1024x256xf32>
    %cst = arith.constant dense<0.000000e+00> : vector<2x256xf32>
    %6 = tpu.matmul %4, %5, %cst {dimension_numbers = #tpu.dot_dimension_numbers<[1], [0], [0], [1], [0, 0, 1, 1], [], []>} : vector<2x1024xf32>, vector<1024x256xf32>, vector<2x256xf32> -> vector<2x256xf32>
    %7 = arith.addf %3, %6 : vector<2x256xf32>
    %c0_6 = arith.constant 0 : index
    %c0_7 = arith.constant 0 : index
    %8 = vector.load %arg7[%c0_6, %c0_7] : memref<2x256xf32, #tpu.memory_space<vmem>>, vector<2x256xf32>
    tpu.vector_store %arg7[%c0_6, %c0_7], %7 {strides = array<i32>} : memref<2x256xf32, #tpu.memory_space<vmem>>, vector<2x256xf32>,
    %c7_i32 = arith.constant 7 : i32
    %9 = arith.cmpi eq, %arg0, %c7_i32 : i32
    %10 = arith.extui %9 : i1 to i32
    %c0_i32_8 = arith.constant 0 : i32
    %11 = arith.cmpi ne, %10, %c0_i32_8 : i32
    scf.if %11 {
      %c0_9 = arith.constant 0 : index
      %c0_10 = arith.constant 0 : index
      %12 = vector.load %arg7[%c0_9, %c0_10] : memref<2x256xf32, #tpu.memory_space<vmem>>, vector<2x256xf32>
      %c0_11 = arith.constant 0 : index
      %c0_12 = arith.constant 0 : index
      %13 = vector.load %arg3[%c0_11, %c0_12] : memref<1x256xf32, #tpu.memory_space<vmem>>, vector<1x256xf32>
      %14 = vector.broadcast %13 : vector<1x256xf32> to vector<2x256xf32>
      %15 = arith.addf %12, %14 : vector<2x256xf32>
      %cst_13 = arith.constant 0.000000e+00 : f32
      %16 = vector.broadcast %cst_13 : f32 to vector<2x256xf32>
      %17 = arith.maximumf %15, %16 : vector<2x256xf32>
      %c0_14 = arith.constant 0 : index
      %c0_15 = arith.constant 0 : index
      %18 = vector.load %arg4[%c0_14, %c0_15] : memref<256x2xf32, #tpu.memory_space<vmem>>, vector<256x2xf32>
      %cst_16 = arith.constant dense<0.000000e+00> : vector<2x2xf32>
      %19 = tpu.matmul %17, %18, %cst_16 {dimension_numbers = #tpu.dot_dimension_numbers<[1], [0], [0], [1], [0, 0, 1, 1], [], []>} : vector<2x256xf32>, vector<256x2xf32>, vector<2x2xf32> -> vector<2x2xf32>
      %c0_17 = arith.constant 0 : index
      %c0_18 = arith.constant 0 : index
      %20 = vector.load %arg5[%c0_17, %c0_18] : memref<1x2xf32, #tpu.memory_space<vmem>>, vector<1x2xf32>
      %21 = vector.broadcast %20 : vector<1x2xf32> to vector<2x2xf32>
      %22 = arith.addf %19, %21 : vector<2x2xf32>
      %c0_19 = arith.constant 0 : index
      %c0_20 = arith.constant 0 : index
      %23 = vector.load %arg6[%c0_19, %c0_20] : memref<2x2xf32, #tpu.memory_space<vmem>>, vector<2x2xf32>
      tpu.vector_store %arg6[%c0_19, %c0_20], %22 {strides = array<i32>} : memref<2x2xf32, #tpu.memory_space<vmem>>, vector<2x2xf32>,
    } else {
    }
    return
  }
  func.func @transform_0(%arg0: i32) -> (i32, i32) {
    %c0_i32 = arith.constant 0 : i32
    %c0_i32_0 = arith.constant 0 : i32
    return %c0_i32, %arg0 : i32, i32
  }
  func.func @transform_1(%arg0: i32) -> (i32, i32) {
    %c0_i32 = arith.constant 0 : i32
    %c0_i32_0 = arith.constant 0 : i32
    return %arg0, %c0_i32 : i32, i32
  }
  func.func @transform_2(%arg0: i32) -> (i32, i32) {
    %c0_i32 = arith.constant 0 : i32
    %c0_i32_0 = arith.constant 0 : i32
    %c0_i32_1 = arith.constant 0 : i32
    return %c0_i32, %c0_i32_0 : i32, i32
  }
  func.func @transform_3(%arg0: i32) -> (i32, i32) {
    %c0_i32 = arith.constant 0 : i32
    %c0_i32_0 = arith.constant 0 : i32
    %c0_i32_1 = arith.constant 0 : i32
    return %c0_i32, %c0_i32_0 : i32, i32
  }
  func.func @transform_4(%arg0: i32) -> (i32, i32) {
    %c0_i32 = arith.constant 0 : i32
    %c0_i32_0 = arith.constant 0 : i32
    %c0_i32_1 = arith.constant 0 : i32
    return %c0_i32, %c0_i32_0 : i32, i32
  }
  func.func @transform_5(%arg0: i32) -> (i32, i32) {
    %c0_i32 = arith.constant 0 : i32
    %c0_i32_0 = arith.constant 0 : i32
    %c0_i32_1 = arith.constant 0 : i32
    return %c0_i32, %c0_i32_0 : i32, i32
  }
}

</mosaic_0001>

<llo_original>
// kernel: bloodstain_forward.3
$region0: #{bloodstain_forward.3}
  #allocation0 [shape = 'u32[]', space=smem, size = 0x4, offset = 0x4, fixed_abs, tag = 'smem constant byte address 0x4 - core index']
  #allocation1 [shape = 'u32[144,128]{1,0:T(1,128)}', space=vmem, size = 0x12000, scoped, tag = 'internal scratch']
  %s0 = inlined_call_operand.vmem [shape: f32[256,216], index: 0, kind: input, shape index: {}]
  %s1 = inlined_call_operand.vmem [shape: f32[256,216], index: 1, kind: input, shape index: {}]
  %s2 = inlined_call_operand.vmem [shape: f32[256,216], index: 2, kind: input, shape index: {}]
  %s3 = inlined_call_operand.vmem [shape: f32[256,216], index: 3, kind: input, shape index: {}]
  %s4 = inlined_call_operand.vmem [shape: f32[216,128], index: 4, kind: input, shape index: {}]
  %s5 = inlined_call_operand.vmem [shape: f32[1,128], index: 5, kind: input, shape index: {}]
  %s6 = inlined_call_operand.vmem [shape: f32[256,128], index: 6, kind: output, shape index: {}]
  %s7 = sld [smem:[#allocation0]]
  $region57: #{bloodstain_forward.3} parent=0
    _
  %s9 = ssub.s32 1, %s7
  %s10 = scalar_select 0, %s9, %s7
  loop: start=0, step=1, limit=4
  $region2: #{bloodstain_forward.3} parent=0 // loop_pre_header
    _
  $region3: #{bloodstain_forward.3} parent=0 // loop_header
    %s12 = sphi 0, %s16
    %p13 = scmp.ge.s32.totalorder %s12, 4
    %s22 = sphi 0, %s24
    %s25 = sphi 0, %s22
    %s26 = sphi 0, %s25
    %s42 = sphi 0, %s26
    %s48 = sphi 0, %s50
    %s51 = sphi 0, %s48
    %s52 = sphi 0, %s51
    %s68 = sphi 0, %s52
    %s74 = sphi 0, %s76
    %s77 = sphi 0, %s74
    %s78 = sphi 0, %s77
    %s94 = sphi 0, %s78
    %s100 = sphi 0, %s102
    %s103 = sphi 0, %s100
    %s104 = sphi 0, %s103
    %s120 = sphi 0, %s104
    %s124 = sphi 0, %s124
    %s126 = sphi 0, %s124
    %s127 = sphi 0, %s126
    %s141 = sphi 0, %s127
    %s145 = sphi 0, %s145
    %s147 = sphi 0, %s145
    %s148 = sphi 0, %s147
    %s162 = sphi 0, %s148
    %s168 = sphi 0, %s170
    %s171 = sphi 0, %s168
    %s172 = sphi 0, %s171
    %s188 = sphi 0, %s172
  $region4: #{bloodstain_forward.3} parent=0 // loop_header_branch
    %15 = sbr.rel (%p13) target = $region8
  $region5: #{bloodstain_forward.3} parent=0 // loop_body
    %s17 = ssub.s32 %s12, 1
    %s18 = ssub.s32 %s12, 2
    %s19 = sadd.s32 %s12, 1
    %s20 = ssub.s32 %s12, %s19
    %p21 = scmp.eq.s32.totalorder %s20, 0
    %s23 = sadd.s32 %s22, 1
    %s24 = scalar_select %p21, %s22, %s23
    %p27 = pneg %p21
    %p28 = scmp.eq.s32.totalorder %s12, 1
    %p29 = por %p27, %p28
    %p30 = scmp.ne.s32.totalorder %s22, %s25
    %p31 = scmp.eq.s32.totalorder %s12, 0
    %p32 = por %p30, %p31
    %p33 = scmp.ne.s32.totalorder %s22, %s25
    %p34 = scmp.eq.s32.totalorder %s17, 1
    %p35 = por %p33, %p34
    %p36 = scmp.ne.s32.totalorder %s25, %s26
    %p37 = scmp.eq.s32.totalorder %s17, 0
    %p38 = por %p36, %p37
    %p39 = scmp.ne.s32.totalorder %s25, %s26
    %p40 = scmp.eq.s32.totalorder %s18, 1
    %p41 = por %p39, %p40
    %p43 = scmp.ne.s32.totalorder %s26, %s42
    %p44 = scmp.eq.s32.totalorder %s18, 0
    %p45 = por %p43, %p44
    %s46 = ssub.s32 %s12, %s19
    %p47 = scmp.eq.s32.totalorder %s46, 0
    %s49 = sadd.s32 %s48, 1
    %s50 = scalar_select %p47, %s48, %s49
    %p53 = pneg %p47
    %p54 = scmp.eq.s32.totalorder %s12, 1
    %p55 = por %p53, %p54
    %p56 = scmp.ne.s32.totalorder %s48, %s51
    %p57 = scmp.eq.s32.totalorder %s12, 0
    %p58 = por %p56, %p57
    %p59 = scmp.ne.s32.totalorder %s48, %s51
    %p60 = scmp.eq.s32.totalorder %s17, 1
    %p61 = por %p59, %p60
    %p62 = scmp.ne.s32.totalorder %s51, %s52
    %p63 = scmp.eq.s32.totalorder %s17, 0
    %p64 = por %p62, %p63
    %p65 = scmp.ne.s32.totalorder %s51, %s52
    %p66 = scmp.eq.s32.totalorder %s18, 1
    %p67 = por %p65, %p66
    %p69 = scmp.ne.s32.totalorder %s52, %s68
    %p70 = scmp.eq.s32.totalorder %s18, 0
    %p71 = por %p69, %p70
    %s72 = ssub.s32 %s12, %s19
    %p73 = scmp.eq.s32.totalorder %s72, 0
    %s75 = sadd.s32 %s74, 1
    %s76 = scalar_select %p73, %s74, %s75
    %p79 = pneg %p73
    %p80 = scmp.eq.s32.totalorder %s12, 1
    %p81 = por %p79, %p80
    %p82 = scmp.ne.s32.totalorder %s74, %s77
    %p83 = scmp.eq.s32.totalorder %s12, 0
    %p84 = por %p82, %p83
    %p85 = scmp.ne.s32.totalorder %s74, %s77
    %p86 = scmp.eq.s32.totalorder %s17, 1
    %p87 = por %p85, %p86
    %p88 = scmp.ne.s32.totalorder %s77, %s78
    %p89 = scmp.eq.s32.totalorder %s17, 0
    %p90 = por %p88, %p89
    %p91 = scmp.ne.s32.totalorder %s77, %s78
    %p92 = scmp.eq.s32.totalorder %s18, 1
    %p93 = por %p91, %p92
    %p95 = scmp.ne.s32.totalorder %s78, %s94
    %p96 = scmp.eq.s32.totalorder %s18, 0
    %p97 = por %p95, %p96
    %s98 = ssub.s32 %s12, %s19
    %p99 = scmp.eq.s32.totalorder %s98, 0
    %s101 = sadd.s32 %s100, 1
    %s102 = scalar_select %p99, %s100, %s101
    %p105 = pneg %p99
    %p106 = scmp.eq.s32.totalorder %s12, 1
    %p107 = por %p105, %p106
    %p108 = scmp.ne.s32.totalorder %s100, %s103
    %p109 = scmp.eq.s32.totalorder %s12, 0
    %p110 = por %p108, %p109
    %p111 = scmp.ne.s32.totalorder %s100, %s103
    %p112 = scmp.eq.s32.totalorder %s17, 1
    %p113 = por %p111, %p112
    %p114 = scmp.ne.s32.totalorder %s103, %s104
    %p115 = scmp.eq.s32.totalorder %s17, 0
    %p116 = por %p114, %p115
    %p117 = scmp.ne.s32.totalorder %s103, %s104
    %p118 = scmp.eq.s32.totalorder %s18, 1
    %p119 = por %p117, %p118
    %p121 = scmp.ne.s32.totalorder %s104, %s120
    %p122 = scmp.eq.s32.totalorder %s18, 0
    %p123 = por %p121, %p122
    %s125 = sadd.s32 %s124, 1
    %p128 = scmp.eq.s32.totalorder %s12, 1
    %p129 = scmp.ne.s32.totalorder %s124, %s126
    %p130 = scmp.eq.s32.totalorder %s12, 0
    %p131 = por %p129, %p130
    %p132 = scmp.ne.s32.totalorder %s124, %s126
    %p133 = scmp.eq.s32.totalorder %s17, 1
    %p134 = por %p132, %p133
    %p135 = scmp.ne.s32.totalorder %s126, %s127
    %p136 = scmp.eq.s32.totalorder %s17, 0
    %p137 = por %p135, %p136
    %p138 = scmp.ne.s32.totalorder %s126, %s127
    %p139 = scmp.eq.s32.totalorder %s18, 1
    %p140 = por %p138, %p139
    %p142 = scmp.ne.s32.totalorder %s127, %s141
    %p143 = scmp.eq.s32.totalorder %s18, 0
    %p144 = por %p142, %p143
    %s146 = sadd.s32 %s145, 1
    %p149 = scmp.eq.s32.totalorder %s12, 1
    %p150 = scmp.ne.s32.totalorder %s145, %s147
    %p151 = scmp.eq.s32.totalorder %s12, 0
    %p152 = por %p150, %p151
    %p153 = scmp.ne.s32.totalorder %s145, %s147
    %p154 = scmp.eq.s32.totalorder %s17, 1
    %p155 = por %p153, %p154
    %p156 = scmp.ne.s32.totalorder %s147, %s148
    %p157 = scmp.eq.s32.totalorder %s17, 0
    %p158 = por %p156, %p157
    %p159 = scmp.ne.s32.totalorder %s147, %s148
    %p160 = scmp.eq.s32.totalorder %s18, 1
    %p161 = por %p159, %p160
    %p163 = scmp.ne.s32.totalorder %s148, %s162
    %p164 = scmp.eq.s32.totalorder %s18, 0
    %p165 = por %p163, %p164
    %s166 = ssub.s32 %s12, %s19
    %p167 = scmp.eq.s32.totalorder %s166, 0
    %s169 = sadd.s32 %s168, 1
    %s170 = scalar_select %p167, %s168, %s169
    %p173 = pneg %p167
    %p174 = scmp.eq.s32.totalorder %s12, 1
    %p175 = por %p173, %p174
    %p176 = scmp.ne.s32.totalorder %s168, %s171
    %p177 = scmp.eq.s32.totalorder %s12, 0
    %p178 = por %p176, %p177
    %p179 = scmp.ne.s32.totalorder %s168, %s171
    %p180 = scmp.eq.s32.totalorder %s17, 1
    %p181 = por %p179, %p180
    %p182 = scmp.ne.s32.totalorder %s171, %s172
    %p183 = scmp.eq.s32.totalorder %s17, 0
    %p184 = por %p182, %p183
    %p185 = scmp.ne.s32.totalorder %s171, %s172
    %p186 = scmp.eq.s32.totalorder %s18, 1
    %p187 = por %p185, %p186
    %p189 = scmp.ne.s32.totalorder %s172, %s188
    %p190 = scmp.eq.s32.totalorder %s18, 0
    %p191 = por %p189, %p190
    %p192 = scmp.le.s32.totalorder 1, %s12
    %p193 = scmp.lt.s32.totalorder %s12, 3
    %p194 = pnand %p192, %p193
    %p195 = pneg %p194
    // Predicated region
    $region9: #{bloodstain_forward.3} parent=5 // pred_check
      _
    $region10: #{bloodstain_forward.3} parent=5 // pred_check_branch
      %197 = sbr.rel (%p194) target = $region12
    $region11: #{bloodstain_forward.3} parent=5 // pred_region
      %s198 = ssub.s32 %s12, 1
      // Predicated region
      $region13: #{bloodstain_forward.3} parent=11 // pred_check
        %p199 = pneg %p137
      $region14: #{bloodstain_forward.3} parent=11 // pred_check_branch
        %201 = sbr.rel (%p199) target = $region16
      $region15: #{bloodstain_forward.3} parent=11 // pred_region
        _
      $region16: #{bloodstain_forward.3} parent=11 // pred_fallthru
        _
      // Predicated region
      $region17: #{bloodstain_forward.3} parent=11 // pred_check
        %p202 = pneg %p158
      $region18: #{bloodstain_forward.3} parent=11 // pred_check_branch
        %204 = sbr.rel (%p202) target = $region20
      $region19: #{bloodstain_forward.3} parent=11 // pred_region
        _
      $region20: #{bloodstain_forward.3} parent=11 // pred_fallthru
        _
    $region12: #{bloodstain_forward.3} parent=5 // pred_fallthru
      _
    %p205 = scmp.lt.s32.totalorder %s12, 2
    // Predicated region
    $region21: #{bloodstain_forward.3} parent=5 // pred_check
      %p206 = pneg %p205
    $region22: #{bloodstain_forward.3} parent=5 // pred_check_branch
      %208 = sbr.rel (%p206) target = $region24
    $region23: #{bloodstain_forward.3} parent=5 // pred_region
      // Predicated region
      $region25: #{bloodstain_forward.3} parent=23 // pred_check
        %p209 = pneg %p32
      $region26: #{bloodstain_forward.3} parent=23 // pred_check_branch
        %211 = sbr.rel (%p209) target = $region28
      $region27: #{bloodstain_forward.3} parent=23 // pred_region
        %s212 = smul.u32 16, %s12
        %p213 = scmp.lt.s32.totalorder %s212, 31
        %s214 = scalar_select %p213, %s212, 31
        %s215 = smul.addr %s214, 2
        %s216 = smul.addr %s215, 8
        %s217 = scalar_lea.vmem %s0, %s216
        %s218 = smul.u32 16, %s12
      $region28: #{bloodstain_forward.3} parent=23 // pred_fallthru
        _
      // Predicated region
      $region29: #{bloodstain_forward.3} parent=23 // pred_check
        %p219 = pneg %p58
      $region30: #{bloodstain_forward.3} parent=23 // pred_check_branch
        %221 = sbr.rel (%p219) target = $region32
      $region31: #{bloodstain_forward.3} parent=23 // pred_region
        %s222 = smul.u32 16, %s12
        %p223 = scmp.lt.s32.totalorder %s222, 31
        %s224 = scalar_select %p223, %s222, 31
        %s225 = smul.addr %s224, 2
        %s226 = smul.addr %s225, 8
        %s227 = scalar_lea.vmem %s1, %s226
        %s228 = smul.u32 16, %s12
      $region32: #{bloodstain_forward.3} parent=23 // pred_fallthru
        _
      // Predicated region
      $region33: #{bloodstain_forward.3} parent=23 // pred_check
        %p229 = pneg %p84
      $region34: #{bloodstain_forward.3} parent=23 // pred_check_branch
        %231 = sbr.rel (%p229) target = $region36
      $region35: #{bloodstain_forward.3} parent=23 // pred_region
        %s232 = smul.u32 16, %s12
        %p233 = scmp.lt.s32.totalorder %s232, 31
        %s234 = scalar_select %p233, %s232, 31
        %s235 = smul.addr %s234, 2
        %s236 = smul.addr %s235, 8
        %s237 = scalar_lea.vmem %s2, %s236
        %s238 = smul.u32 16, %s12
      $region36: #{bloodstain_forward.3} parent=23 // pred_fallthru
        _
      // Predicated region
      $region37: #{bloodstain_forward.3} parent=23 // pred_check
        %p239 = pneg %p110
      $region38: #{bloodstain_forward.3} parent=23 // pred_check_branch
        %241 = sbr.rel (%p239) target = $region40
      $region39: #{bloodstain_forward.3} parent=23 // pred_region
        %s242 = smul.u32 16, %s12
        %p243 = scmp.lt.s32.totalorder %s242, 31
        %s244 = scalar_select %p243, %s242, 31
        %s245 = smul.addr %s244, 2
        %s246 = smul.addr %s245, 8
        %s247 = scalar_lea.vmem %s3, %s246
        %s248 = smul.u32 16, %s12
      $region40: #{bloodstain_forward.3} parent=23 // pred_fallthru
        _
    $region24: #{bloodstain_forward.3} parent=5 // pred_fallthru
      _
    %p249 = scmp.le.s32.totalorder 1, %s12
    %p250 = scmp.lt.s32.totalorder %s12, 3
    %p251 = pnand %p249, %p250
    %p252 = pneg %p251
    // Predicated region
    $region41: #{bloodstain_forward.3} parent=5 // pred_check
      _
    $region42: #{bloodstain_forward.3} parent=5 // pred_check_branch
      %254 = sbr.rel (%p251) target = $region44
    $region43: #{bloodstain_forward.3} parent=5 // pred_region
      %s255 = ssub.s32 %s12, 1
      %s256 = smul.u32 16, %s17
      %p257 = scmp.lt.s32.totalorder %s256, 31
      %s258 = scalar_select %p257, %s256, 31
      %s259 = smul.addr %s258, 2
      %s260 = smul.addr %s259, 8
      %s261 = scalar_lea.vmem %s0, %s260
      %p262 = pneg %p38
      %p263 = pneg %p35
      %s264 = smul.u32 16, %s17
      %p265 = scmp.lt.s32.totalorder %s264, 31
      %s266 = scalar_select %p265, %s264, 31
      %s267 = smul.addr %s266, 2
      %s268 = smul.addr %s267, 8
      %s269 = scalar_lea.vmem %s1, %s268
      %p270 = pneg %p64
      %p271 = pneg %p61
      %s272 = smul.u32 16, %s17
      %p273 = scmp.lt.s32.totalorder %s272, 31
      %s274 = scalar_select %p273, %s272, 31
      %s275 = smul.addr %s274, 2
      %s276 = smul.addr %s275, 8
      %s277 = scalar_lea.vmem %s2, %s276
      %p278 = pneg %p90
      %p279 = pneg %p87
      %s280 = smul.u32 16, %s17
      %p281 = scmp.lt.s32.totalorder %s280, 31
      %s282 = scalar_select %p281, %s280, 31
      %s283 = smul.addr %s282, 2
      %s284 = smul.addr %s283, 8
      %s285 = scalar_lea.vmem %s3, %s284
      %p286 = pneg %p116
      %p287 = pneg %p113
      %p288 = pneg %p137
      %p289 = pneg %p134
      %p290 = pneg %p158
      %p291 = pneg %p155
      %p292 = pneg %p184
      %p293 = pneg %p181
      %s294 = smul.u32 16, %s17
      %p295 = scmp.lt.s32.totalorder %s294, 31
      %s296 = scalar_select %p295, %s294, 31
      %s297 = smul.addr %s296, 8
      %s298 = scalar_lea.vmem %s6, %s297
      %s299 = smul.u32 16, %s17
      %p300 = scmp.lt.s32.totalorder %s299, 31
      %s301 = scalar_select %p300, %s299, 31
      %s302 = smul.addr %s301, 2
      %s303 = smul.addr %s302, 8
      %s304 = scalar_lea.vmem %s0, %s303
      %s305 = smul.u32 16, %s17
      %s306 = smul.u32 16, %s17
      %p307 = scmp.lt.s32.totalorder %s306, 31
      %s308 = scalar_select %p307, %s306, 31
      %s309 = smul.addr %s308, 2
      %s310 = smul.addr %s309, 8
      %s311 = scalar_lea.vmem %s1, %s310
      %s312 = smul.u32 16, %s17
      %s313 = smul.u32 16, %s17
      %p314 = scmp.lt.s32.totalorder %s313, 31
      %s315 = scalar_select %p314, %s313, 31
      %s316 = smul.addr %s315, 2
      %s317 = smul.addr %s316, 8
      %s318 = scalar_lea.vmem %s2, %s317
      %s319 = smul.u32 16, %s17
      %s320 = smul.u32 16, %s17
      %p321 = scmp.lt.s32.totalorder %s320, 31
      %s322 = scalar_select %p321, %s320, 31
      %s323 = smul.addr %s322, 2
      %s324 = smul.addr %s323, 8
      %s325 = scalar_lea.vmem %s3, %s324
      %s326 = smul.u32 16, %s17
      %s327 = smul.u32 16, %s17
      %p328 = scmp.lt.s32.totalorder %s327, 31
      %s329 = scalar_select %p328, %s327, 31
      %s330 = smul.addr %s329, 8
      %s331 = scalar_lea.vmem %s6, %s330
      %s332 = smul.u32 16, %s17
      %v333 = vld [vmem:[%s4] sm:$0xff]
      %v334 = vld [vmem:[%s4 + $0x8] sm:$0xff]
      %v335 = vld [vmem:[%s4 + $0x10] sm:$0xff]
      %v336 = vld [vmem:[%s4 + $0x18] sm:$0xff]
      %v337 = vld [vmem:[%s4 + $0x20] sm:$0xff]
      %v338 = vld [vmem:[%s4 + $0x28] sm:$0xff]
      %v339 = vld [vmem:[%s4 + $0x30] sm:$0xff]
      %v340 = vld [vmem:[%s4 + $0x38] sm:$0xff]
      %v341 = vld [vmem:[%s4 + $0x40] sm:$0xff]
      %v342 = vld [vmem:[%s4 + $0x48] sm:$0xff]
      %v343 = vld [vmem:[%s4 + $0x50] sm:$0xff]
      %v344 = vld [vmem:[%s4 + $0x58] sm:$0xff]
      %v345 = vld [vmem:[%s4 + $0x60] sm:$0xff]
      %v346 = vld [vmem:[%s4 + $0x68] sm:$0xff]
      %v347 = vld [vmem:[%s4 + $0x70] sm:$0xff]
      %v348 = vld [vmem:[%s4 + $0x78] sm:$0xff]
      %v349 = vld [vmem:[%s4 + $0x80] sm:$0xff]
      %v350 = vld [vmem:[%s4 + $0x88] sm:$0xff]
      %v351 = vld [vmem:[%s4 + $0x90] sm:$0xff]
      %v352 = vld [vmem:[%s4 + $0x98] sm:$0xff]
      %v353 = vld [vmem:[%s4 + $0xa0] sm:$0xff]
      %v354 = vld [vmem:[%s4 + $0xa8] sm:$0xff]
      %v355 = vld [vmem:[%s4 + $0xb0] sm:$0xff]
      %v356 = vld [vmem:[%s4 + $0xb8] sm:$0xff]
      %v357 = vld [vmem:[%s4 + $0xc0] sm:$0xff]
      %v358 = vld [vmem:[%s4 + $0xc8] sm:$0xff]
      %v359 = vld [vmem:[%s4 + $0xd0] sm:$0xff]
      %v360 = vld [vmem:[%s304] sm:$0xff]
      %v361 = vld [vmem:[%s304 + $0x8] sm:$0xff]
      %v362 = vld [vmem:[%s304 + $0x10] sm:$0xff]
      %v363 = vld [vmem:[%s304 + $0x18] sm:$0xff]
      %v364 = vld [vmem:[%s304 + $0x20] sm:$0xff]
      %v365 = vld [vmem:[%s304 + $0x28] sm:$0xff]
      %v366 = vld [vmem:[%s304 + $0x30] sm:$0xff]
      %v367 = vld [vmem:[%s304 + $0x38] sm:$0xff]
      %v368 = vld [vmem:[%s304 + $0x40] sm:$0xff]
      %v369 = vld [vmem:[%s304 + $0x48] sm:$0xff]
      %v370 = vld [vmem:[%s304 + $0x50] sm:$0xff]
      %v371 = vld [vmem:[%s304 + $0x58] sm:$0xff]
      %v372 = vld [vmem:[%s304 + $0x60] sm:$0xff]
      %v373 = vld [vmem:[%s304 + $0x68] sm:$0xff]
      %v374 = vld [vmem:[%s304 + $0x70] sm:$0xff]
      %v375 = vld [vmem:[%s304 + $0x78] sm:$0xff]
      %v376 = vld [vmem:[%s304 + $0x80] sm:$0xff]
      %v377 = vld [vmem:[%s304 + $0x88] sm:$0xff]
      %v378 = vld [vmem:[%s304 + $0x90] sm:$0xff]
      %v379 = vld [vmem:[%s304 + $0x98] sm:$0xff]
      %v380 = vld [vmem:[%s304 + $0xa0] sm:$0xff]
      %v381 = vld [vmem:[%s304 + $0xa8] sm:$0xff]
      %v382 = vld [vmem:[%s304 + $0xb0] sm:$0xff]
      %v383 = vld [vmem:[%s304 + $0xb8] sm:$0xff]
      %v384 = vld [vmem:[%s304 + $0xc0] sm:$0xff]
      %v385 = vld [vmem:[%s304 + $0xc8] sm:$0xff]
      %v386 = vld [vmem:[%s304 + $0xd0] sm:$0xff]
      %v387 = vld [vmem:[%s304 + $0xd8] sm:$0xff]
      %v388 = vld [vmem:[%s304 + $0xe0] sm:$0xff]
      %v389 = vld [vmem:[%s304 + $0xe8] sm:$0xff]
      %v390 = vld [vmem:[%s304 + $0xf0] sm:$0xff]
      %v391 = vld [vmem:[%s304 + $0xf8] sm:$0xff]
      %vm392 = vcmask 719872
      %v394 = vsel %vm392, %v361, 0
      %v397 = vsel %vm392, %v363, 0
      %v400 = vsel %vm392, %v365, 0
      %v403 = vsel %vm392, %v367, 0
      %v406 = vsel %vm392, %v369, 0
      %v409 = vsel %vm392, %v371, 0
      %v412 = vsel %vm392, %v373, 0
      %v415 = vsel %vm392, %v375, 0
      %v418 = vsel %vm392, %v377, 0
      %v421 = vsel %vm392, %v379, 0
      %v424 = vsel %vm392, %v381, 0
      %v427 = vsel %vm392, %v383, 0
      %v430 = vsel %vm392, %v385, 0
      %v433 = vsel %vm392, %v387, 0
      %v436 = vsel %vm392, %v389, 0
      %v439 = vsel %vm392, %v391, 0
      %441 = vmatprep.subr.mxu0 0.0
      %442 = vmatpush1.msra.mxu0 %v333
      %443 = vmatprep.subr.mxu0 0.0
      %444 = vmatpush1.msra.mxu0 %v334
      %445 = vmatprep.subr.mxu0 0.0
      %446 = vmatpush1.msra.mxu0 %v335
      %447 = vmatprep.subr.mxu0 0.0
      %448 = vmatpush1.msra.mxu0 %v336
      %449 = vmatprep.subr.mxu0 0.0
      %450 = vmatpush1.msra.mxu0 %v337
      %451 = vmatprep.subr.mxu0 0.0
      %452 = vmatpush1.msra.mxu0 %v338
      %453 = vmatprep.subr.mxu0 0.0
      %454 = vmatpush1.msra.mxu0 %v339
      %455 = vmatprep.subr.mxu0 0.0
      %456 = vmatpush1.msra.mxu0 %v340
      %457 = vmatprep.subr.mxu0 0.0
      %458 = vmatpush1.msra.mxu0 %v341
      %459 = vmatprep.subr.mxu0 0.0
      %460 = vmatpush1.msra.mxu0 %v342
      %461 = vmatprep.subr.mxu0 0.0
      %462 = vmatpush1.msra.mxu0 %v343
      %463 = vmatprep.subr.mxu0 0.0
      %464 = vmatpush1.msra.mxu0 %v344
      %465 = vmatprep.subr.mxu0 0.0
      %466 = vmatpush1.msra.mxu0 %v345
      %467 = vmatprep.subr.mxu0 0.0
      %468 = vmatpush1.msra.mxu0 %v346
      %469 = vmatprep.subr.mxu0 0.0
      %470 = vmatpush1.msra.mxu0 %v347
      %471 = vmatprep.subr.mxu0 0.0
      %472 = vmatpush1.msra.mxu0 %v348
      %473 = vmatprep.subr.mxu0 0.0
      %474 = vmatpush1.msra.mxu0 %v349
      %475 = vmatprep.subr.mxu0 0.0
      %476 = vmatpush1.msra.mxu0 %v350
      %477 = vmatprep.subr.mxu0 0.0
      %478 = vmatpush1.msra.mxu0 %v351
      %479 = vmatprep.subr.mxu0 0.0
      %480 = vmatpush1.msra.mxu0 %v352
      %481 = vmatprep.subr.mxu0 0.0
      %482 = vmatpush1.msra.mxu0 %v353
      %483 = vmatprep.subr.mxu0 0.0
      %484 = vmatpush1.msra.mxu0 %v354
      %485 = vmatprep.subr.mxu0 0.0
      %486 = vmatpush1.msra.mxu0 %v355
      %487 = vmatprep.subr.mxu0 0.0
      %488 = vmatpush1.msra.mxu0 %v356
      %489 = vmatprep.subr.mxu0 0.0
      %490 = vmatpush1.msra.mxu0 %v357
      %491 = vmatprep.subr.mxu0 0.0
      %492 = vmatpush1.msra.mxu0 %v358
      %493 = vmatprep.subr.mxu0 0.0
      %494 = vmatpush1.msra.mxu0 %v359
      %495 = vmatprep.subr.mxu0 0.0
      %496 = vmatpush1.msra.mxu0 0.0
      %497 = vmatprep.subr.mxu0 0.0
      %498 = vmatpush1.msra.mxu0 0.0
      %499 = vmatprep.subr.mxu0 0.0
      %500 = vmatpush1.msra.mxu0 0.0
      %501 = vmatprep.subr.mxu0 0.0
      %502 = vmatpush1.msra.mxu0 0.0
      %503 = vmatprep.subr.mxu0 0.0
      %504 = vmatpush1.msra.mxu0 0.0
      %505 = vmatprep.mubr.f32.mxu0 %v394
      %506 = vmatmul.mubr.f32.gmra.mrb[0].mxu0 %v360
      %v507 = vpop.f32.mrb[0].mxu0
      %v508 = vadd.f32 0.0, %v507
      %v509 = vpop.f32.mrb[0].mxu0
      %510 = vmatprep.mubr.f32.mxu0 %v397
      %511 = vmatmul.mubr.f32.gmra.mrb[0].mxu0 %v362
      %v512 = vpop.f32.mrb[0].mxu0
      %v513 = vadd.f32 0.0, %v512
      %v514 = vpop.f32.mrb[0].mxu0
      %515 = vmatprep.mubr.f32.mxu0 %v400
      %516 = vmatmul.mubr.f32.gmra.mrb[0].mxu0 %v364
      %v517 = vpop.f32.mrb[0].mxu0
      %v518 = vadd.f32 0.0, %v517
      %v519 = vpop.f32.mrb[0].mxu0
      %520 = vmatprep.mubr.f32.mxu0 %v403
      %521 = vmatmul.mubr.f32.gmra.mrb[0].mxu0 %v366
      %v522 = vpop.f32.mrb[0].mxu0
      %v523 = vadd.f32 0.0, %v522
      %v524 = vpop.f32.mrb[0].mxu0
      %525 = vmatprep.mubr.f32.mxu0 %v406
      %526 = vmatmul.mubr.f32.gmra.mrb[0].mxu0 %v368
      %v527 = vpop.f32.mrb[0].mxu0
      %v528 = vadd.f32 0.0, %v527
      %v529 = vpop.f32.mrb[0].mxu0
      %530 = vmatprep.mubr.f32.mxu0 %v409
      %531 = vmatmul.mubr.f32.gmra.mrb[0].mxu0 %v370
      %v532 = vpop.f32.mrb[0].mxu0
      %v533 = vadd.f32 0.0, %v532
      %v534 = vpop.f32.mrb[0].mxu0
      %535 = vmatprep.mubr.f32.mxu0 %v412
      %536 = vmatmul.mubr.f32.gmra.mrb[0].mxu0 %v372
      %v537 = vpop.f32.mrb[0].mxu0
      %v538 = vadd.f32 0.0, %v537
      %v539 = vpop.f32.mrb[0].mxu0
      %540 = vmatprep.mubr.f32.mxu0 %v415
      %541 = vmatmul.mubr.f32.gmra.mrb[0].mxu0 %v374
      %v542 = vpop.f32.mrb[0].mxu0
      %v543 = vadd.f32 0.0, %v542
      %v544 = vpop.f32.mrb[0].mxu0
      %545 = vmatprep.mubr.f32.mxu0 %v418
      %546 = vmatmul.mubr.f32.gmra.mrb[0].mxu0 %v376
      %v547 = vpop.f32.mrb[0].mxu0
      %v548 = vadd.f32 0.0, %v547
      %v549 = vpop.f32.mrb[0].mxu0
      %550 = vmatprep.mubr.f32.mxu0 %v421
      %551 = vmatmul.mubr.f32.gmra.mrb[0].mxu0 %v378
      %v552 = vpop.f32.mrb[0].mxu0
      %v553 = vadd.f32 0.0, %v552
      %v554 = vpop.f32.mrb[0].mxu0
      %555 = vmatprep.mubr.f32.mxu0 %v424
      %556 = vmatmul.mubr.f32.gmra.mrb[0].mxu0 %v380
      %v557 = vpop.f32.mrb[0].mxu0
      %v558 = vadd.f32 0.0, %v557
      %v559 = vpop.f32.mrb[0].mxu0
      %560 = vmatprep.mubr.f32.mxu0 %v427
      %561 = vmatmul.mubr.f32.gmra.mrb[0].mxu0 %v382
      %v562 = vpop.f32.mrb[0].mxu0
      %v563 = vadd.f32 0.0, %v562
      %v564 = vpop.f32.mrb[0].mxu0
      %565 = vmatprep.mubr.f32.mxu0 %v430
      %566 = vmatmul.mubr.f32.gmra.mrb[0].mxu0 %v384
      %v567 = vpop.f32.mrb[0].mxu0
      %v568 = vadd.f32 0.0, %v567
      %v569 = vpop.f32.mrb[0].mxu0
      %570 = vmatprep.mubr.f32.mxu0 %v433
      %571 = vmatmul.mubr.f32.gmra.mrb[0].mxu0 %v386
      %v572 = vpop.f32.mrb[0].mxu0
      %v573 = vadd.f32 0.0, %v572
      %v574 = vpop.f32.mrb[0].mxu0
      %575 = vmatprep.mubr.f32.mxu0 %v436
      %576 = vmatmul.mubr.f32.gmra.mrb[0].mxu0 %v388
      %v577 = vpop.f32.mrb[0].mxu0
      %v578 = vadd.f32 0.0, %v577
      %v579 = vpop.f32.mrb[0].mxu0
      %580 = vmatprep.mubr.f32.mxu0 %v439
      %581 = vmatmul.mubr.f32.gmra.mrb[0].mxu0 %v390
      %v582 = vpop.f32.mrb[0].mxu0
      %v583 = vadd.f32 0.0, %v582
      %v584 = vpop.f32.mrb[0].mxu0
      %585 = vdwg.mxu0
      %v586 = vld [vmem:[%s311] sm:$0xff]
      %v587 = vld [vmem:[%s311 + $0x8] sm:$0xff]
      %v588 = vld [vmem:[%s311 + $0x10] sm:$0xff]
      %v589 = vld [vmem:[%s311 + $0x18] sm:$0xff]
      %v590 = vld [vmem:[%s311 + $0x20] sm:$0xff]
      %v591 = vld [vmem:[%s311 + $0x28] sm:$0xff]
      %v592 = vld [vmem:[%s311 + $0x30] sm:$0xff]
      %v593 = vld [vmem:[%s311 + $0x38] sm:$0xff]
      %v594 = vld [vmem:[%s311 + $0x40] sm:$0xff]
      %v595 = vld [vmem:[%s311 + $0x48] sm:$0xff]
      %v596 = vld [vmem:[%s311 + $0x50] sm:$0xff]
      %v597 = vld [vmem:[%s311 + $0x58] sm:$0xff]
      %v598 = vld [vmem:[%s311 + $0x60] sm:$0xff]
      %v599 = vld [vmem:[%s311 + $0x68] sm:$0xff]
      %v600 = vld [vmem:[%s311 + $0x70] sm:$0xff]
      %v601 = vld [vmem:[%s311 + $0x78] sm:$0xff]
      %v602 = vld [vmem:[%s311 + $0x80] sm:$0xff]
      %v603 = vld [vmem:[%s311 + $0x88] sm:$0xff]
      %v604 = vld [vmem:[%s311 + $0x90] sm:$0xff]
      %v605 = vld [vmem:[%s311 + $0x98] sm:$0xff]
      %v606 = vld [vmem:[%s311 + $0xa0] sm:$0xff]
      %v607 = vld [vmem:[%s311 + $0xa8] sm:$0xff]
      %v608 = vld [vmem:[%s311 + $0xb0] sm:$0xff]
      %v609 = vld [vmem:[%s311 + $0xb8] sm:$0xff]
      %v610 = vld [vmem:[%s311 + $0xc0] sm:$0xff]
      %v611 = vld [vmem:[%s311 + $0xc8] sm:$0xff]
      %v612 = vld [vmem:[%s311 + $0xd0] sm:$0xff]
      %v613 = vld [vmem:[%s311 + $0xd8] sm:$0xff]
      %v614 = vld [vmem:[%s311 + $0xe0] sm:$0xff]
      %v615 = vld [vmem:[%s311 + $0xe8] sm:$0xff]
      %v616 = vld [vmem:[%s311 + $0xf0] sm:$0xff]
      %v617 = vld [vmem:[%s311 + $0xf8] sm:$0xff]
      %v619 = vsel %vm392, %v587, 0
      %v622 = vsel %vm392, %v589, 0
      %v625 = vsel %vm392, %v591, 0
      %v628 = vsel %vm392, %v593, 0
      %v631 = vsel %vm392, %v595, 0
      %v634 = vsel %vm392, %v597, 0
      %v637 = vsel %vm392, %v599, 0
      %v640 = vsel %vm392, %v601, 0
      %v643 = vsel %vm392, %v603, 0
      %v646 = vsel %vm392, %v605, 0
      %v649 = vsel %vm392, %v607, 0
      %v652 = vsel %vm392, %v609, 0
      %v655 = vsel %vm392, %v611, 0
      %v658 = vsel %vm392, %v613, 0
      %v661 = vsel %vm392, %v615, 0
      %v664 = vsel %vm392, %v617, 0
      %666 = vmatprep.subr.mxu0 0.0
      %667 = vmatpush1.msra.mxu0 %v333
      %668 = vmatprep.subr.mxu0 0.0
      %669 = vmatpush1.msra.mxu0 %v334
      %670 = vmatprep.subr.mxu0 0.0
      %671 = vmatpush1.msra.mxu0 %v335
      %672 = vmatprep.subr.mxu0 0.0
      %673 = vmatpush1.msra.mxu0 %v336
      %674 = vmatprep.subr.mxu0 0.0
      %675 = vmatpush1.msra.mxu0 %v337
      %676 = vmatprep.subr.mxu0 0.0
      %677 = vmatpush1.msra.mxu0 %v338
      %678 = vmatprep.subr.mxu0 0.0
      %679 = vmatpush1.msra.mxu0 %v339
      %680 = vmatprep.subr.mxu0 0.0
      %681 = vmatpush1.msra.mxu0 %v340
      %682 = vmatprep.subr.mxu0 0.0
      %683 = vmatpush1.msra.mxu0 %v341
      %684 = vmatprep.subr.mxu0 0.0
      %685 = vmatpush1.msra.mxu0 %v342
      %686 = vmatprep.subr.mxu0 0.0
      %687 = vmatpush1.msra.mxu0 %v343
      %688 = vmatprep.subr.mxu0 0.0
      %689 = vmatpush1.msra.mxu0 %v344
      %690 = vmatprep.subr.mxu0 0.0
      %691 = vmatpush1.msra.mxu0 %v345
      %692 = vmatprep.subr.mxu0 0.0
      %693 = vmatpush1.msra.mxu0 %v346
      %694 = vmatprep.subr.mxu0 0.0
      %695 = vmatpush1.msra.mxu0 %v347
      %696 = vmatprep.subr.mxu0 0.0
      %697 = vmatpush1.msra.mxu0 %v348
      %698 = vmatprep.subr.mxu0 0.0
      %699 = vmatpush1.msra.mxu0 %v349
      %700 = vmatprep.subr.mxu0 0.0
      %701 = vmatpush1.msra.mxu0 %v350
      %702 = vmatprep.subr.mxu0 0.0
      %703 = vmatpush1.msra.mxu0 %v351
      %704 = vmatprep.subr.mxu0 0.0
      %705 = vmatpush1.msra.mxu0 %v352
      %706 = vmatprep.subr.mxu0 0.0
      %707 = vmatpush1.msra.mxu0 %v353
      %708 = vmatprep.subr.mxu0 0.0
      %709 = vmatpush1.msra.mxu0 %v354
      %710 = vmatprep.subr.mxu0 0.0
      %711 = vmatpush1.msra.mxu0 %v355
      %712 = vmatprep.subr.mxu0 0.0
      %713 = vmatpush1.msra.mxu0 %v356
      %714 = vmatprep.subr.mxu0 0.0
      %715 = vmatpush1.msra.mxu0 %v357
      %716 = vmatprep.subr.mxu0 0.0
      %717 = vmatpush1.msra.mxu0 %v358
      %718 = vmatprep.subr.mxu0 0.0
      %719 = vmatpush1.msra.mxu0 %v359
      %720 = vmatprep.subr.mxu0 0.0
      %721 = vmatpush1.msra.mxu0 0.0
      %722 = vmatprep.subr.mxu0 0.0
      %723 = vmatpush1.msra.mxu0 0.0
      %724 = vmatprep.subr.mxu0 0.0
      %725 = vmatpush1.msra.mxu0 0.0
      %726 = vmatprep.subr.mxu0 0.0
      %727 = vmatpush1.msra.mxu0 0.0
      %728 = vmatprep.subr.mxu0 0.0
      %729 = vmatpush1.msra.mxu0 0.0
      %730 = vmatprep.mubr.f32.mxu0 %v619
      %731 = vmatmul.mubr.f32.gmra.mrb[0].mxu0 %v586
      %v732 = vpop.f32.mrb[0].mxu0
      %v733 = vadd.f32 0.0, %v732
      %v734 = vpop.f32.mrb[0].mxu0
      %735 = vmatprep.mubr.f32.mxu0 %v622
      %736 = vmatmul.mubr.f32.gmra.mrb[0].mxu0 %v588
      %v737 = vpop.f32.mrb[0].mxu0
      %v738 = vadd.f32 0.0, %v737
      %v739 = vpop.f32.mrb[0].mxu0
      %740 = vmatprep.mubr.f32.mxu0 %v625
      %741 = vmatmul.mubr.f32.gmra.mrb[0].mxu0 %v590
      %v742 = vpop.f32.mrb[0].mxu0
      %v743 = vadd.f32 0.0, %v742
      %v744 = vpop.f32.mrb[0].mxu0
      %745 = vmatprep.mubr.f32.mxu0 %v628
      %746 = vmatmul.mubr.f32.gmra.mrb[0].mxu0 %v592
      %v747 = vpop.f32.mrb[0].mxu0
      %v748 = vadd.f32 0.0, %v747
      %v749 = vpop.f32.mrb[0].mxu0
      %750 = vmatprep.mubr.f32.mxu0 %v631
      %751 = vmatmul.mubr.f32.gmra.mrb[0].mxu0 %v594
      %v752 = vpop.f32.mrb[0].mxu0
      %v753 = vadd.f32 0.0, %v752
      %v754 = vpop.f32.mrb[0].mxu0
      %755 = vmatprep.mubr.f32.mxu0 %v634
      %756 = vmatmul.mubr.f32.gmra.mrb[0].mxu0 %v596
      %v757 = vpop.f32.mrb[0].mxu0
      %v758 = vadd.f32 0.0, %v757
      %v759 = vpop.f32.mrb[0].mxu0
      %760 = vmatprep.mubr.f32.mxu0 %v637
      %761 = vmatmul.mubr.f32.gmra.mrb[0].mxu0 %v598
      %v762 = vpop.f32.mrb[0].mxu0
      %v763 = vadd.f32 0.0, %v762
      %v764 = vpop.f32.mrb[0].mxu0
      %765 = vmatprep.mubr.f32.mxu0 %v640
      %766 = vmatmul.mubr.f32.gmra.mrb[0].mxu0 %v600
      %v767 = vpop.f32.mrb[0].mxu0
      %v768 = vadd.f32 0.0, %v767
      %v769 = vpop.f32.mrb[0].mxu0
      %770 = vmatprep.mubr.f32.mxu0 %v643
      %771 = vmatmul.mubr.f32.gmra.mrb[0].mxu0 %v602
      %v772 = vpop.f32.mrb[0].mxu0
      %v773 = vadd.f32 0.0, %v772
      %v774 = vpop.f32.mrb[0].mxu0
      %775 = vmatprep.mubr.f32.mxu0 %v646
      %776 = vmatmul.mubr.f32.gmra.mrb[0].mxu0 %v604
      %v777 = vpop.f32.mrb[0].mxu0
      %v778 = vadd.f32 0.0, %v777
      %v779 = vpop.f32.mrb[0].mxu0
      %780 = vmatprep.mubr.f32.mxu0 %v649
      %781 = vmatmul.mubr.f32.gmra.mrb[0].mxu0 %v606
      %v782 = vpop.f32.mrb[0].mxu0
      %v783 = vadd.f32 0.0, %v782
      %v784 = vpop.f32.mrb[0].mxu0
      %785 = vmatprep.mubr.f32.mxu0 %v652
      %786 = vmatmul.mubr.f32.gmra.mrb[0].mxu0 %v608
      %v787 = vpop.f32.mrb[0].mxu0
      %v788 = vadd.f32 0.0, %v787
      %v789 = vpop.f32.mrb[0].mxu0
      %790 = vmatprep.mubr.f32.mxu0 %v655
      %791 = vmatmul.mubr.f32.gmra.mrb[0].mxu0 %v610
      %v792 = vpop.f32.mrb[0].mxu0
      %v793 = vadd.f32 0.0, %v792
      %v794 = vpop.f32.mrb[0].mxu0
      %795 = vmatprep.mubr.f32.mxu0 %v658
      %796 = vmatmul.mubr.f32.gmra.mrb[0].mxu0 %v612
      %v797 = vpop.f32.mrb[0].mxu0
      %v798 = vadd.f32 0.0, %v797
      %v799 = vpop.f32.mrb[0].mxu0
      %800 = vmatprep.mubr.f32.mxu0 %v661
      %801 = vmatmul.mubr.f32.gmra.mrb[0].mxu0 %v614
      %v802 = vpop.f32.mrb[0].mxu0
      %v803 = vadd.f32 0.0, %v802
      %v804 = vpop.f32.mrb[0].mxu0
      %805 = vmatprep.mubr.f32.mxu0 %v664
      %806 = vmatmul.mubr.f32.gmra.mrb[0].mxu0 %v616
      %v807 = vpop.f32.mrb[0].mxu0
      %v808 = vadd.f32 0.0, %v807
      %v809 = vpop.f32.mrb[0].mxu0
      %810 = vdwg.mxu0
      %v811 = vld [vmem:[%s318] sm:$0xff]
      %v812 = vld [vmem:[%s318 + $0x8] sm:$0xff]
      %v813 = vld [vmem:[%s318 + $0x10] sm:$0xff]
      %v814 = vld [vmem:[%s318 + $0x18] sm:$0xff]
      %v815 = vld [vmem:[%s318 + $0x20] sm:$0xff]
      %v816 = vld [vmem:[%s318 + $0x28] sm:$0xff]
      %v817 = vld [vmem:[%s318 + $0x30] sm:$0xff]
      %v818 = vld [vmem:[%s318 + $0x38] sm:$0xff]
      %v819 = vld [vmem:[%s318 + $0x40] sm:$0xff]
      %v820 = vld [vmem:[%s318 + $0x48] sm:$0xff]
      %v821 = vld [vmem:[%s318 + $0x50] sm:$0xff]
      %v822 = vld [vmem:[%s318 + $0x58] sm:$0xff]
      %v823 = vld [vmem:[%s318 + $0x60] sm:$0xff]
      %v824 = vld [vmem:[%s318 + $0x68] sm:$0xff]
      %v825 = vld [vmem:[%s318 + $0x70] sm:$0xff]
      %v826 = vld [vmem:[%s318 + $0x78] sm:$0xff]
      %v827 = vld [vmem:[%s318 + $0x80] sm:$0xff]
      %v828 = vld [vmem:[%s318 + $0x88] sm:$0xff]
      %v829 = vld [vmem:[%s318 + $0x90] sm:$0xff]
      %v830 = vld [vmem:[%s318 + $0x98] sm:$0xff]
      %v831 = vld [vmem:[%s318 + $0xa0] sm:$0xff]
      %v832 = vld [vmem:[%s318 + $0xa8] sm:$0xff]
      %v833 = vld [vmem:[%s318 + $0xb0] sm:$0xff]
      %v834 = vld [vmem:[%s318 + $0xb8] sm:$0xff]
      %v835 = vld [vmem:[%s318 + $0xc0] sm:$0xff]
      %v836 = vld [vmem:[%s318 + $0xc8] sm:$0xff]
      %v837 = vld [vmem:[%s318 + $0xd0] sm:$0xff]
      %v838 = vld [vmem:[%s318 + $0xd8] sm:$0xff]
      %v839 = vld [vmem:[%s318 + $0xe0] sm:$0xff]
      %v840 = vld [vmem:[%s318 + $0xe8] sm:$0xff]
      %v841 = vld [vmem:[%s318 + $0xf0] sm:$0xff]
      %v842 = vld [vmem:[%s318 + $0xf8] sm:$0xff]
      %v844 = vsel %vm392, %v812, 0
      %v847 = vsel %vm392, %v814, 0
      %v850 = vsel %vm392, %v816, 0
      %v853 = vsel %vm392, %v818, 0
      %v856 = vsel %vm392, %v820, 0
      %v859 = vsel %vm392, %v822, 0
      %v862 = vsel %vm392, %v824, 0
      %v865 = vsel %vm392, %v826, 0
      %v868 = vsel %vm392, %v828, 0
      %v871 = vsel %vm392, %v830, 0
      %v874 = vsel %vm392, %v832, 0
      %v877 = vsel %vm392, %v834, 0
      %v880 = vsel %vm392, %v836, 0
      %v883 = vsel %vm392, %v838, 0
      %v886 = vsel %vm392, %v840, 0
      %v889 = vsel %vm392, %v842, 0
      %891 = vmatprep.subr.mxu0 0.0
      %892 = vmatpush1.msra.mxu0 %v333
      %893 = vmatprep.subr.mxu0 0.0
      %894 = vmatpush1.msra.mxu0 %v334
      %895 = vmatprep.subr.mxu0 0.0
      %896 = vmatpush1.msra.mxu0 %v335
      %897 = vmatprep.subr.mxu0 0.0
      %898 = vmatpush1.msra.mxu0 %v336
      %899 = vmatprep.subr.mxu0 0.0
      %900 = vmatpush1.msra.mxu0 %v337
      %901 = vmatprep.subr.mxu0 0.0
      %902 = vmatpush1.msra.mxu0 %v338
      %903 = vmatprep.subr.mxu0 0.0
      %904 = vmatpush1.msra.mxu0 %v339
      %905 = vmatprep.subr.mxu0 0.0
      %906 = vmatpush1.msra.mxu0 %v340
      %907 = vmatprep.subr.mxu0 0.0
      %908 = vmatpush1.msra.mxu0 %v341
      %909 = vmatprep.subr.mxu0 0.0
      %910 = vmatpush1.msra.mxu0 %v342
      %911 = vmatprep.subr.mxu0 0.0
      %912 = vmatpush1.msra.mxu0 %v343
      %913 = vmatprep.subr.mxu0 0.0
      %914 = vmatpush1.msra.mxu0 %v344
      %915 = vmatprep.subr.mxu0 0.0
      %916 = vmatpush1.msra.mxu0 %v345
      %917 = vmatprep.subr.mxu0 0.0
      %918 = vmatpush1.msra.mxu0 %v346
      %919 = vmatprep.subr.mxu0 0.0
      %920 = vmatpush1.msra.mxu0 %v347
      %921 = vmatprep.subr.mxu0 0.0
      %922 = vmatpush1.msra.mxu0 %v348
      %923 = vmatprep.subr.mxu0 0.0
      %924 = vmatpush1.msra.mxu0 %v349
      %925 = vmatprep.subr.mxu0 0.0
      %926 = vmatpush1.msra.mxu0 %v350
      %927 = vmatprep.subr.mxu0 0.0
      %928 = vmatpush1.msra.mxu0 %v351
      %929 = vmatprep.subr.mxu0 0.0
      %930 = vmatpush1.msra.mxu0 %v352
      %931 = vmatprep.subr.mxu0 0.0
      %932 = vmatpush1.msra.mxu0 %v353
      %933 = vmatprep.subr.mxu0 0.0
      %934 = vmatpush1.msra.mxu0 %v354
      %935 = vmatprep.subr.mxu0 0.0
      %936 = vmatpush1.msra.mxu0 %v355
      %937 = vmatprep.subr.mxu0 0.0
      %938 = vmatpush1.msra.mxu0 %v356
      %939 = vmatprep.subr.mxu0 0.0
      %940 = vmatpush1.msra.mxu0 %v357
      %941 = vmatprep.subr.mxu0 0.0
      %942 = vmatpush1.msra.mxu0 %v358
      %943 = vmatprep.subr.mxu0 0.0
      %944 = vmatpush1.msra.mxu0 %v359
      %945 = vmatprep.subr.mxu0 0.0
      %946 = vmatpush1.msra.mxu0 0.0
      %947 = vmatprep.subr.mxu0 0.0
      %948 = vmatpush1.msra.mxu0 0.0
      %949 = vmatprep.subr.mxu0 0.0
      %950 = vmatpush1.msra.mxu0 0.0
      %951 = vmatprep.subr.mxu0 0.0
      %952 = vmatpush1.msra.mxu0 0.0
      %953 = vmatprep.subr.mxu0 0.0
      %954 = vmatpush1.msra.mxu0 0.0
      %955 = vmatprep.mubr.f32.mxu0 %v844
      %956 = vmatmul.mubr.f32.gmra.mrb[0].mxu0 %v811
      %v957 = vpop.f32.mrb[0].mxu0
      %v958 = vadd.f32 0.0, %v957
      %v959 = vpop.f32.mrb[0].mxu0
      %960 = vmatprep.mubr.f32.mxu0 %v847
      %961 = vmatmul.mubr.f32.gmra.mrb[0].mxu0 %v813
      %v962 = vpop.f32.mrb[0].mxu0
      %v963 = vadd.f32 0.0, %v962
      %v964 = vpop.f32.mrb[0].mxu0
      %965 = vmatprep.mubr.f32.mxu0 %v850
      %966 = vmatmul.mubr.f32.gmra.mrb[0].mxu0 %v815
      %v967 = vpop.f32.mrb[0].mxu0
      %v968 = vadd.f32 0.0, %v967
      %v969 = vpop.f32.mrb[0].mxu0
      %970 = vmatprep.mubr.f32.mxu0 %v853
      %971 = vmatmul.mubr.f32.gmra.mrb[0].mxu0 %v817
      %v972 = vpop.f32.mrb[0].mxu0
      %v973 = vadd.f32 0.0, %v972
      %v974 = vpop.f32.mrb[0].mxu0
      %975 = vmatprep.mubr.f32.mxu0 %v856
      %976 = vmatmul.mubr.f32.gmra.mrb[0].mxu0 %v819
      %v977 = vpop.f32.mrb[0].mxu0
      %v978 = vadd.f32 0.0, %v977
      %v979 = vpop.f32.mrb[0].mxu0
      %980 = vmatprep.mubr.f32.mxu0 %v859
      %981 = vmatmul.mubr.f32.gmra.mrb[0].mxu0 %v821
      %v982 = vpop.f32.mrb[0].mxu0
      %v983 = vadd.f32 0.0, %v982
      %v984 = vpop.f32.mrb[0].mxu0
      %985 = vmatprep.mubr.f32.mxu0 %v862
      %986 = vmatmul.mubr.f32.gmra.mrb[0].mxu0 %v823
      %v987 = vpop.f32.mrb[0].mxu0
      %v988 = vadd.f32 0.0, %v987
      %v989 = vpop.f32.mrb[0].mxu0
      %990 = vmatprep.mubr.f32.mxu0 %v865
      %991 = vmatmul.mubr.f32.gmra.mrb[0].mxu0 %v825
      %v992 = vpop.f32.mrb[0].mxu0
      %v993 = vadd.f32 0.0, %v992
      %v994 = vpop.f32.mrb[0].mxu0
      %995 = vmatprep.mubr.f32.mxu0 %v868
      %996 = vmatmul.mubr.f32.gmra.mrb[0].mxu0 %v827
      %v997 = vpop.f32.mrb[0].mxu0
      %v998 = vadd.f32 0.0, %v997
      %v999 = vpop.f32.mrb[0].mxu0
      %1000 = vmatprep.mubr.f32.mxu0 %v871
      %1001 = vmatmul.mubr.f32.gmra.mrb[0].mxu0 %v829
      %v1002 = vpop.f32.mrb[0].mxu0
      %v1003 = vadd.f32 0.0, %v1002
      %v1004 = vpop.f32.mrb[0].mxu0
      %1005 = vmatprep.mubr.f32.mxu0 %v874
      %1006 = vmatmul.mubr.f32.gmra.mrb[0].mxu0 %v831
      %v1007 = vpop.f32.mrb[0].mxu0
      %v1008 = vadd.f32 0.0, %v1007
      %v1009 = vpop.f32.mrb[0].mxu0
      %1010 = vmatprep.mubr.f32.mxu0 %v877
      %1011 = vmatmul.mubr.f32.gmra.mrb[0].mxu0 %v833
      %v1012 = vpop.f32.mrb[0].mxu0
      %v1013 = vadd.f32 0.0, %v1012
      %v1014 = vpop.f32.mrb[0].mxu0
      %1015 = vmatprep.mubr.f32.mxu0 %v880
      %1016 = vmatmul.mubr.f32.gmra.mrb[0].mxu0 %v835
      %v1017 = vpop.f32.mrb[0].mxu0
      %v1018 = vadd.f32 0.0, %v1017
      %v1019 = vpop.f32.mrb[0].mxu0
      %1020 = vmatprep.mubr.f32.mxu0 %v883
      %1021 = vmatmul.mubr.f32.gmra.mrb[0].mxu0 %v837
      %v1022 = vpop.f32.mrb[0].mxu0
      %v1023 = vadd.f32 0.0, %v1022
      %v1024 = vpop.f32.mrb[0].mxu0
      %1025 = vmatprep.mubr.f32.mxu0 %v886
      %1026 = vmatmul.mubr.f32.gmra.mrb[0].mxu0 %v839
      %v1027 = vpop.f32.mrb[0].mxu0
      %v1028 = vadd.f32 0.0, %v1027
      %v1029 = vpop.f32.mrb[0].mxu0
      %1030 = vmatprep.mubr.f32.mxu0 %v889
      %1031 = vmatmul.mubr.f32.gmra.mrb[0].mxu0 %v841
      %v1032 = vpop.f32.mrb[0].mxu0
      %v1033 = vadd.f32 0.0, %v1032
      %v1034 = vpop.f32.mrb[0].mxu0
      %1035 = vdwg.mxu0
      %v1036 = vld [vmem:[%s325] sm:$0xff]
      %v1037 = vld [vmem:[%s325 + $0x8] sm:$0xff]
      %v1038 = vld [vmem:[%s325 + $0x10] sm:$0xff]
      %v1039 = vld [vmem:[%s325 + $0x18] sm:$0xff]
      %v1040 = vld [vmem:[%s325 + $0x20] sm:$0xff]
      %v1041 = vld [vmem:[%s325 + $0x28] sm:$0xff]
      %v1042 = vld [vmem:[%s325 + $0x30] sm:$0xff]
      %v1043 = vld [vmem:[%s325 + $0x38] sm:$0xff]
      %v1044 = vld [vmem:[%s325 + $0x40] sm:$0xff]
      %v1045 = vld [vmem:[%s325 + $0x48] sm:$0xff]
      %v1046 = vld [vmem:[%s325 + $0x50] sm:$0xff]
      %v1047 = vld [vmem:[%s325 + $0x58] sm:$0xff]
      %v1048 = vld [vmem:[%s325 + $0x60] sm:$0xff]
      %v1049 = vld [vmem:[%s325 + $0x68] sm:$0xff]
      %v1050 = vld [vmem:[%s325 + $0x70] sm:$0xff]
      %v1051 = vld [vmem:[%s325 + $0x78] sm:$0xff]
      %v1052 = vld [vmem:[%s325 + $0x80] sm:$0xff]
      %v1053 = vld [vmem:[%s325 + $0x88] sm:$0xff]
      %v1054 = vld [vmem:[%s325 + $0x90] sm:$0xff]
      %v1055 = vld [vmem:[%s325 + $0x98] sm:$0xff]
      %v1056 = vld [vmem:[%s325 + $0xa0] sm:$0xff]
      %v1057 = vld [vmem:[%s325 + $0xa8] sm:$0xff]
      %v1058 = vld [vmem:[%s325 + $0xb0] sm:$0xff]
      %v1059 = vld [vmem:[%s325 + $0xb8] sm:$0xff]
      %v1060 = vld [vmem:[%s325 + $0xc0] sm:$0xff]
      %v1061 = vld [vmem:[%s325 + $0xc8] sm:$0xff]
      %v1062 = vld [vmem:[%s325 + $0xd0] sm:$0xff]
      %v1063 = vld [vmem:[%s325 + $0xd8] sm:$0xff]
      %v1064 = vld [vmem:[%s325 + $0xe0] sm:$0xff]
      %v1065 = vld [vmem:[%s325 + $0xe8] sm:$0xff]
      %v1066 = vld [vmem:[%s325 + $0xf0] sm:$0xff]
      %v1067 = vld [vmem:[%s325 + $0xf8] sm:$0xff]
      %v1069 = vsel %vm392, %v1037, 0
      %v1072 = vsel %vm392, %v1039, 0
      %v1075 = vsel %vm392, %v1041, 0
      %v1078 = vsel %vm392, %v1043, 0
      %v1081 = vsel %vm392, %v1045, 0
      %v1084 = vsel %vm392, %v1047, 0
      %v1087 = vsel %vm392, %v1049, 0
      %v1090 = vsel %vm392, %v1051, 0
      %v1093 = vsel %vm392, %v1053, 0
      %v1096 = vsel %vm392, %v1055, 0
      %v1099 = vsel %vm392, %v1057, 0
      %v1102 = vsel %vm392, %v1059, 0
      %v1105 = vsel %vm392, %v1061, 0
      %v1108 = vsel %vm392, %v1063, 0
      %v1111 = vsel %vm392, %v1065, 0
      %v1114 = vsel %vm392, %v1067, 0
      %1116 = vmatprep.subr.mxu0 0.0
      %1117 = vmatpush1.msra.mxu0 %v333
      %1118 = vmatprep.subr.mxu0 0.0
      %1119 = vmatpush1.msra.mxu0 %v334
      %1120 = vmatprep.subr.mxu0 0.0
      %1121 = vmatpush1.msra.mxu0 %v335
      %1122 = vmatprep.subr.mxu0 0.0
      %1123 = vmatpush1.msra.mxu0 %v336
      %1124 = vmatprep.subr.mxu0 0.0
      %1125 = vmatpush1.msra.mxu0 %v337
      %1126 = vmatprep.subr.mxu0 0.0
      %1127 = vmatpush1.msra.mxu0 %v338
      %1128 = vmatprep.subr.mxu0 0.0
      %1129 = vmatpush1.msra.mxu0 %v339
      %1130 = vmatprep.subr.mxu0 0.0
      %1131 = vmatpush1.msra.mxu0 %v340
      %1132 = vmatprep.subr.mxu0 0.0
      %1133 = vmatpush1.msra.mxu0 %v341
      %1134 = vmatprep.subr.mxu0 0.0
      %1135 = vmatpush1.msra.mxu0 %v342
      %1136 = vmatprep.subr.mxu0 0.0
      %1137 = vmatpush1.msra.mxu0 %v343
      %1138 = vmatprep.subr.mxu0 0.0
      %1139 = vmatpush1.msra.mxu0 %v344
      %1140 = vmatprep.subr.mxu0 0.0
      %1141 = vmatpush1.msra.mxu0 %v345
      %1142 = vmatprep.subr.mxu0 0.0
      %1143 = vmatpush1.msra.mxu0 %v346
      %1144 = vmatprep.subr.mxu0 0.0
      %1145 = vmatpush1.msra.mxu0 %v347
      %1146 = vmatprep.subr.mxu0 0.0
      %1147 = vmatpush1.msra.mxu0 %v348
      %1148 = vmatprep.subr.mxu0 0.0
      %1149 = vmatpush1.msra.mxu0 %v349
      %1150 = vmatprep.subr.mxu0 0.0
      %1151 = vmatpush1.msra.mxu0 %v350
      %1152 = vmatprep.subr.mxu0 0.0
      %1153 = vmatpush1.msra.mxu0 %v351
      %1154 = vmatprep.subr.mxu0 0.0
      %1155 = vmatpush1.msra.mxu0 %v352
      %1156 = vmatprep.subr.mxu0 0.0
      %1157 = vmatpush1.msra.mxu0 %v353
      %1158 = vmatprep.subr.mxu0 0.0
      %1159 = vmatpush1.msra.mxu0 %v354
      %1160 = vmatprep.subr.mxu0 0.0
      %1161 = vmatpush1.msra.mxu0 %v355
      %1162 = vmatprep.subr.mxu0 0.0
      %1163 = vmatpush1.msra.mxu0 %v356
      %1164 = vmatprep.subr.mxu0 0.0
      %1165 = vmatpush1.msra.mxu0 %v357
      %1166 = vmatprep.subr.mxu0 0.0
      %1167 = vmatpush1.msra.mxu0 %v358
      %1168 = vmatprep.subr.mxu0 0.0
      %1169 = vmatpush1.msra.mxu0 %v359
      %1170 = vmatprep.subr.mxu0 0.0
      %1171 = vmatpush1.msra.mxu0 0.0
      %1172 = vmatprep.subr.mxu0 0.0
      %1173 = vmatpush1.msra.mxu0 0.0
      %1174 = vmatprep.subr.mxu0 0.0
      %1175 = vmatpush1.msra.mxu0 0.0
      %1176 = vmatprep.subr.mxu0 0.0
      %1177 = vmatpush1.msra.mxu0 0.0
      %1178 = vmatprep.subr.mxu0 0.0
      %1179 = vmatpush1.msra.mxu0 0.0
      %1180 = vmatprep.mubr.f32.mxu0 %v1069
      %1181 = vmatmul.mubr.f32.gmra.mrb[0].mxu0 %v1036
      %v1182 = vpop.f32.mrb[0].mxu0
      %v1183 = vadd.f32 0.0, %v1182
      %v1184 = vpop.f32.mrb[0].mxu0
      %1185 = vmatprep.mubr.f32.mxu0 %v1072
      %1186 = vmatmul.mubr.f32.gmra.mrb[0].mxu0 %v1038
      %v1187 = vpop.f32.mrb[0].mxu0
      %v1188 = vadd.f32 0.0, %v1187
      %v1189 = vpop.f32.mrb[0].mxu0
      %1190 = vmatprep.mubr.f32.mxu0 %v1075
      %1191 = vmatmul.mubr.f32.gmra.mrb[0].mxu0 %v1040
      %v1192 = vpop.f32.mrb[0].mxu0
      %v1193 = vadd.f32 0.0, %v1192
      %v1194 = vpop.f32.mrb[0].mxu0
      %1195 = vmatprep.mubr.f32.mxu0 %v1078
      %1196 = vmatmul.mubr.f32.gmra.mrb[0].mxu0 %v1042
      %v1197 = vpop.f32.mrb[0].mxu0
      %v1198 = vadd.f32 0.0, %v1197
      %v1199 = vpop.f32.mrb[0].mxu0
      %1200 = vmatprep.mubr.f32.mxu0 %v1081
      %1201 = vmatmul.mubr.f32.gmra.mrb[0].mxu0 %v1044
      %v1202 = vpop.f32.mrb[0].mxu0
      %v1203 = vadd.f32 0.0, %v1202
      %v1204 = vpop.f32.mrb[0].mxu0
      %1205 = vmatprep.mubr.f32.mxu0 %v1084
      %1206 = vmatmul.mubr.f32.gmra.mrb[0].mxu0 %v1046
      %v1207 = vpop.f32.mrb[0].mxu0
      %v1208 = vadd.f32 0.0, %v1207
      %v1209 = vpop.f32.mrb[0].mxu0
      %1210 = vmatprep.mubr.f32.mxu0 %v1087
      %1211 = vmatmul.mubr.f32.gmra.mrb[0].mxu0 %v1048
      %v1212 = vpop.f32.mrb[0].mxu0
      %v1213 = vadd.f32 0.0, %v1212
      %v1214 = vpop.f32.mrb[0].mxu0
      %1215 = vmatprep.mubr.f32.mxu0 %v1090
      %1216 = vmatmul.mubr.f32.gmra.mrb[0].mxu0 %v1050
      %v1217 = vpop.f32.mrb[0].mxu0
      %v1218 = vadd.f32 0.0, %v1217
      %v1219 = vpop.f32.mrb[0].mxu0
      %1220 = vmatprep.mubr.f32.mxu0 %v1093
      %1221 = vmatmul.mubr.f32.gmra.mrb[0].mxu0 %v1052
      %v1222 = vpop.f32.mrb[0].mxu0
      %v1223 = vadd.f32 0.0, %v1222
      %v1224 = vpop.f32.mrb[0].mxu0
      %1225 = vmatprep.mubr.f32.mxu0 %v1096
      %1226 = vmatmul.mubr.f32.gmra.mrb[0].mxu0 %v1054
      %v1227 = vpop.f32.mrb[0].mxu0
      %v1228 = vadd.f32 0.0, %v1227
      %v1229 = vpop.f32.mrb[0].mxu0
      %1230 = vmatprep.mubr.f32.mxu0 %v1099
      %1231 = vmatmul.mubr.f32.gmra.mrb[0].mxu0 %v1056
      %v1232 = vpop.f32.mrb[0].mxu0
      %v1233 = vadd.f32 0.0, %v1232
      %v1234 = vpop.f32.mrb[0].mxu0
      %1235 = vmatprep.mubr.f32.mxu0 %v1102
      %1236 = vmatmul.mubr.f32.gmra.mrb[0].mxu0 %v1058
      %v1237 = vpop.f32.mrb[0].mxu0
      %v1238 = vadd.f32 0.0, %v1237
      %v1239 = vpop.f32.mrb[0].mxu0
      %1240 = vmatprep.mubr.f32.mxu0 %v1105
      %1241 = vmatmul.mubr.f32.gmra.mrb[0].mxu0 %v1060
      %v1242 = vpop.f32.mrb[0].mxu0
      %v1243 = vadd.f32 0.0, %v1242
      %v1244 = vpop.f32.mrb[0].mxu0
      %1245 = vmatprep.mubr.f32.mxu0 %v1108
      %1246 = vmatmul.mubr.f32.gmra.mrb[0].mxu0 %v1062
      %v1247 = vpop.f32.mrb[0].mxu0
      %v1248 = vadd.f32 0.0, %v1247
      %v1249 = vpop.f32.mrb[0].mxu0
      %1250 = vmatprep.mubr.f32.mxu0 %v1111
      %1251 = vmatmul.mubr.f32.gmra.mrb[0].mxu0 %v1064
      %v1252 = vpop.f32.mrb[0].mxu0
      %v1253 = vadd.f32 0.0, %v1252
      %v1254 = vpop.f32.mrb[0].mxu0
      %1255 = vmatprep.mubr.f32.mxu0 %v1114
      %1256 = vmatmul.mubr.f32.gmra.mrb[0].mxu0 %v1066
      %v1257 = vpop.f32.mrb[0].mxu0
      %v1258 = vadd.f32 0.0, %v1257
      %v1259 = vpop.f32.mrb[0].mxu0
      %1260 = vdwg.mxu0
      %v1261 = vmax.f32 %v508, %v733
      %v1262 = vmax.f32 %v513, %v738
      %v1263 = vmax.f32 %v518, %v743
      %v1264 = vmax.f32 %v523, %v748
      %v1265 = vmax.f32 %v528, %v753
      %v1266 = vmax.f32 %v533, %v758
      %v1267 = vmax.f32 %v538, %v763
      %v1268 = vmax.f32 %v543, %v768
      %v1269 = vmax.f32 %v548, %v773
      %v1270 = vmax.f32 %v553, %v778
      %v1271 = vmax.f32 %v558, %v783
      %v1272 = vmax.f32 %v563, %v788
      %v1273 = vmax.f32 %v568, %v793
      %v1274 = vmax.f32 %v573, %v798
      %v1275 = vmax.f32 %v578, %v803
      %v1276 = vmax.f32 %v583, %v808
      %v1277 = vmax.f32 %v958, %v1183
      %v1278 = vmax.f32 %v963, %v1188
      %v1279 = vmax.f32 %v968, %v1193
      %v1280 = vmax.f32 %v973, %v1198
      %v1281 = vmax.f32 %v978, %v1203
      %v1282 = vmax.f32 %v983, %v1208
      %v1283 = vmax.f32 %v988, %v1213
      %v1284 = vmax.f32 %v993, %v1218
      %v1285 = vmax.f32 %v998, %v1223
      %v1286 = vmax.f32 %v1003, %v1228
      %v1287 = vmax.f32 %v1008, %v1233
      %v1288 = vmax.f32 %v1013, %v1238
      %v1289 = vmax.f32 %v1018, %v1243
      %v1290 = vmax.f32 %v1023, %v1248
      %v1291 = vmax.f32 %v1028, %v1253
      %v1292 = vmax.f32 %v1033, %v1258
      %v1293 = vmax.f32 %v1261, %v1277
      %v1294 = vmax.f32 %v1262, %v1278
      %v1295 = vmax.f32 %v1263, %v1279
      %v1296 = vmax.f32 %v1264, %v1280
      %v1297 = vmax.f32 %v1265, %v1281
      %v1298 = vmax.f32 %v1266, %v1282
      %v1299 = vmax.f32 %v1267, %v1283
      %v1300 = vmax.f32 %v1268, %v1284
      %v1301 = vmax.f32 %v1269, %v1285
      %v1302 = vmax.f32 %v1270, %v1286
      %v1303 = vmax.f32 %v1271, %v1287
      %v1304 = vmax.f32 %v1272, %v1288
      %v1305 = vmax.f32 %v1273, %v1289
      %v1306 = vmax.f32 %v1274, %v1290
      %v1307 = vmax.f32 %v1275, %v1291
      %v1308 = vmax.f32 %v1276, %v1292
      %v1309 = vld [vmem:[%s5] sm:$0x1]
      %v1311 = vlaneseq
      %v1312 = vshrl.u32 %v1311, 7
      %v1313 = vsub.s32 0, %v1312
      %v1314 = vrot.slane %v1309, %v1313
      %v1316 = vadd.f32 %v1293, %v1314
      %v1317 = vadd.f32 %v1294, %v1314
      %v1318 = vadd.f32 %v1295, %v1314
      %v1319 = vadd.f32 %v1296, %v1314
      %v1320 = vadd.f32 %v1297, %v1314
      %v1321 = vadd.f32 %v1298, %v1314
      %v1322 = vadd.f32 %v1299, %v1314
      %v1323 = vadd.f32 %v1300, %v1314
      %v1324 = vadd.f32 %v1301, %v1314
      %v1325 = vadd.f32 %v1302, %v1314
      %v1326 = vadd.f32 %v1303, %v1314
      %v1327 = vadd.f32 %v1304, %v1314
      %v1328 = vadd.f32 %v1305, %v1314
      %v1329 = vadd.f32 %v1306, %v1314
      %v1330 = vadd.f32 %v1307, %v1314
      %v1331 = vadd.f32 %v1308, %v1314
      %v1332 = vmax.f32 %v1316, 0.0
      %v1333 = vmax.f32 %v1317, 0.0
      %v1334 = vmax.f32 %v1318, 0.0
      %v1335 = vmax.f32 %v1319, 0.0
      %v1336 = vmax.f32 %v1320, 0.0
      %v1337 = vmax.f32 %v1321, 0.0
      %v1338 = vmax.f32 %v1322, 0.0
      %v1339 = vmax.f32 %v1323, 0.0
      %v1340 = vmax.f32 %v1324, 0.0
      %v1341 = vmax.f32 %v1325, 0.0
      %v1342 = vmax.f32 %v1326, 0.0
      %v1343 = vmax.f32 %v1327, 0.0
      %v1344 = vmax.f32 %v1328, 0.0
      %v1345 = vmax.f32 %v1329, 0.0
      %v1346 = vmax.f32 %v1330, 0.0
      %v1347 = vmax.f32 %v1331, 0.0
      %1348 = vst [vmem:[%s331] sm:$0xff] %v1332
      %1349 = vst [vmem:[%s331 + $0x8] sm:$0xff] %v1333
      %1350 = vst [vmem:[%s331 + $0x10] sm:$0xff] %v1334
      %1351 = vst [vmem:[%s331 + $0x18] sm:$0xff] %v1335
      %1352 = vst [vmem:[%s331 + $0x20] sm:$0xff] %v1336
      %1353 = vst [vmem:[%s331 + $0x28] sm:$0xff] %v1337
      %1354 = vst [vmem:[%s331 + $0x30] sm:$0xff] %v1338
      %1355 = vst [vmem:[%s331 + $0x38] sm:$0xff] %v1339
      %1356 = vst [vmem:[%s331 + $0x40] sm:$0xff] %v1340
      %1357 = vst [vmem:[%s331 + $0x48] sm:$0xff] %v1341
      %1358 = vst [vmem:[%s331 + $0x50] sm:$0xff] %v1342
      %1359 = vst [vmem:[%s331 + $0x58] sm:$0xff] %v1343
      %1360 = vst [vmem:[%s331 + $0x60] sm:$0xff] %v1344
      %1361 = vst [vmem:[%s331 + $0x68] sm:$0xff] %v1345
      %1362 = vst [vmem:[%s331 + $0x70] sm:$0xff] %v1346
      %1363 = vst [vmem:[%s331 + $0x78] sm:$0xff] %v1347
      %s1364 = smul.u32 16, %s17
      %p1365 = scmp.lt.s32.totalorder %s1364, 31
      %s1366 = scalar_select %p1365, %s1364, 31
      %s1367 = smul.addr %s1366, 8
      %s1368 = scalar_lea.vmem %s6, %s1367
      // Predicated region
      $region45: #{bloodstain_forward.3} parent=43 // pred_check
        %p1369 = pneg %p181
      $region46: #{bloodstain_forward.3} parent=43 // pred_check_branch
        %1371 = sbr.rel (%p1369) target = $region48
      $region47: #{bloodstain_forward.3} parent=43 // pred_region
        %s1372 = smul.u32 16, %s17
      $region48: #{bloodstain_forward.3} parent=43 // pred_fallthru
        _
    $region44: #{bloodstain_forward.3} parent=5 // pred_fallthru
      _
    %p1373 = scmp.le.s32.totalorder 2, %s12
    // Predicated region
    $region49: #{bloodstain_forward.3} parent=5 // pred_check
      %p1374 = pneg %p1373
    $region50: #{bloodstain_forward.3} parent=5 // pred_check_branch
      %1376 = sbr.rel (%p1374) target = $region52
    $region51: #{bloodstain_forward.3} parent=5 // pred_region
      %s1377 = ssub.s32 %s12, 2
      // Predicated region
      $region53: #{bloodstain_forward.3} parent=51 // pred_check
        %p1378 = pneg %p187
      $region54: #{bloodstain_forward.3} parent=51 // pred_check_branch
        %1380 = sbr.rel (%p1378) target = $region56
      $region55: #{bloodstain_forward.3} parent=51 // pred_region
        %s1381 = smul.u32 16, %s18
        %p1382 = scmp.lt.s32.totalorder %s1381, 31
        %s1383 = scalar_select %p1382, %s1381, 31
        %s1384 = smul.addr %s1383, 8
        %s1385 = scalar_lea.vmem %s6, %s1384
      $region56: #{bloodstain_forward.3} parent=51 // pred_fallthru
        _
    $region52: #{bloodstain_forward.3} parent=5 // pred_fallthru
      _
  $region6: #{bloodstain_forward.3} parent=0 // loop_footer
    %s16 = sadd.s32 1, %s12
  $region7: #{bloodstain_forward.3} parent=0 // loop_footer_branch
    %11 = sbr.rel target = $region3
  $region8: #{bloodstain_forward.3} parent=0 // loop_exit
    _

// kernel: bloodstain_forward.4
$region0: #{bloodstain_forward.4}
  #allocation0 [shape = 'u32[]', space=smem, size = 0x4, offset = 0x4, fixed_abs, tag = 'smem constant byte address 0x4 - core index']
  #allocation1 [shape = 'u32[144,128]{1,0:T(1,128)}', space=vmem, size = 0x12000, scoped, tag = 'internal scratch']
  %s0 = inlined_call_operand.vmem [shape: f32[128,576], index: 0, kind: input, shape index: {}]
  %s1 = inlined_call_operand.vmem [shape: f32[128,576], index: 1, kind: input, shape index: {}]
  %s2 = inlined_call_operand.vmem [shape: f32[128,576], index: 2, kind: input, shape index: {}]
  %s3 = inlined_call_operand.vmem [shape: f32[128,576], index: 3, kind: input, shape index: {}]
  %s4 = inlined_call_operand.vmem [shape: f32[576,128], index: 4, kind: input, shape index: {}]
  %s5 = inlined_call_operand.vmem [shape: f32[1,128], index: 5, kind: input, shape index: {}]
  %s6 = inlined_call_operand.vmem [shape: f32[128,128], index: 6, kind: output, shape index: {}]
  %s7 = sld [smem:[#allocation0]]
  $region57: #{bloodstain_forward.4} parent=0
    _
  %s9 = ssub.s32 1, %s7
  %s10 = scalar_select 0, %s9, %s7
  loop: start=0, step=1, limit=4
  $region2: #{bloodstain_forward.4} parent=0 // loop_pre_header
    _
  $region3: #{bloodstain_forward.4} parent=0 // loop_header
    %s12 = sphi 0, %s16
    %p13 = scmp.ge.s32.totalorder %s12, 4
    %s22 = sphi 0, %s24
    %s25 = sphi 0, %s22
    %s26 = sphi 0, %s25
    %s42 = sphi 0, %s26
    %s48 = sphi 0, %s50
    %s51 = sphi 0, %s48
    %s52 = sphi 0, %s51
    %s68 = sphi 0, %s52
    %s74 = sphi 0, %s76
    %s77 = sphi 0, %s74
    %s78 = sphi 0, %s77
    %s94 = sphi 0, %s78
    %s100 = sphi 0, %s102
    %s103 = sphi 0, %s100
    %s104 = sphi 0, %s103
    %s120 = sphi 0, %s104
    %s124 = sphi 0, %s124
    %s126 = sphi 0, %s124
    %s127 = sphi 0, %s126
    %s141 = sphi 0, %s127
    %s145 = sphi 0, %s145
    %s147 = sphi 0, %s145
    %s148 = sphi 0, %s147
    %s162 = sphi 0, %s148
    %s168 = sphi 0, %s170
    %s171 = sphi 0, %s168
    %s172 = sphi 0, %s171
    %s188 = sphi 0, %s172
  $region4: #{bloodstain_forward.4} parent=0 // loop_header_branch
    %15 = sbr.rel (%p13) target = $region8
  $region5: #{bloodstain_forward.4} parent=0 // loop_body
    %s17 = ssub.s32 %s12, 1
    %s18 = ssub.s32 %s12, 2
    %s19 = sadd.s32 %s12, 1
    %s20 = ssub.s32 %s12, %s19
    %p21 = scmp.eq.s32.totalorder %s20, 0
    %s23 = sadd.s32 %s22, 1
    %s24 = scalar_select %p21, %s22, %s23
    %p27 = pneg %p21
    %p28 = scmp.eq.s32.totalorder %s12, 1
    %p29 = por %p27, %p28
    %p30 = scmp.ne.s32.totalorder %s22, %s25
    %p31 = scmp.eq.s32.totalorder %s12, 0
    %p32 = por %p30, %p31
    %p33 = scmp.ne.s32.totalorder %s22, %s25
    %p34 = scmp.eq.s32.totalorder %s17, 1
    %p35 = por %p33, %p34
    %p36 = scmp.ne.s32.totalorder %s25, %s26
    %p37 = scmp.eq.s32.totalorder %s17, 0
    %p38 = por %p36, %p37
    %p39 = scmp.ne.s32.totalorder %s25, %s26
    %p40 = scmp.eq.s32.totalorder %s18, 1
    %p41 = por %p39, %p40
    %p43 = scmp.ne.s32.totalorder %s26, %s42
    %p44 = scmp.eq.s32.totalorder %s18, 0
    %p45 = por %p43, %p44
    %s46 = ssub.s32 %s12, %s19
    %p47 = scmp.eq.s32.totalorder %s46, 0
    %s49 = sadd.s32 %s48, 1
    %s50 = scalar_select %p47, %s48, %s49
    %p53 = pneg %p47
    %p54 = scmp.eq.s32.totalorder %s12, 1
    %p55 = por %p53, %p54
    %p56 = scmp.ne.s32.totalorder %s48, %s51
    %p57 = scmp.eq.s32.totalorder %s12, 0
    %p58 = por %p56, %p57
    %p59 = scmp.ne.s32.totalorder %s48, %s51
    %p60 = scmp.eq.s32.totalorder %s17, 1
    %p61 = por %p59, %p60
    %p62 = scmp.ne.s32.totalorder %s51, %s52
    %p63 = scmp.eq.s32.totalorder %s17, 0
    %p64 = por %p62, %p63
    %p65 = scmp.ne.s32.totalorder %s51, %s52
    %p66 = scmp.eq.s32.totalorder %s18, 1
    %p67 = por %p65, %p66
    %p69 = scmp.ne.s32.totalorder %s52, %s68
    %p70 = scmp.eq.s32.totalorder %s18, 0
    %p71 = por %p69, %p70
    %s72 = ssub.s32 %s12, %s19
    %p73 = scmp.eq.s32.totalorder %s72, 0
    %s75 = sadd.s32 %s74, 1
    %s76 = scalar_select %p73, %s74, %s75
    %p79 = pneg %p73
    %p80 = scmp.eq.s32.totalorder %s12, 1
    %p81 = por %p79, %p80
    %p82 = scmp.ne.s32.totalorder %s74, %s77
    %p83 = scmp.eq.s32.totalorder %s12, 0
    %p84 = por %p82, %p83
    %p85 = scmp.ne.s32.totalorder %s74, %s77
    %p86 = scmp.eq.s32.totalorder %s17, 1
    %p87 = por %p85, %p86
    %p88 = scmp.ne.s32.totalorder %s77, %s78
    %p89 = scmp.eq.s32.totalorder %s17, 0
    %p90 = por %p88, %p89
    %p91 = scmp.ne.s32.totalorder %s77, %s78
    %p92 = scmp.eq.s32.totalorder %s18, 1
    %p93 = por %p91, %p92
    %p95 = scmp.ne.s32.totalorder %s78, %s94
    %p96 = scmp.eq.s32.totalorder %s18, 0
    %p97 = por %p95, %p96
    %s98 = ssub.s32 %s12, %s19
    %p99 = scmp.eq.s32.totalorder %s98, 0
    %s101 = sadd.s32 %s100, 1
    %s102 = scalar_select %p99, %s100, %s101
    %p105 = pneg %p99
    %p106 = scmp.eq.s32.totalorder %s12, 1
    %p107 = por %p105, %p106
    %p108 = scmp.ne.s32.totalorder %s100, %s103
    %p109 = scmp.eq.s32.totalorder %s12, 0
    %p110 = por %p108, %p109
    %p111 = scmp.ne.s32.totalorder %s100, %s103
    %p112 = scmp.eq.s32.totalorder %s17, 1
    %p113 = por %p111, %p112
    %p114 = scmp.ne.s32.totalorder %s103, %s104
    %p115 = scmp.eq.s32.totalorder %s17, 0
    %p116 = por %p114, %p115
    %p117 = scmp.ne.s32.totalorder %s103, %s104
    %p118 = scmp.eq.s32.totalorder %s18, 1
    %p119 = por %p117, %p118
    %p121 = scmp.ne.s32.totalorder %s104, %s120
    %p122 = scmp.eq.s32.totalorder %s18, 0
    %p123 = por %p121, %p122
    %s125 = sadd.s32 %s124, 1
    %p128 = scmp.eq.s32.totalorder %s12, 1
    %p129 = scmp.ne.s32.totalorder %s124, %s126
    %p130 = scmp.eq.s32.totalorder %s12, 0
    %p131 = por %p129, %p130
    %p132 = scmp.ne.s32.totalorder %s124, %s126
    %p133 = scmp.eq.s32.totalorder %s17, 1
    %p134 = por %p132, %p133
    %p135 = scmp.ne.s32.totalorder %s126, %s127
    %p136 = scmp.eq.s32.totalorder %s17, 0
    %p137 = por %p135, %p136
    %p138 = scmp.ne.s32.totalorder %s126, %s127
    %p139 = scmp.eq.s32.totalorder %s18, 1
    %p140 = por %p138, %p139
    %p142 = scmp.ne.s32.totalorder %s127, %s141
    %p143 = scmp.eq.s32.totalorder %s18, 0
    %p144 = por %p142, %p143
    %s146 = sadd.s32 %s145, 1
    %p149 = scmp.eq.s32.totalorder %s12, 1
    %p150 = scmp.ne.s32.totalorder %s145, %s147
    %p151 = scmp.eq.s32.totalorder %s12, 0
    %p152 = por %p150, %p151
    %p153 = scmp.ne.s32.totalorder %s145, %s147
    %p154 = scmp.eq.s32.totalorder %s17, 1
    %p155 = por %p153, %p154
    %p156 = scmp.ne.s32.totalorder %s147, %s148
    %p157 = scmp.eq.s32.totalorder %s17, 0
    %p158 = por %p156, %p157
    %p159 = scmp.ne.s32.totalorder %s147, %s148
    %p160 = scmp.eq.s32.totalorder %s18, 1
    %p161 = por %p159, %p160
    %p163 = scmp.ne.s32.totalorder %s148, %s162
    %p164 = scmp.eq.s32.totalorder %s18, 0
    %p165 = por %p163, %p164
    %s166 = ssub.s32 %s12, %s19
    %p167 = scmp.eq.s32.totalorder %s166, 0
    %s169 = sadd.s32 %s168, 1
    %s170 = scalar_select %p167, %s168, %s169
    %p173 = pneg %p167
    %p174 = scmp.eq.s32.totalorder %s12, 1
    %p175 = por %p173, %p174
    %p176 = scmp.ne.s32.totalorder %s168, %s171
    %p177 = scmp.eq.s32.totalorder %s12, 0
    %p178 = por %p176, %p177
    %p179 = scmp.ne.s32.totalorder %s168, %s171
    %p180 = scmp.eq.s32.totalorder %s17, 1
    %p181 = por %p179, %p180
    %p182 = scmp.ne.s32.totalorder %s171, %s172
    %p183 = scmp.eq.s32.totalorder %s17, 0
    %p184 = por %p182, %p183
    %p185 = scmp.ne.s32.totalorder %s171, %s172
    %p186 = scmp.eq.s32.totalorder %s18, 1
    %p187 = por %p185, %p186
    %p189 = scmp.ne.s32.totalorder %s172, %s188
    %p190 = scmp.eq.s32.totalorder %s18, 0
    %p191 = por %p189, %p190
    %p192 = scmp.le.s32.totalorder 1, %s12
    %p193 = scmp.lt.s32.totalorder %s12, 3
    %p194 = pnand %p192, %p193
    %p195 = pneg %p194
    // Predicated region
    $region9: #{bloodstain_forward.4} parent=5 // pred_check
      _
    $region10: #{bloodstain_forward.4} parent=5 // pred_check_branch
      %197 = sbr.rel (%p194) target = $region12
    $region11: #{bloodstain_forward.4} parent=5 // pred_region
      %s198 = ssub.s32 %s12, 1
      // Predicated region
      $region13: #{bloodstain_forward.4} parent=11 // pred_check
        %p199 = pneg %p137
      $region14: #{bloodstain_forward.4} parent=11 // pred_check_branch
        %201 = sbr.rel (%p199) target = $region16
      $region15: #{bloodstain_forward.4} parent=11 // pred_region
        _
      $region16: #{bloodstain_forward.4} parent=11 // pred_fallthru
        _
      // Predicated region
      $region17: #{bloodstain_forward.4} parent=11 // pred_check
        %p202 = pneg %p158
      $region18: #{bloodstain_forward.4} parent=11 // pred_check_branch
        %204 = sbr.rel (%p202) target = $region20
      $region19: #{bloodstain_forward.4} parent=11 // pred_region
        _
      $region20: #{bloodstain_forward.4} parent=11 // pred_fallthru
        _
    $region12: #{bloodstain_forward.4} parent=5 // pred_fallthru
      _
    %p205 = scmp.lt.s32.totalorder %s12, 2
    // Predicated region
    $region21: #{bloodstain_forward.4} parent=5 // pred_check
      %p206 = pneg %p205
    $region22: #{bloodstain_forward.4} parent=5 // pred_check_branch
      %208 = sbr.rel (%p206) target = $region24
    $region23: #{bloodstain_forward.4} parent=5 // pred_region
      // Predicated region
      $region25: #{bloodstain_forward.4} parent=23 // pred_check
        %p209 = pneg %p32
      $region26: #{bloodstain_forward.4} parent=23 // pred_check_branch
        %211 = sbr.rel (%p209) target = $region28
      $region27: #{bloodstain_forward.4} parent=23 // pred_region
        %s212 = smul.u32 8, %s12
        %p213 = scmp.lt.s32.totalorder %s212, 15
        %s214 = scalar_select %p213, %s212, 15
        %s215 = smul.addr %s214, 5
        %s216 = smul.addr %s215, 8
        %s217 = scalar_lea.vmem %s0, %s216
        %s218 = smul.u32 8, %s12
      $region28: #{bloodstain_forward.4} parent=23 // pred_fallthru
        _
      // Predicated region
      $region29: #{bloodstain_forward.4} parent=23 // pred_check
        %p219 = pneg %p58
      $region30: #{bloodstain_forward.4} parent=23 // pred_check_branch
        %221 = sbr.rel (%p219) target = $region32
      $region31: #{bloodstain_forward.4} parent=23 // pred_region
        %s222 = smul.u32 8, %s12
        %p223 = scmp.lt.s32.totalorder %s222, 15
        %s224 = scalar_select %p223, %s222, 15
        %s225 = smul.addr %s224, 5
        %s226 = smul.addr %s225, 8
        %s227 = scalar_lea.vmem %s1, %s226
        %s228 = smul.u32 8, %s12
      $region32: #{bloodstain_forward.4} parent=23 // pred_fallthru
        _
      // Predicated region
      $region33: #{bloodstain_forward.4} parent=23 // pred_check
        %p229 = pneg %p84
      $region34: #{bloodstain_forward.4} parent=23 // pred_check_branch
        %231 = sbr.rel (%p229) target = $region36
      $region35: #{bloodstain_forward.4} parent=23 // pred_region
        %s232 = smul.u32 8, %s12
        %p233 = scmp.lt.s32.totalorder %s232, 15
        %s234 = scalar_select %p233, %s232, 15
        %s235 = smul.addr %s234, 5
        %s236 = smul.addr %s235, 8
        %s237 = scalar_lea.vmem %s2, %s236
        %s238 = smul.u32 8, %s12
      $region36: #{bloodstain_forward.4} parent=23 // pred_fallthru
        _
      // Predicated region
      $region37: #{bloodstain_forward.4} parent=23 // pred_check
        %p239 = pneg %p110
      $region38: #{bloodstain_forward.4} parent=23 // pred_check_branch
        %241 = sbr.rel (%p239) target = $region40
      $region39: #{bloodstain_forward.4} parent=23 // pred_region
        %s242 = smul.u32 8, %s12
        %p243 = scmp.lt.s32.totalorder %s242, 15
        %s244 = scalar_select %p243, %s242, 15
        %s245 = smul.addr %s244, 5
        %s246 = smul.addr %s245, 8
        %s247 = scalar_lea.vmem %s3, %s246
        %s248 = smul.u32 8, %s12
      $region40: #{bloodstain_forward.4} parent=23 // pred_fallthru
        _
    $region24: #{bloodstain_forward.4} parent=5 // pred_fallthru
      _
    %p249 = scmp.le.s32.totalorder 1, %s12
    %p250 = scmp.lt.s32.totalorder %s12, 3
    %p251 = pnand %p249, %p250
    %p252 = pneg %p251
    // Predicated region
    $region41: #{bloodstain_forward.4} parent=5 // pred_check
      _
    $region42: #{bloodstain_forward.4} parent=5 // pred_check_branch
      %254 = sbr.rel (%p251) target = $region44
    $region43: #{bloodstain_forward.4} parent=5 // pred_region
      %s255 = ssub.s32 %s12, 1
      %s256 = smul.u32 8, %s17
      %p257 = scmp.lt.s32.totalorder %s256, 15
      %s258 = scalar_select %p257, %s256, 15
      %s259 = smul.addr %s258, 5
      %s260 = smul.addr %s259, 8
      %s261 = scalar_lea.vmem %s0, %s260
      %p262 = pneg %p38
      %p263 = pneg %p35
      %s264 = smul.u32 8, %s17
      %p265 = scmp.lt.s32.totalorder %s264, 15
      %s266 = scalar_select %p265, %s264, 15
      %s267 = smul.addr %s266, 5
      %s268 = smul.addr %s267, 8
      %s269 = scalar_lea.vmem %s1, %s268
      %p270 = pneg %p64
      %p271 = pneg %p61
      %s272 = smul.u32 8, %s17
      %p273 = scmp.lt.s32.totalorder %s272, 15
      %s274 = scalar_select %p273, %s272, 15
      %s275 = smul.addr %s274, 5
      %s276 = smul.addr %s275, 8
      %s277 = scalar_lea.vmem %s2, %s276
      %p278 = pneg %p90
      %p279 = pneg %p87
      %s280 = smul.u32 8, %s17
      %p281 = scmp.lt.s32.totalorder %s280, 15
      %s282 = scalar_select %p281, %s280, 15
      %s283 = smul.addr %s282, 5
      %s284 = smul.addr %s283, 8
      %s285 = scalar_lea.vmem %s3, %s284
      %p286 = pneg %p116
      %p287 = pneg %p113
      %p288 = pneg %p137
      %p289 = pneg %p134
      %p290 = pneg %p158
      %p291 = pneg %p155
      %p292 = pneg %p184
      %p293 = pneg %p181
      %s294 = smul.u32 8, %s17
      %p295 = scmp.lt.s32.totalorder %s294, 15
      %s296 = scalar_select %p295, %s294, 15
      %s297 = smul.addr %s296, 8
      %s298 = scalar_lea.vmem %s6, %s297
      %s299 = smul.u32 8, %s17
      %p300 = scmp.lt.s32.totalorder %s299, 15
      %s301 = scalar_select %p300, %s299, 15
      %s302 = smul.addr %s301, 5
      %s303 = smul.addr %s302, 8
      %s304 = scalar_lea.vmem %s0, %s303
      %s305 = smul.u32 8, %s17
      %s306 = smul.u32 8, %s17
      %p307 = scmp.lt.s32.totalorder %s306, 15
      %s308 = scalar_select %p307, %s306, 15
      %s309 = smul.addr %s308, 5
      %s310 = smul.addr %s309, 8
      %s311 = scalar_lea.vmem %s1, %s310
      %s312 = smul.u32 8, %s17
      %s313 = smul.u32 8, %s17
      %p314 = scmp.lt.s32.totalorder %s313, 15
      %s315 = scalar_select %p314, %s313, 15
      %s316 = smul.addr %s315, 5
      %s317 = smul.addr %s316, 8
      %s318 = scalar_lea.vmem %s2, %s317
      %s319 = smul.u32 8, %s17
      %s320 = smul.u32 8, %s17
      %p321 = scmp.lt.s32.totalorder %s320, 15
      %s322 = scalar_select %p321, %s320, 15
      %s323 = smul.addr %s322, 5
      %s324 = smul.addr %s323, 8
      %s325 = scalar_lea.vmem %s3, %s324
      %s326 = smul.u32 8, %s17
      %s327 = smul.u32 8, %s17
      %p328 = scmp.lt.s32.totalorder %s327, 15
      %s329 = scalar_select %p328, %s327, 15
      %s330 = smul.addr %s329, 8
      %s331 = scalar_lea.vmem %s6, %s330
      %s332 = smul.u32 8, %s17
      %v333 = vld [vmem:[%s4] sm:$0xff]
      %v334 = vld [vmem:[%s4 + $0x8] sm:$0xff]
      %v335 = vld [vmem:[%s4 + $0x10] sm:$0xff]
      %v336 = vld [vmem:[%s4 + $0x18] sm:$0xff]
      %v337 = vld [vmem:[%s4 + $0x20] sm:$0xff]
      %v338 = vld [vmem:[%s4 + $0x28] sm:$0xff]
      %v339 = vld [vmem:[%s4 + $0x30] sm:$0xff]
      %v340 = vld [vmem:[%s4 + $0x38] sm:$0xff]
      %v341 = vld [vmem:[%s4 + $0x40] sm:$0xff]
      %v342 = vld [vmem:[%s4 + $0x48] sm:$0xff]
      %v343 = vld [vmem:[%s4 + $0x50] sm:$0xff]
      %v344 = vld [vmem:[%s4 + $0x58] sm:$0xff]
      %v345 = vld [vmem:[%s4 + $0x60] sm:$0xff]
      %v346 = vld [vmem:[%s4 + $0x68] sm:$0xff]
      %v347 = vld [vmem:[%s4 + $0x70] sm:$0xff]
      %v348 = vld [vmem:[%s4 + $0x78] sm:$0xff]
      %v349 = vld [vmem:[%s4 + $0x80] sm:$0xff]
      %v350 = vld [vmem:[%s4 + $0x88] sm:$0xff]
      %v351 = vld [vmem:[%s4 + $0x90] sm:$0xff]
      %v352 = vld [vmem:[%s4 + $0x98] sm:$0xff]
      %v353 = vld [vmem:[%s4 + $0xa0] sm:$0xff]
      %v354 = vld [vmem:[%s4 + $0xa8] sm:$0xff]
      %v355 = vld [vmem:[%s4 + $0xb0] sm:$0xff]
      %v356 = vld [vmem:[%s4 + $0xb8] sm:$0xff]
      %v357 = vld [vmem:[%s4 + $0xc0] sm:$0xff]
      %v358 = vld [vmem:[%s4 + $0xc8] sm:$0xff]
      %v359 = vld [vmem:[%s4 + $0xd0] sm:$0xff]
      %v360 = vld [vmem:[%s4 + $0xd8] sm:$0xff]
      %v361 = vld [vmem:[%s4 + $0xe0] sm:$0xff]
      %v362 = vld [vmem:[%s4 + $0xe8] sm:$0xff]
      %v363 = vld [vmem:[%s4 + $0xf0] sm:$0xff]
      %v364 = vld [vmem:[%s4 + $0xf8] sm:$0xff]
      %v365 = vld [vmem:[%s4 + $0x100] sm:$0xff]
      %v366 = vld [vmem:[%s4 + $0x108] sm:$0xff]
      %v367 = vld [vmem:[%s4 + $0x110] sm:$0xff]
      %v368 = vld [vmem:[%s4 + $0x118] sm:$0xff]
      %v369 = vld [vmem:[%s4 + $0x120] sm:$0xff]
      %v370 = vld [vmem:[%s4 + $0x128] sm:$0xff]
      %v371 = vld [vmem:[%s4 + $0x130] sm:$0xff]
      %v372 = vld [vmem:[%s4 + $0x138] sm:$0xff]
      %v373 = vld [vmem:[%s4 + $0x140] sm:$0xff]
      %v374 = vld [vmem:[%s4 + $0x148] sm:$0xff]
      %v375 = vld [vmem:[%s4 + $0x150] sm:$0xff]
      %v376 = vld [vmem:[%s4 + $0x158] sm:$0xff]
      %v377 = vld [vmem:[%s4 + $0x160] sm:$0xff]
      %v378 = vld [vmem:[%s4 + $0x168] sm:$0xff]
      %v379 = vld [vmem:[%s4 + $0x170] sm:$0xff]
      %v380 = vld [vmem:[%s4 + $0x178] sm:$0xff]
      %v381 = vld [vmem:[%s4 + $0x180] sm:$0xff]
      %v382 = vld [vmem:[%s4 + $0x188] sm:$0xff]
      %v383 = vld [vmem:[%s4 + $0x190] sm:$0xff]
      %v384 = vld [vmem:[%s4 + $0x198] sm:$0xff]
      %v385 = vld [vmem:[%s4 + $0x1a0] sm:$0xff]
      %v386 = vld [vmem:[%s4 + $0x1a8] sm:$0xff]
      %v387 = vld [vmem:[%s4 + $0x1b0] sm:$0xff]
      %v388 = vld [vmem:[%s4 + $0x1b8] sm:$0xff]
      %v389 = vld [vmem:[%s4 + $0x1c0] sm:$0xff]
      %v390 = vld [vmem:[%s4 + $0x1c8] sm:$0xff]
      %v391 = vld [vmem:[%s4 + $0x1d0] sm:$0xff]
      %v392 = vld [vmem:[%s4 + $0x1d8] sm:$0xff]
      %v393 = vld [vmem:[%s4 + $0x1e0] sm:$0xff]
      %v394 = vld [vmem:[%s4 + $0x1e8] sm:$0xff]
      %v395 = vld [vmem:[%s4 + $0x1f0] sm:$0xff]
      %v396 = vld [vmem:[%s4 + $0x1f8] sm:$0xff]
      %v397 = vld [vmem:[%s4 + $0x200] sm:$0xff]
      %v398 = vld [vmem:[%s4 + $0x208] sm:$0xff]
      %v399 = vld [vmem:[%s4 + $0x210] sm:$0xff]
      %v400 = vld [vmem:[%s4 + $0x218] sm:$0xff]
      %v401 = vld [vmem:[%s4 + $0x220] sm:$0xff]
      %v402 = vld [vmem:[%s4 + $0x228] sm:$0xff]
      %v403 = vld [vmem:[%s4 + $0x230] sm:$0xff]
      %v404 = vld [vmem:[%s4 + $0x238] sm:$0xff]
      %v405 = vld [vmem:[%s304] sm:$0xff]
      %v406 = vld [vmem:[%s304 + $0x8] sm:$0xff]
      %v407 = vld [vmem:[%s304 + $0x10] sm:$0xff]
      %v408 = vld [vmem:[%s304 + $0x18] sm:$0xff]
      %v409 = vld [vmem:[%s304 + $0x20] sm:$0xff]
      %v410 = vld [vmem:[%s304 + $0x28] sm:$0xff]
      %v411 = vld [vmem:[%s304 + $0x30] sm:$0xff]
      %v412 = vld [vmem:[%s304 + $0x38] sm:$0xff]
      %v413 = vld [vmem:[%s304 + $0x40] sm:$0xff]
      %v414 = vld [vmem:[%s304 + $0x48] sm:$0xff]
      %v415 = vld [vmem:[%s304 + $0x50] sm:$0xff]
      %v416 = vld [vmem:[%s304 + $0x58] sm:$0xff]
      %v417 = vld [vmem:[%s304 + $0x60] sm:$0xff]
      %v418 = vld [vmem:[%s304 + $0x68] sm:$0xff]
      %v419 = vld [vmem:[%s304 + $0x70] sm:$0xff]
      %v420 = vld [vmem:[%s304 + $0x78] sm:$0xff]
      %v421 = vld [vmem:[%s304 + $0x80] sm:$0xff]
      %v422 = vld [vmem:[%s304 + $0x88] sm:$0xff]
      %v423 = vld [vmem:[%s304 + $0x90] sm:$0xff]
      %v424 = vld [vmem:[%s304 + $0x98] sm:$0xff]
      %v425 = vld [vmem:[%s304 + $0xa0] sm:$0xff]
      %v426 = vld [vmem:[%s304 + $0xa8] sm:$0xff]
      %v427 = vld [vmem:[%s304 + $0xb0] sm:$0xff]
      %v428 = vld [vmem:[%s304 + $0xb8] sm:$0xff]
      %v429 = vld [vmem:[%s304 + $0xc0] sm:$0xff]
      %v430 = vld [vmem:[%s304 + $0xc8] sm:$0xff]
      %v431 = vld [vmem:[%s304 + $0xd0] sm:$0xff]
      %v432 = vld [vmem:[%s304 + $0xd8] sm:$0xff]
      %v433 = vld [vmem:[%s304 + $0xe0] sm:$0xff]
      %v434 = vld [vmem:[%s304 + $0xe8] sm:$0xff]
      %v435 = vld [vmem:[%s304 + $0xf0] sm:$0xff]
      %v436 = vld [vmem:[%s304 + $0xf8] sm:$0xff]
      %v437 = vld [vmem:[%s304 + $0x100] sm:$0xff]
      %v438 = vld [vmem:[%s304 + $0x108] sm:$0xff]
      %v439 = vld [vmem:[%s304 + $0x110] sm:$0xff]
      %v440 = vld [vmem:[%s304 + $0x118] sm:$0xff]
      %v441 = vld [vmem:[%s304 + $0x120] sm:$0xff]
      %v442 = vld [vmem:[%s304 + $0x128] sm:$0xff]
      %v443 = vld [vmem:[%s304 + $0x130] sm:$0xff]
      %v444 = vld [vmem:[%s304 + $0x138] sm:$0xff]
      %vm445 = vcmask 523264
      %v447 = vsel %vm445, %v409, 0
      %v450 = vsel %vm445, %v414, 0
      %v453 = vsel %vm445, %v419, 0
      %v456 = vsel %vm445, %v424, 0
      %v459 = vsel %vm445, %v429, 0
      %v462 = vsel %vm445, %v434, 0
      %v465 = vsel %vm445, %v439, 0
      %v468 = vsel %vm445, %v444, 0
      %470 = vmatprep.subr.mxu0 0.0
      %471 = vmatpush1.msra.mxu0 %v333
      %472 = vmatprep.subr.mxu0 0.0
      %473 = vmatpush1.msra.mxu0 %v334
      %474 = vmatprep.subr.mxu0 0.0
      %475 = vmatpush1.msra.mxu0 %v335
      %476 = vmatprep.subr.mxu0 0.0
      %477 = vmatpush1.msra.mxu0 %v336
      %478 = vmatprep.subr.mxu0 0.0
      %479 = vmatpush1.msra.mxu0 %v337
      %480 = vmatprep.subr.mxu0 0.0
      %481 = vmatpush1.msra.mxu0 %v338
      %482 = vmatprep.subr.mxu0 0.0
      %483 = vmatpush1.msra.mxu0 %v339
      %484 = vmatprep.subr.mxu0 0.0
      %485 = vmatpush1.msra.mxu0 %v340
      %486 = vmatprep.subr.mxu0 0.0
      %487 = vmatpush1.msra.mxu0 %v341
      %488 = vmatprep.subr.mxu0 0.0
      %489 = vmatpush1.msra.mxu0 %v342
      %490 = vmatprep.subr.mxu0 0.0
      %491 = vmatpush1.msra.mxu0 %v343
      %492 = vmatprep.subr.mxu0 0.0
      %493 = vmatpush1.msra.mxu0 %v344
      %494 = vmatprep.subr.mxu0 0.0
      %495 = vmatpush1.msra.mxu0 %v345
      %496 = vmatprep.subr.mxu0 0.0
      %497 = vmatpush1.msra.mxu0 %v346
      %498 = vmatprep.subr.mxu0 0.0
      %499 = vmatpush1.msra.mxu0 %v347
      %500 = vmatprep.subr.mxu0 0.0
      %501 = vmatpush1.msra.mxu0 %v348
      %502 = vmatprep.subr.mxu0 0.0
      %503 = vmatpush1.msra.mxu0 %v349
      %504 = vmatprep.subr.mxu0 0.0
      %505 = vmatpush1.msra.mxu0 %v350
      %506 = vmatprep.subr.mxu0 0.0
      %507 = vmatpush1.msra.mxu0 %v351
      %508 = vmatprep.subr.mxu0 0.0
      %509 = vmatpush1.msra.mxu0 %v352
      %510 = vmatprep.subr.mxu0 0.0
      %511 = vmatpush1.msra.mxu0 %v353
      %512 = vmatprep.subr.mxu0 0.0
      %513 = vmatpush1.msra.mxu0 %v354
      %514 = vmatprep.subr.mxu0 0.0
      %515 = vmatpush1.msra.mxu0 %v355
      %516 = vmatprep.subr.mxu0 0.0
      %517 = vmatpush1.msra.mxu0 %v356
      %518 = vmatprep.subr.mxu0 0.0
      %519 = vmatpush1.msra.mxu0 %v357
      %520 = vmatprep.subr.mxu0 0.0
      %521 = vmatpush1.msra.mxu0 %v358
      %522 = vmatprep.subr.mxu0 0.0
      %523 = vmatpush1.msra.mxu0 %v359
      %524 = vmatprep.subr.mxu0 0.0
      %525 = vmatpush1.msra.mxu0 %v360
      %526 = vmatprep.subr.mxu0 0.0
      %527 = vmatpush1.msra.mxu0 %v361
      %528 = vmatprep.subr.mxu0 0.0
      %529 = vmatpush1.msra.mxu0 %v362
      %530 = vmatprep.subr.mxu0 0.0
      %531 = vmatpush1.msra.mxu0 %v363
      %532 = vmatprep.subr.mxu0 0.0
      %533 = vmatpush1.msra.mxu0 %v364
      %534 = vmatprep.mubr.f32.mxu0 %v406
      %535 = vmatmul.mubr.f32.gmra.mrb[0].mxu0 %v405
      %v536 = vpop.f32.mrb[0].mxu0
      %v537 = vadd.f32 0.0, %v536
      %v538 = vpop.f32.mrb[0].mxu0
      %539 = vmatprep.mubr.f32.mxu0 %v411
      %540 = vmatmul.mubr.f32.gmra.mrb[0].mxu0 %v410
      %v541 = vpop.f32.mrb[0].mxu0
      %v542 = vadd.f32 0.0, %v541
      %v543 = vpop.f32.mrb[0].mxu0
      %544 = vmatprep.mubr.f32.mxu0 %v416
      %545 = vmatmul.mubr.f32.gmra.mrb[0].mxu0 %v415
      %v546 = vpop.f32.mrb[0].mxu0
      %v547 = vadd.f32 0.0, %v546
      %v548 = vpop.f32.mrb[0].mxu0
      %549 = vmatprep.mubr.f32.mxu0 %v421
      %550 = vmatmul.mubr.f32.gmra.mrb[0].mxu0 %v420
      %v551 = vpop.f32.mrb[0].mxu0
      %v552 = vadd.f32 0.0, %v551
      %v553 = vpop.f32.mrb[0].mxu0
      %554 = vmatprep.mubr.f32.mxu0 %v426
      %555 = vmatmul.mubr.f32.gmra.mrb[0].mxu0 %v425
      %v556 = vpop.f32.mrb[0].mxu0
      %v557 = vadd.f32 0.0, %v556
      %v558 = vpop.f32.mrb[0].mxu0
      %559 = vmatprep.mubr.f32.mxu0 %v431
      %560 = vmatmul.mubr.f32.gmra.mrb[0].mxu0 %v430
      %v561 = vpop.f32.mrb[0].mxu0
      %v562 = vadd.f32 0.0, %v561
      %v563 = vpop.f32.mrb[0].mxu0
      %564 = vmatprep.mubr.f32.mxu0 %v436
      %565 = vmatmul.mubr.f32.gmra.mrb[0].mxu0 %v435
      %v566 = vpop.f32.mrb[0].mxu0
      %v567 = vadd.f32 0.0, %v566
      %v568 = vpop.f32.mrb[0].mxu0
      %569 = vmatprep.mubr.f32.mxu0 %v441
      %570 = vmatmul.mubr.f32.gmra.mrb[0].mxu0 %v440
      %v571 = vpop.f32.mrb[0].mxu0
      %v572 = vadd.f32 0.0, %v571
      %v573 = vpop.f32.mrb[0].mxu0
      %574 = vdwg.mxu0
      %575 = vmatprep.subr.mxu0 0.0
      %576 = vmatpush1.msra.mxu0 %v365
      %577 = vmatprep.subr.mxu0 0.0
      %578 = vmatpush1.msra.mxu0 %v366
      %579 = vmatprep.subr.mxu0 0.0
      %580 = vmatpush1.msra.mxu0 %v367
      %581 = vmatprep.subr.mxu0 0.0
      %582 = vmatpush1.msra.mxu0 %v368
      %583 = vmatprep.subr.mxu0 0.0
      %584 = vmatpush1.msra.mxu0 %v369
      %585 = vmatprep.subr.mxu0 0.0
      %586 = vmatpush1.msra.mxu0 %v370
      %587 = vmatprep.subr.mxu0 0.0
      %588 = vmatpush1.msra.mxu0 %v371
      %589 = vmatprep.subr.mxu0 0.0
      %590 = vmatpush1.msra.mxu0 %v372
      %591 = vmatprep.subr.mxu0 0.0
      %592 = vmatpush1.msra.mxu0 %v373
      %593 = vmatprep.subr.mxu0 0.0
      %594 = vmatpush1.msra.mxu0 %v374
      %595 = vmatprep.subr.mxu0 0.0
      %596 = vmatpush1.msra.mxu0 %v375
      %597 = vmatprep.subr.mxu0 0.0
      %598 = vmatpush1.msra.mxu0 %v376
      %599 = vmatprep.subr.mxu0 0.0
      %600 = vmatpush1.msra.mxu0 %v377
      %601 = vmatprep.subr.mxu0 0.0
      %602 = vmatpush1.msra.mxu0 %v378
      %603 = vmatprep.subr.mxu0 0.0
      %604 = vmatpush1.msra.mxu0 %v379
      %605 = vmatprep.subr.mxu0 0.0
      %606 = vmatpush1.msra.mxu0 %v380
      %607 = vmatprep.subr.mxu0 0.0
      %608 = vmatpush1.msra.mxu0 %v381
      %609 = vmatprep.subr.mxu0 0.0
      %610 = vmatpush1.msra.mxu0 %v382
      %611 = vmatprep.subr.mxu0 0.0
      %612 = vmatpush1.msra.mxu0 %v383
      %613 = vmatprep.subr.mxu0 0.0
      %614 = vmatpush1.msra.mxu0 %v384
      %615 = vmatprep.subr.mxu0 0.0
      %616 = vmatpush1.msra.mxu0 %v385
      %617 = vmatprep.subr.mxu0 0.0
      %618 = vmatpush1.msra.mxu0 %v386
      %619 = vmatprep.subr.mxu0 0.0
      %620 = vmatpush1.msra.mxu0 %v387
      %621 = vmatprep.subr.mxu0 0.0
      %622 = vmatpush1.msra.mxu0 %v388
      %623 = vmatprep.subr.mxu0 0.0
      %624 = vmatpush1.msra.mxu0 %v389
      %625 = vmatprep.subr.mxu0 0.0
      %626 = vmatpush1.msra.mxu0 %v390
      %627 = vmatprep.subr.mxu0 0.0
      %628 = vmatpush1.msra.mxu0 %v391
      %629 = vmatprep.subr.mxu0 0.0
      %630 = vmatpush1.msra.mxu0 %v392
      %631 = vmatprep.subr.mxu0 0.0
      %632 = vmatpush1.msra.mxu0 %v393
      %633 = vmatprep.subr.mxu0 0.0
      %634 = vmatpush1.msra.mxu0 %v394
      %635 = vmatprep.subr.mxu0 0.0
      %636 = vmatpush1.msra.mxu0 %v395
      %637 = vmatprep.subr.mxu0 0.0
      %638 = vmatpush1.msra.mxu0 %v396
      %639 = vmatprep.mubr.f32.mxu0 %v408
      %640 = vmatmul.mubr.f32.gmra.mrb[0].mxu0 %v407
      %v641 = vpop.f32.mrb[0].mxu0
      %v642 = vadd.f32 %v537, %v641
      %v643 = vpop.f32.mrb[0].mxu0
      %644 = vmatprep.mubr.f32.mxu0 %v413
      %645 = vmatmul.mubr.f32.gmra.mrb[0].mxu0 %v412
      %v646 = vpop.f32.mrb[0].mxu0
      %v647 = vadd.f32 %v542, %v646
      %v648 = vpop.f32.mrb[0].mxu0
      %649 = vmatprep.mubr.f32.mxu0 %v418
      %650 = vmatmul.mubr.f32.gmra.mrb[0].mxu0 %v417
      %v651 = vpop.f32.mrb[0].mxu0
      %v652 = vadd.f32 %v547, %v651
      %v653 = vpop.f32.mrb[0].mxu0
      %654 = vmatprep.mubr.f32.mxu0 %v423
      %655 = vmatmul.mubr.f32.gmra.mrb[0].mxu0 %v422
      %v656 = vpop.f32.mrb[0].mxu0
      %v657 = vadd.f32 %v552, %v656
      %v658 = vpop.f32.mrb[0].mxu0
      %659 = vmatprep.mubr.f32.mxu0 %v428
      %660 = vmatmul.mubr.f32.gmra.mrb[0].mxu0 %v427
      %v661 = vpop.f32.mrb[0].mxu0
      %v662 = vadd.f32 %v557, %v661
      %v663 = vpop.f32.mrb[0].mxu0
      %664 = vmatprep.mubr.f32.mxu0 %v433
      %665 = vmatmul.mubr.f32.gmra.mrb[0].mxu0 %v432
      %v666 = vpop.f32.mrb[0].mxu0
      %v667 = vadd.f32 %v562, %v666
      %v668 = vpop.f32.mrb[0].mxu0
      %669 = vmatprep.mubr.f32.mxu0 %v438
      %670 = vmatmul.mubr.f32.gmra.mrb[0].mxu0 %v437
      %v671 = vpop.f32.mrb[0].mxu0
      %v672 = vadd.f32 %v567, %v671
      %v673 = vpop.f32.mrb[0].mxu0
      %674 = vmatprep.mubr.f32.mxu0 %v443
      %675 = vmatmul.mubr.f32.gmra.mrb[0].mxu0 %v442
      %v676 = vpop.f32.mrb[0].mxu0
      %v677 = vadd.f32 %v572, %v676
      %v678 = vpop.f32.mrb[0].mxu0
      %679 = vdwg.mxu0
      %680 = vmatprep.subr.mxu0 0.0
      %681 = vmatpush1.msra.mxu0 %v397
      %682 = vmatprep.subr.mxu0 0.0
      %683 = vmatpush1.msra.mxu0 %v398
      %684 = vmatprep.subr.mxu0 0.0
      %685 = vmatpush1.msra.mxu0 %v399
      %686 = vmatprep.subr.mxu0 0.0
      %687 = vmatpush1.msra.mxu0 %v400
      %688 = vmatprep.subr.mxu0 0.0
      %689 = vmatpush1.msra.mxu0 %v401
      %690 = vmatprep.subr.mxu0 0.0
      %691 = vmatpush1.msra.mxu0 %v402
      %692 = vmatprep.subr.mxu0 0.0
      %693 = vmatpush1.msra.mxu0 %v403
      %694 = vmatprep.subr.mxu0 0.0
      %695 = vmatpush1.msra.mxu0 %v404
      %696 = vmatprep.subr.mxu0 0.0
      %697 = vmatpush1.msra.mxu0 0.0
      %698 = vmatprep.subr.mxu0 0.0
      %699 = vmatpush1.msra.mxu0 0.0
      %700 = vmatprep.subr.mxu0 0.0
      %701 = vmatpush1.msra.mxu0 0.0
      %702 = vmatprep.subr.mxu0 0.0
      %703 = vmatpush1.msra.mxu0 0.0
      %704 = vmatprep.subr.mxu0 0.0
      %705 = vmatpush1.msra.mxu0 0.0
      %706 = vmatprep.subr.mxu0 0.0
      %707 = vmatpush1.msra.mxu0 0.0
      %708 = vmatprep.subr.mxu0 0.0
      %709 = vmatpush1.msra.mxu0 0.0
      %710 = vmatprep.subr.mxu0 0.0
      %711 = vmatpush1.msra.mxu0 0.0
      %712 = vmatprep.subr.mxu0 0.0
      %713 = vmatpush1.msra.mxu0 0.0
      %714 = vmatprep.subr.mxu0 0.0
      %715 = vmatpush1.msra.mxu0 0.0
      %716 = vmatprep.subr.mxu0 0.0
      %717 = vmatpush1.msra.mxu0 0.0
      %718 = vmatprep.subr.mxu0 0.0
      %719 = vmatpush1.msra.mxu0 0.0
      %720 = vmatprep.subr.mxu0 0.0
      %721 = vmatpush1.msra.mxu0 0.0
      %722 = vmatprep.subr.mxu0 0.0
      %723 = vmatpush1.msra.mxu0 0.0
      %724 = vmatprep.subr.mxu0 0.0
      %725 = vmatpush1.msra.mxu0 0.0
      %726 = vmatprep.subr.mxu0 0.0
      %727 = vmatpush1.msra.mxu0 0.0
      %728 = vmatprep.subr.mxu0 0.0
      %729 = vmatpush1.msra.mxu0 0.0
      %730 = vmatprep.subr.mxu0 0.0
      %731 = vmatpush1.msra.mxu0 0.0
      %732 = vmatprep.subr.mxu0 0.0
      %733 = vmatpush1.msra.mxu0 0.0
      %734 = vmatprep.subr.mxu0 0.0
      %735 = vmatpush1.msra.mxu0 0.0
      %736 = vmatprep.subr.mxu0 0.0
      %737 = vmatpush1.msra.mxu0 0.0
      %738 = vmatprep.subr.mxu0 0.0
      %739 = vmatpush1.msra.mxu0 0.0
      %740 = vmatprep.subr.mxu0 0.0
      %741 = vmatpush1.msra.mxu0 0.0
      %742 = vmatprep.subr.mxu0 0.0
      %743 = vmatpush1.msra.mxu0 0.0
      %744 = vmatprep.mubr.f32.mxu0 0.0
      %745 = vmatmul.mubr.f32.gmra.mrb[0].mxu0 %v447
      %v746 = vpop.f32.mrb[0].mxu0
      %v747 = vadd.f32 %v642, %v746
      %v748 = vpop.f32.mrb[0].mxu0
      %749 = vmatprep.mubr.f32.mxu0 0.0
      %750 = vmatmul.mubr.f32.gmra.mrb[0].mxu0 %v450
      %v751 = vpop.f32.mrb[0].mxu0
      %v752 = vadd.f32 %v647, %v751
      %v753 = vpop.f32.mrb[0].mxu0
      %754 = vmatprep.mubr.f32.mxu0 0.0
      %755 = vmatmul.mubr.f32.gmra.mrb[0].mxu0 %v453
      %v756 = vpop.f32.mrb[0].mxu0
      %v757 = vadd.f32 %v652, %v756
      %v758 = vpop.f32.mrb[0].mxu0
      %759 = vmatprep.mubr.f32.mxu0 0.0
      %760 = vmatmul.mubr.f32.gmra.mrb[0].mxu0 %v456
      %v761 = vpop.f32.mrb[0].mxu0
      %v762 = vadd.f32 %v657, %v761
      %v763 = vpop.f32.mrb[0].mxu0
      %764 = vmatprep.mubr.f32.mxu0 0.0
      %765 = vmatmul.mubr.f32.gmra.mrb[0].mxu0 %v459
      %v766 = vpop.f32.mrb[0].mxu0
      %v767 = vadd.f32 %v662, %v766
      %v768 = vpop.f32.mrb[0].mxu0
      %769 = vmatprep.mubr.f32.mxu0 0.0
      %770 = vmatmul.mubr.f32.gmra.mrb[0].mxu0 %v462
      %v771 = vpop.f32.mrb[0].mxu0
      %v772 = vadd.f32 %v667, %v771
      %v773 = vpop.f32.mrb[0].mxu0
      %774 = vmatprep.mubr.f32.mxu0 0.0
      %775 = vmatmul.mubr.f32.gmra.mrb[0].mxu0 %v465
      %v776 = vpop.f32.mrb[0].mxu0
      %v777 = vadd.f32 %v672, %v776
      %v778 = vpop.f32.mrb[0].mxu0
      %779 = vmatprep.mubr.f32.mxu0 0.0
      %780 = vmatmul.mubr.f32.gmra.mrb[0].mxu0 %v468
      %v781 = vpop.f32.mrb[0].mxu0
      %v782 = vadd.f32 %v677, %v781
      %v783 = vpop.f32.mrb[0].mxu0
      %784 = vdwg.mxu0
      %v785 = vld [vmem:[%s311] sm:$0xff]
      %v786 = vld [vmem:[%s311 + $0x8] sm:$0xff]
      %v787 = vld [vmem:[%s311 + $0x10] sm:$0xff]
      %v788 = vld [vmem:[%s311 + $0x18] sm:$0xff]
      %v789 = vld [vmem:[%s311 + $0x20] sm:$0xff]
      %v790 = vld [vmem:[%s311 + $0x28] sm:$0xff]
      %v791 = vld [vmem:[%s311 + $0x30] sm:$0xff]
      %v792 = vld [vmem:[%s311 + $0x38] sm:$0xff]
      %v793 = vld [vmem:[%s311 + $0x40] sm:$0xff]
      %v794 = vld [vmem:[%s311 + $0x48] sm:$0xff]
      %v795 = vld [vmem:[%s311 + $0x50] sm:$0xff]
      %v796 = vld [vmem:[%s311 + $0x58] sm:$0xff]
      %v797 = vld [vmem:[%s311 + $0x60] sm:$0xff]
      %v798 = vld [vmem:[%s311 + $0x68] sm:$0xff]
      %v799 = vld [vmem:[%s311 + $0x70] sm:$0xff]
      %v800 = vld [vmem:[%s311 + $0x78] sm:$0xff]
      %v801 = vld [vmem:[%s311 + $0x80] sm:$0xff]
      %v802 = vld [vmem:[%s311 + $0x88] sm:$0xff]
      %v803 = vld [vmem:[%s311 + $0x90] sm:$0xff]
      %v804 = vld [vmem:[%s311 + $0x98] sm:$0xff]
      %v805 = vld [vmem:[%s311 + $0xa0] sm:$0xff]
      %v806 = vld [vmem:[%s311 + $0xa8] sm:$0xff]
      %v807 = vld [vmem:[%s311 + $0xb0] sm:$0xff]
      %v808 = vld [vmem:[%s311 + $0xb8] sm:$0xff]
      %v809 = vld [vmem:[%s311 + $0xc0] sm:$0xff]
      %v810 = vld [vmem:[%s311 + $0xc8] sm:$0xff]
      %v811 = vld [vmem:[%s311 + $0xd0] sm:$0xff]
      %v812 = vld [vmem:[%s311 + $0xd8] sm:$0xff]
      %v813 = vld [vmem:[%s311 + $0xe0] sm:$0xff]
      %v814 = vld [vmem:[%s311 + $0xe8] sm:$0xff]
      %v815 = vld [vmem:[%s311 + $0xf0] sm:$0xff]
      %v816 = vld [vmem:[%s311 + $0xf8] sm:$0xff]
      %v817 = vld [vmem:[%s311 + $0x100] sm:$0xff]
      %v818 = vld [vmem:[%s311 + $0x108] sm:$0xff]
      %v819 = vld [vmem:[%s311 + $0x110] sm:$0xff]
      %v820 = vld [vmem:[%s311 + $0x118] sm:$0xff]
      %v821 = vld [vmem:[%s311 + $0x120] sm:$0xff]
      %v822 = vld [vmem:[%s311 + $0x128] sm:$0xff]
      %v823 = vld [vmem:[%s311 + $0x130] sm:$0xff]
      %v824 = vld [vmem:[%s311 + $0x138] sm:$0xff]
      %v826 = vsel %vm445, %v789, 0
      %v829 = vsel %vm445, %v794, 0
      %v832 = vsel %vm445, %v799, 0
      %v835 = vsel %vm445, %v804, 0
      %v838 = vsel %vm445, %v809, 0
      %v841 = vsel %vm445, %v814, 0
      %v844 = vsel %vm445, %v819, 0
      %v847 = vsel %vm445, %v824, 0
      %849 = vmatprep.subr.mxu0 0.0
      %850 = vmatpush1.msra.mxu0 %v333
      %851 = vmatprep.subr.mxu0 0.0
      %852 = vmatpush1.msra.mxu0 %v334
      %853 = vmatprep.subr.mxu0 0.0
      %854 = vmatpush1.msra.mxu0 %v335
      %855 = vmatprep.subr.mxu0 0.0
      %856 = vmatpush1.msra.mxu0 %v336
      %857 = vmatprep.subr.mxu0 0.0
      %858 = vmatpush1.msra.mxu0 %v337
      %859 = vmatprep.subr.mxu0 0.0
      %860 = vmatpush1.msra.mxu0 %v338
      %861 = vmatprep.subr.mxu0 0.0
      %862 = vmatpush1.msra.mxu0 %v339
      %863 = vmatprep.subr.mxu0 0.0
      %864 = vmatpush1.msra.mxu0 %v340
      %865 = vmatprep.subr.mxu0 0.0
      %866 = vmatpush1.msra.mxu0 %v341
      %867 = vmatprep.subr.mxu0 0.0
      %868 = vmatpush1.msra.mxu0 %v342
      %869 = vmatprep.subr.mxu0 0.0
      %870 = vmatpush1.msra.mxu0 %v343
      %871 = vmatprep.subr.mxu0 0.0
      %872 = vmatpush1.msra.mxu0 %v344
      %873 = vmatprep.subr.mxu0 0.0
      %874 = vmatpush1.msra.mxu0 %v345
      %875 = vmatprep.subr.mxu0 0.0
      %876 = vmatpush1.msra.mxu0 %v346
      %877 = vmatprep.subr.mxu0 0.0
      %878 = vmatpush1.msra.mxu0 %v347
      %879 = vmatprep.subr.mxu0 0.0
      %880 = vmatpush1.msra.mxu0 %v348
      %881 = vmatprep.subr.mxu0 0.0
      %882 = vmatpush1.msra.mxu0 %v349
      %883 = vmatprep.subr.mxu0 0.0
      %884 = vmatpush1.msra.mxu0 %v350
      %885 = vmatprep.subr.mxu0 0.0
      %886 = vmatpush1.msra.mxu0 %v351
      %887 = vmatprep.subr.mxu0 0.0
      %888 = vmatpush1.msra.mxu0 %v352
      %889 = vmatprep.subr.mxu0 0.0
      %890 = vmatpush1.msra.mxu0 %v353
      %891 = vmatprep.subr.mxu0 0.0
      %892 = vmatpush1.msra.mxu0 %v354
      %893 = vmatprep.subr.mxu0 0.0
      %894 = vmatpush1.msra.mxu0 %v355
      %895 = vmatprep.subr.mxu0 0.0
      %896 = vmatpush1.msra.mxu0 %v356
      %897 = vmatprep.subr.mxu0 0.0
      %898 = vmatpush1.msra.mxu0 %v357
      %899 = vmatprep.subr.mxu0 0.0
      %900 = vmatpush1.msra.mxu0 %v358
      %901 = vmatprep.subr.mxu0 0.0
      %902 = vmatpush1.msra.mxu0 %v359
      %903 = vmatprep.subr.mxu0 0.0
      %904 = vmatpush1.msra.mxu0 %v360
      %905 = vmatprep.subr.mxu0 0.0
      %906 = vmatpush1.msra.mxu0 %v361
      %907 = vmatprep.subr.mxu0 0.0
      %908 = vmatpush1.msra.mxu0 %v362
      %909 = vmatprep.subr.mxu0 0.0
      %910 = vmatpush1.msra.mxu0 %v363
      %911 = vmatprep.subr.mxu0 0.0
      %912 = vmatpush1.msra.mxu0 %v364
      %913 = vmatprep.mubr.f32.mxu0 %v786
      %914 = vmatmul.mubr.f32.gmra.mrb[0].mxu0 %v785
      %v915 = vpop.f32.mrb[0].mxu0
      %v916 = vadd.f32 0.0, %v915
      %v917 = vpop.f32.mrb[0].mxu0
      %918 = vmatprep.mubr.f32.mxu0 %v791
      %919 = vmatmul.mubr.f32.gmra.mrb[0].mxu0 %v790
      %v920 = vpop.f32.mrb[0].mxu0
      %v921 = vadd.f32 0.0, %v920
      %v922 = vpop.f32.mrb[0].mxu0
      %923 = vmatprep.mubr.f32.mxu0 %v796
      %924 = vmatmul.mubr.f32.gmra.mrb[0].mxu0 %v795
      %v925 = vpop.f32.mrb[0].mxu0
      %v926 = vadd.f32 0.0, %v925
      %v927 = vpop.f32.mrb[0].mxu0
      %928 = vmatprep.mubr.f32.mxu0 %v801
      %929 = vmatmul.mubr.f32.gmra.mrb[0].mxu0 %v800
      %v930 = vpop.f32.mrb[0].mxu0
      %v931 = vadd.f32 0.0, %v930
      %v932 = vpop.f32.mrb[0].mxu0
      %933 = vmatprep.mubr.f32.mxu0 %v806
      %934 = vmatmul.mubr.f32.gmra.mrb[0].mxu0 %v805
      %v935 = vpop.f32.mrb[0].mxu0
      %v936 = vadd.f32 0.0, %v935
      %v937 = vpop.f32.mrb[0].mxu0
      %938 = vmatprep.mubr.f32.mxu0 %v811
      %939 = vmatmul.mubr.f32.gmra.mrb[0].mxu0 %v810
      %v940 = vpop.f32.mrb[0].mxu0
      %v941 = vadd.f32 0.0, %v940
      %v942 = vpop.f32.mrb[0].mxu0
      %943 = vmatprep.mubr.f32.mxu0 %v816
      %944 = vmatmul.mubr.f32.gmra.mrb[0].mxu0 %v815
      %v945 = vpop.f32.mrb[0].mxu0
      %v946 = vadd.f32 0.0, %v945
      %v947 = vpop.f32.mrb[0].mxu0
      %948 = vmatprep.mubr.f32.mxu0 %v821
      %949 = vmatmul.mubr.f32.gmra.mrb[0].mxu0 %v820
      %v950 = vpop.f32.mrb[0].mxu0
      %v951 = vadd.f32 0.0, %v950
      %v952 = vpop.f32.mrb[0].mxu0
      %953 = vdwg.mxu0
      %954 = vmatprep.subr.mxu0 0.0
      %955 = vmatpush1.msra.mxu0 %v365
      %956 = vmatprep.subr.mxu0 0.0
      %957 = vmatpush1.msra.mxu0 %v366
      %958 = vmatprep.subr.mxu0 0.0
      %959 = vmatpush1.msra.mxu0 %v367
      %960 = vmatprep.subr.mxu0 0.0
      %961 = vmatpush1.msra.mxu0 %v368
      %962 = vmatprep.subr.mxu0 0.0
      %963 = vmatpush1.msra.mxu0 %v369
      %964 = vmatprep.subr.mxu0 0.0
      %965 = vmatpush1.msra.mxu0 %v370
      %966 = vmatprep.subr.mxu0 0.0
      %967 = vmatpush1.msra.mxu0 %v371
      %968 = vmatprep.subr.mxu0 0.0
      %969 = vmatpush1.msra.mxu0 %v372
      %970 = vmatprep.subr.mxu0 0.0
      %971 = vmatpush1.msra.mxu0 %v373
      %972 = vmatprep.subr.mxu0 0.0
      %973 = vmatpush1.msra.mxu0 %v374
      %974 = vmatprep.subr.mxu0 0.0
      %975 = vmatpush1.msra.mxu0 %v375
      %976 = vmatprep.subr.mxu0 0.0
      %977 = vmatpush1.msra.mxu0 %v376
      %978 = vmatprep.subr.mxu0 0.0
      %979 = vmatpush1.msra.mxu0 %v377
      %980 = vmatprep.subr.mxu0 0.0
      %981 = vmatpush1.msra.mxu0 %v378
      %982 = vmatprep.subr.mxu0 0.0
      %983 = vmatpush1.msra.mxu0 %v379
      %984 = vmatprep.subr.mxu0 0.0
      %985 = vmatpush1.msra.mxu0 %v380
      %986 = vmatprep.subr.mxu0 0.0
      %987 = vmatpush1.msra.mxu0 %v381
      %988 = vmatprep.subr.mxu0 0.0
      %989 = vmatpush1.msra.mxu0 %v382
      %990 = vmatprep.subr.mxu0 0.0
      %991 = vmatpush1.msra.mxu0 %v383
      %992 = vmatprep.subr.mxu0 0.0
      %993 = vmatpush1.msra.mxu0 %v384
      %994 = vmatprep.subr.mxu0 0.0
      %995 = vmatpush1.msra.mxu0 %v385
      %996 = vmatprep.subr.mxu0 0.0
      %997 = vmatpush1.msra.mxu0 %v386
      %998 = vmatprep.subr.mxu0 0.0
      %999 = vmatpush1.msra.mxu0 %v387
      %1000 = vmatprep.subr.mxu0 0.0
      %1001 = vmatpush1.msra.mxu0 %v388
      %1002 = vmatprep.subr.mxu0 0.0
      %1003 = vmatpush1.msra.mxu0 %v389
      %1004 = vmatprep.subr.mxu0 0.0
      %1005 = vmatpush1.msra.mxu0 %v390
      %1006 = vmatprep.subr.mxu0 0.0
      %1007 = vmatpush1.msra.mxu0 %v391
      %1008 = vmatprep.subr.mxu0 0.0
      %1009 = vmatpush1.msra.mxu0 %v392
      %1010 = vmatprep.subr.mxu0 0.0
      %1011 = vmatpush1.msra.mxu0 %v393
      %1012 = vmatprep.subr.mxu0 0.0
      %1013 = vmatpush1.msra.mxu0 %v394
      %1014 = vmatprep.subr.mxu0 0.0
      %1015 = vmatpush1.msra.mxu0 %v395
      %1016 = vmatprep.subr.mxu0 0.0
      %1017 = vmatpush1.msra.mxu0 %v396
      %1018 = vmatprep.mubr.f32.mxu0 %v788
      %1019 = vmatmul.mubr.f32.gmra.mrb[0].mxu0 %v787
      %v1020 = vpop.f32.mrb[0].mxu0
      %v1021 = vadd.f32 %v916, %v1020
      %v1022 = vpop.f32.mrb[0].mxu0
      %1023 = vmatprep.mubr.f32.mxu0 %v793
      %1024 = vmatmul.mubr.f32.gmra.mrb[0].mxu0 %v792
      %v1025 = vpop.f32.mrb[0].mxu0
      %v1026 = vadd.f32 %v921, %v1025
      %v1027 = vpop.f32.mrb[0].mxu0
      %1028 = vmatprep.mubr.f32.mxu0 %v798
      %1029 = vmatmul.mubr.f32.gmra.mrb[0].mxu0 %v797
      %v1030 = vpop.f32.mrb[0].mxu0
      %v1031 = vadd.f32 %v926, %v1030
      %v1032 = vpop.f32.mrb[0].mxu0
      %1033 = vmatprep.mubr.f32.mxu0 %v803
      %1034 = vmatmul.mubr.f32.gmra.mrb[0].mxu0 %v802
      %v1035 = vpop.f32.mrb[0].mxu0
      %v1036 = vadd.f32 %v931, %v1035
      %v1037 = vpop.f32.mrb[0].mxu0
      %1038 = vmatprep.mubr.f32.mxu0 %v808
      %1039 = vmatmul.mubr.f32.gmra.mrb[0].mxu0 %v807
      %v1040 = vpop.f32.mrb[0].mxu0
      %v1041 = vadd.f32 %v936, %v1040
      %v1042 = vpop.f32.mrb[0].mxu0
      %1043 = vmatprep.mubr.f32.mxu0 %v813
      %1044 = vmatmul.mubr.f32.gmra.mrb[0].mxu0 %v812
      %v1045 = vpop.f32.mrb[0].mxu0
      %v1046 = vadd.f32 %v941, %v1045
      %v1047 = vpop.f32.mrb[0].mxu0
      %1048 = vmatprep.mubr.f32.mxu0 %v818
      %1049 = vmatmul.mubr.f32.gmra.mrb[0].mxu0 %v817
      %v1050 = vpop.f32.mrb[0].mxu0
      %v1051 = vadd.f32 %v946, %v1050
      %v1052 = vpop.f32.mrb[0].mxu0
      %1053 = vmatprep.mubr.f32.mxu0 %v823
      %1054 = vmatmul.mubr.f32.gmra.mrb[0].mxu0 %v822
      %v1055 = vpop.f32.mrb[0].mxu0
      %v1056 = vadd.f32 %v951, %v1055
      %v1057 = vpop.f32.mrb[0].mxu0
      %1058 = vdwg.mxu0
      %1059 = vmatprep.subr.mxu0 0.0
      %1060 = vmatpush1.msra.mxu0 %v397
      %1061 = vmatprep.subr.mxu0 0.0
      %1062 = vmatpush1.msra.mxu0 %v398
      %1063 = vmatprep.subr.mxu0 0.0
      %1064 = vmatpush1.msra.mxu0 %v399
      %1065 = vmatprep.subr.mxu0 0.0
      %1066 = vmatpush1.msra.mxu0 %v400
      %1067 = vmatprep.subr.mxu0 0.0
      %1068 = vmatpush1.msra.mxu0 %v401
      %1069 = vmatprep.subr.mxu0 0.0
      %1070 = vmatpush1.msra.mxu0 %v402
      %1071 = vmatprep.subr.mxu0 0.0
      %1072 = vmatpush1.msra.mxu0 %v403
      %1073 = vmatprep.subr.mxu0 0.0
      %1074 = vmatpush1.msra.mxu0 %v404
      %1075 = vmatprep.subr.mxu0 0.0
      %1076 = vmatpush1.msra.mxu0 0.0
      %1077 = vmatprep.subr.mxu0 0.0
      %1078 = vmatpush1.msra.mxu0 0.0
      %1079 = vmatprep.subr.mxu0 0.0
      %1080 = vmatpush1.msra.mxu0 0.0
      %1081 = vmatprep.subr.mxu0 0.0
      %1082 = vmatpush1.msra.mxu0 0.0
      %1083 = vmatprep.subr.mxu0 0.0
      %1084 = vmatpush1.msra.mxu0 0.0
      %1085 = vmatprep.subr.mxu0 0.0
      %1086 = vmatpush1.msra.mxu0 0.0
      %1087 = vmatprep.subr.mxu0 0.0
      %1088 = vmatpush1.msra.mxu0 0.0
      %1089 = vmatprep.subr.mxu0 0.0
      %1090 = vmatpush1.msra.mxu0 0.0
      %1091 = vmatprep.subr.mxu0 0.0
      %1092 = vmatpush1.msra.mxu0 0.0
      %1093 = vmatprep.subr.mxu0 0.0
      %1094 = vmatpush1.msra.mxu0 0.0
      %1095 = vmatprep.subr.mxu0 0.0
      %1096 = vmatpush1.msra.mxu0 0.0
      %1097 = vmatprep.subr.mxu0 0.0
      %1098 = vmatpush1.msra.mxu0 0.0
      %1099 = vmatprep.subr.mxu0 0.0
      %1100 = vmatpush1.msra.mxu0 0.0
      %1101 = vmatprep.subr.mxu0 0.0
      %1102 = vmatpush1.msra.mxu0 0.0
      %1103 = vmatprep.subr.mxu0 0.0
      %1104 = vmatpush1.msra.mxu0 0.0
      %1105 = vmatprep.subr.mxu0 0.0
      %1106 = vmatpush1.msra.mxu0 0.0
      %1107 = vmatprep.subr.mxu0 0.0
      %1108 = vmatpush1.msra.mxu0 0.0
      %1109 = vmatprep.subr.mxu0 0.0
      %1110 = vmatpush1.msra.mxu0 0.0
      %1111 = vmatprep.subr.mxu0 0.0
      %1112 = vmatpush1.msra.mxu0 0.0
      %1113 = vmatprep.subr.mxu0 0.0
      %1114 = vmatpush1.msra.mxu0 0.0
      %1115 = vmatprep.subr.mxu0 0.0
      %1116 = vmatpush1.msra.mxu0 0.0
      %1117 = vmatprep.subr.mxu0 0.0
      %1118 = vmatpush1.msra.mxu0 0.0
      %1119 = vmatprep.subr.mxu0 0.0
      %1120 = vmatpush1.msra.mxu0 0.0
      %1121 = vmatprep.subr.mxu0 0.0
      %1122 = vmatpush1.msra.mxu0 0.0
      %1123 = vmatprep.mubr.f32.mxu0 0.0
      %1124 = vmatmul.mubr.f32.gmra.mrb[0].mxu0 %v826
      %v1125 = vpop.f32.mrb[0].mxu0
      %v1126 = vadd.f32 %v1021, %v1125
      %v1127 = vpop.f32.mrb[0].mxu0
      %1128 = vmatprep.mubr.f32.mxu0 0.0
      %1129 = vmatmul.mubr.f32.gmra.mrb[0].mxu0 %v829
      %v1130 = vpop.f32.mrb[0].mxu0
      %v1131 = vadd.f32 %v1026, %v1130
      %v1132 = vpop.f32.mrb[0].mxu0
      %1133 = vmatprep.mubr.f32.mxu0 0.0
      %1134 = vmatmul.mubr.f32.gmra.mrb[0].mxu0 %v832
      %v1135 = vpop.f32.mrb[0].mxu0
      %v1136 = vadd.f32 %v1031, %v1135
      %v1137 = vpop.f32.mrb[0].mxu0
      %1138 = vmatprep.mubr.f32.mxu0 0.0
      %1139 = vmatmul.mubr.f32.gmra.mrb[0].mxu0 %v835
      %v1140 = vpop.f32.mrb[0].mxu0
      %v1141 = vadd.f32 %v1036, %v1140
      %v1142 = vpop.f32.mrb[0].mxu0
      %1143 = vmatprep.mubr.f32.mxu0 0.0
      %1144 = vmatmul.mubr.f32.gmra.mrb[0].mxu0 %v838
      %v1145 = vpop.f32.mrb[0].mxu0
      %v1146 = vadd.f32 %v1041, %v1145
      %v1147 = vpop.f32.mrb[0].mxu0
      %1148 = vmatprep.mubr.f32.mxu0 0.0
      %1149 = vmatmul.mubr.f32.gmra.mrb[0].mxu0 %v841
      %v1150 = vpop.f32.mrb[0].mxu0
      %v1151 = vadd.f32 %v1046, %v1150
      %v1152 = vpop.f32.mrb[0].mxu0
      %1153 = vmatprep.mubr.f32.mxu0 0.0
      %1154 = vmatmul.mubr.f32.gmra.mrb[0].mxu0 %v844
      %v1155 = vpop.f32.mrb[0].mxu0
      %v1156 = vadd.f32 %v1051, %v1155
      %v1157 = vpop.f32.mrb[0].mxu0
      %1158 = vmatprep.mubr.f32.mxu0 0.0
      %1159 = vmatmul.mubr.f32.gmra.mrb[0].mxu0 %v847
      %v1160 = vpop.f32.mrb[0].mxu0
      %v1161 = vadd.f32 %v1056, %v1160
      %v1162 = vpop.f32.mrb[0].mxu0
      %1163 = vdwg.mxu0
      %v1164 = vld [vmem:[%s318] sm:$0xff]
      %v1165 = vld [vmem:[%s318 + $0x8] sm:$0xff]
      %v1166 = vld [vmem:[%s318 + $0x10] sm:$0xff]
      %v1167 = vld [vmem:[%s318 + $0x18] sm:$0xff]
      %v1168 = vld [vmem:[%s318 + $0x20] sm:$0xff]
      %v1169 = vld [vmem:[%s318 + $0x28] sm:$0xff]
      %v1170 = vld [vmem:[%s318 + $0x30] sm:$0xff]
      %v1171 = vld [vmem:[%s318 + $0x38] sm:$0xff]
      %v1172 = vld [vmem:[%s318 + $0x40] sm:$0xff]
      %v1173 = vld [vmem:[%s318 + $0x48] sm:$0xff]
      %v1174 = vld [vmem:[%s318 + $0x50] sm:$0xff]
      %v1175 = vld [vmem:[%s318 + $0x58] sm:$0xff]
      %v1176 = vld [vmem:[%s318 + $0x60] sm:$0xff]
      %v1177 = vld [vmem:[%s318 + $0x68] sm:$0xff]
      %v1178 = vld [vmem:[%s318 + $0x70] sm:$0xff]
      %v1179 = vld [vmem:[%s318 + $0x78] sm:$0xff]
      %v1180 = vld [vmem:[%s318 + $0x80] sm:$0xff]
      %v1181 = vld [vmem:[%s318 + $0x88] sm:$0xff]
      %v1182 = vld [vmem:[%s318 + $0x90] sm:$0xff]
      %v1183 = vld [vmem:[%s318 + $0x98] sm:$0xff]
      %v1184 = vld [vmem:[%s318 + $0xa0] sm:$0xff]
      %v1185 = vld [vmem:[%s318 + $0xa8] sm:$0xff]
      %v1186 = vld [vmem:[%s318 + $0xb0] sm:$0xff]
      %v1187 = vld [vmem:[%s318 + $0xb8] sm:$0xff]
      %v1188 = vld [vmem:[%s318 + $0xc0] sm:$0xff]
      %v1189 = vld [vmem:[%s318 + $0xc8] sm:$0xff]
      %v1190 = vld [vmem:[%s318 + $0xd0] sm:$0xff]
      %v1191 = vld [vmem:[%s318 + $0xd8] sm:$0xff]
      %v1192 = vld [vmem:[%s318 + $0xe0] sm:$0xff]
      %v1193 = vld [vmem:[%s318 + $0xe8] sm:$0xff]
      %v1194 = vld [vmem:[%s318 + $0xf0] sm:$0xff]
      %v1195 = vld [vmem:[%s318 + $0xf8] sm:$0xff]
      %v1196 = vld [vmem:[%s318 + $0x100] sm:$0xff]
      %v1197 = vld [vmem:[%s318 + $0x108] sm:$0xff]
      %v1198 = vld [vmem:[%s318 + $0x110] sm:$0xff]
      %v1199 = vld [vmem:[%s318 + $0x118] sm:$0xff]
      %v1200 = vld [vmem:[%s318 + $0x120] sm:$0xff]
      %v1201 = vld [vmem:[%s318 + $0x128] sm:$0xff]
      %v1202 = vld [vmem:[%s318 + $0x130] sm:$0xff]
      %v1203 = vld [vmem:[%s318 + $0x138] sm:$0xff]
      %v1205 = vsel %vm445, %v1168, 0
      %v1208 = vsel %vm445, %v1173, 0
      %v1211 = vsel %vm445, %v1178, 0
      %v1214 = vsel %vm445, %v1183, 0
      %v1217 = vsel %vm445, %v1188, 0
      %v1220 = vsel %vm445, %v1193, 0
      %v1223 = vsel %vm445, %v1198, 0
      %v1226 = vsel %vm445, %v1203, 0
      %1228 = vmatprep.subr.mxu0 0.0
      %1229 = vmatpush1.msra.mxu0 %v333
      %1230 = vmatprep.subr.mxu0 0.0
      %1231 = vmatpush1.msra.mxu0 %v334
      %1232 = vmatprep.subr.mxu0 0.0
      %1233 = vmatpush1.msra.mxu0 %v335
      %1234 = vmatprep.subr.mxu0 0.0
      %1235 = vmatpush1.msra.mxu0 %v336
      %1236 = vmatprep.subr.mxu0 0.0
      %1237 = vmatpush1.msra.mxu0 %v337
      %1238 = vmatprep.subr.mxu0 0.0
      %1239 = vmatpush1.msra.mxu0 %v338
      %1240 = vmatprep.subr.mxu0 0.0
      %1241 = vmatpush1.msra.mxu0 %v339
      %1242 = vmatprep.subr.mxu0 0.0
      %1243 = vmatpush1.msra.mxu0 %v340
      %1244 = vmatprep.subr.mxu0 0.0
      %1245 = vmatpush1.msra.mxu0 %v341
      %1246 = vmatprep.subr.mxu0 0.0
      %1247 = vmatpush1.msra.mxu0 %v342
      %1248 = vmatprep.subr.mxu0 0.0
      %1249 = vmatpush1.msra.mxu0 %v343
      %1250 = vmatprep.subr.mxu0 0.0
      %1251 = vmatpush1.msra.mxu0 %v344
      %1252 = vmatprep.subr.mxu0 0.0
      %1253 = vmatpush1.msra.mxu0 %v345
      %1254 = vmatprep.subr.mxu0 0.0
      %1255 = vmatpush1.msra.mxu0 %v346
      %1256 = vmatprep.subr.mxu0 0.0
      %1257 = vmatpush1.msra.mxu0 %v347
      %1258 = vmatprep.subr.mxu0 0.0
      %1259 = vmatpush1.msra.mxu0 %v348
      %1260 = vmatprep.subr.mxu0 0.0
      %1261 = vmatpush1.msra.mxu0 %v349
      %1262 = vmatprep.subr.mxu0 0.0
      %1263 = vmatpush1.msra.mxu0 %v350
      %1264 = vmatprep.subr.mxu0 0.0
      %1265 = vmatpush1.msra.mxu0 %v351
      %1266 = vmatprep.subr.mxu0 0.0
      %1267 = vmatpush1.msra.mxu0 %v352
      %1268 = vmatprep.subr.mxu0 0.0
      %1269 = vmatpush1.msra.mxu0 %v353
      %1270 = vmatprep.subr.mxu0 0.0
      %1271 = vmatpush1.msra.mxu0 %v354
      %1272 = vmatprep.subr.mxu0 0.0
      %1273 = vmatpush1.msra.mxu0 %v355
      %1274 = vmatprep.subr.mxu0 0.0
      %1275 = vmatpush1.msra.mxu0 %v356
      %1276 = vmatprep.subr.mxu0 0.0
      %1277 = vmatpush1.msra.mxu0 %v357
      %1278 = vmatprep.subr.mxu0 0.0
      %1279 = vmatpush1.msra.mxu0 %v358
      %1280 = vmatprep.subr.mxu0 0.0
      %1281 = vmatpush1.msra.mxu0 %v359
      %1282 = vmatprep.subr.mxu0 0.0
      %1283 = vmatpush1.msra.mxu0 %v360
      %1284 = vmatprep.subr.mxu0 0.0
      %1285 = vmatpush1.msra.mxu0 %v361
      %1286 = vmatprep.subr.mxu0 0.0
      %1287 = vmatpush1.msra.mxu0 %v362
      %1288 = vmatprep.subr.mxu0 0.0
      %1289 = vmatpush1.msra.mxu0 %v363
      %1290 = vmatprep.subr.mxu0 0.0
      %1291 = vmatpush1.msra.mxu0 %v364
      %1292 = vmatprep.mubr.f32.mxu0 %v1165
      %1293 = vmatmul.mubr.f32.gmra.mrb[0].mxu0 %v1164
      %v1294 = vpop.f32.mrb[0].mxu0
      %v1295 = vadd.f32 0.0, %v1294
      %v1296 = vpop.f32.mrb[0].mxu0
      %1297 = vmatprep.mubr.f32.mxu0 %v1170
      %1298 = vmatmul.mubr.f32.gmra.mrb[0].mxu0 %v1169
      %v1299 = vpop.f32.mrb[0].mxu0
      %v1300 = vadd.f32 0.0, %v1299
      %v1301 = vpop.f32.mrb[0].mxu0
      %1302 = vmatprep.mubr.f32.mxu0 %v1175
      %1303 = vmatmul.mubr.f32.gmra.mrb[0].mxu0 %v1174
      %v1304 = vpop.f32.mrb[0].mxu0
      %v1305 = vadd.f32 0.0, %v1304
      %v1306 = vpop.f32.mrb[0].mxu0
      %1307 = vmatprep.mubr.f32.mxu0 %v1180
      %1308 = vmatmul.mubr.f32.gmra.mrb[0].mxu0 %v1179
      %v1309 = vpop.f32.mrb[0].mxu0
      %v1310 = vadd.f32 0.0, %v1309
      %v1311 = vpop.f32.mrb[0].mxu0
      %1312 = vmatprep.mubr.f32.mxu0 %v1185
      %1313 = vmatmul.mubr.f32.gmra.mrb[0].mxu0 %v1184
      %v1314 = vpop.f32.mrb[0].mxu0
      %v1315 = vadd.f32 0.0, %v1314
      %v1316 = vpop.f32.mrb[0].mxu0
      %1317 = vmatprep.mubr.f32.mxu0 %v1190
      %1318 = vmatmul.mubr.f32.gmra.mrb[0].mxu0 %v1189
      %v1319 = vpop.f32.mrb[0].mxu0
      %v1320 = vadd.f32 0.0, %v1319
      %v1321 = vpop.f32.mrb[0].mxu0
      %1322 = vmatprep.mubr.f32.mxu0 %v1195
      %1323 = vmatmul.mubr.f32.gmra.mrb[0].mxu0 %v1194
      %v1324 = vpop.f32.mrb[0].mxu0
      %v1325 = vadd.f32 0.0, %v1324
      %v1326 = vpop.f32.mrb[0].mxu0
      %1327 = vmatprep.mubr.f32.mxu0 %v1200
      %1328 = vmatmul.mubr.f32.gmra.mrb[0].mxu0 %v1199
      %v1329 = vpop.f32.mrb[0].mxu0
      %v1330 = vadd.f32 0.0, %v1329
      %v1331 = vpop.f32.mrb[0].mxu0
      %1332 = vdwg.mxu0
      %1333 = vmatprep.subr.mxu0 0.0
      %1334 = vmatpush1.msra.mxu0 %v365
      %1335 = vmatprep.subr.mxu0 0.0
      %1336 = vmatpush1.msra.mxu0 %v366
      %1337 = vmatprep.subr.mxu0 0.0
      %1338 = vmatpush1.msra.mxu0 %v367
      %1339 = vmatprep.subr.mxu0 0.0
      %1340 = vmatpush1.msra.mxu0 %v368
      %1341 = vmatprep.subr.mxu0 0.0
      %1342 = vmatpush1.msra.mxu0 %v369
      %1343 = vmatprep.subr.mxu0 0.0
      %1344 = vmatpush1.msra.mxu0 %v370
      %1345 = vmatprep.subr.mxu0 0.0
      %1346 = vmatpush1.msra.mxu0 %v371
      %1347 = vmatprep.subr.mxu0 0.0
      %1348 = vmatpush1.msra.mxu0 %v372
      %1349 = vmatprep.subr.mxu0 0.0
      %1350 = vmatpush1.msra.mxu0 %v373
      %1351 = vmatprep.subr.mxu0 0.0
      %1352 = vmatpush1.msra.mxu0 %v374
      %1353 = vmatprep.subr.mxu0 0.0
      %1354 = vmatpush1.msra.mxu0 %v375
      %1355 = vmatprep.subr.mxu0 0.0
      %1356 = vmatpush1.msra.mxu0 %v376
      %1357 = vmatprep.subr.mxu0 0.0
      %1358 = vmatpush1.msra.mxu0 %v377
      %1359 = vmatprep.subr.mxu0 0.0
      %1360 = vmatpush1.msra.mxu0 %v378
      %1361 = vmatprep.subr.mxu0 0.0
      %1362 = vmatpush1.msra.mxu0 %v379
      %1363 = vmatprep.subr.mxu0 0.0
      %1364 = vmatpush1.msra.mxu0 %v380
      %1365 = vmatprep.subr.mxu0 0.0
      %1366 = vmatpush1.msra.mxu0 %v381
      %1367 = vmatprep.subr.mxu0 0.0
      %1368 = vmatpush1.msra.mxu0 %v382
      %1369 = vmatprep.subr.mxu0 0.0
      %1370 = vmatpush1.msra.mxu0 %v383
      %1371 = vmatprep.subr.mxu0 0.0
      %1372 = vmatpush1.msra.mxu0 %v384
      %1373 = vmatprep.subr.mxu0 0.0
      %1374 = vmatpush1.msra.mxu0 %v385
      %1375 = vmatprep.subr.mxu0 0.0
      %1376 = vmatpush1.msra.mxu0 %v386
      %1377 = vmatprep.subr.mxu0 0.0
      %1378 = vmatpush1.msra.mxu0 %v387
      %1379 = vmatprep.subr.mxu0 0.0
      %1380 = vmatpush1.msra.mxu0 %v388
      %1381 = vmatprep.subr.mxu0 0.0
      %1382 = vmatpush1.msra.mxu0 %v389
      %1383 = vmatprep.subr.mxu0 0.0
      %1384 = vmatpush1.msra.mxu0 %v390
      %1385 = vmatprep.subr.mxu0 0.0
      %1386 = vmatpush1.msra.mxu0 %v391
      %1387 = vmatprep.subr.mxu0 0.0
      %1388 = vmatpush1.msra.mxu0 %v392
      %1389 = vmatprep.subr.mxu0 0.0
      %1390 = vmatpush1.msra.mxu0 %v393
      %1391 = vmatprep.subr.mxu0 0.0
      %1392 = vmatpush1.msra.mxu0 %v394
      %1393 = vmatprep.subr.mxu0 0.0
      %1394 = vmatpush1.msra.mxu0 %v395
      %1395 = vmatprep.subr.mxu0 0.0
      %1396 = vmatpush1.msra.mxu0 %v396
      %1397 = vmatprep.mubr.f32.mxu0 %v1167
      %1398 = vmatmul.mubr.f32.gmra.mrb[0].mxu0 %v1166
      %v1399 = vpop.f32.mrb[0].mxu0
      %v1400 = vadd.f32 %v1295, %v1399
      %v1401 = vpop.f32.mrb[0].mxu0
      %1402 = vmatprep.mubr.f32.mxu0 %v1172
      %1403 = vmatmul.mubr.f32.gmra.mrb[0].mxu0 %v1171
      %v1404 = vpop.f32.mrb[0].mxu0
      %v1405 = vadd.f32 %v1300, %v1404
      %v1406 = vpop.f32.mrb[0].mxu0
      %1407 = vmatprep.mubr.f32.mxu0 %v1177
      %1408 = vmatmul.mubr.f32.gmra.mrb[0].mxu0 %v1176
      %v1409 = vpop.f32.mrb[0].mxu0
      %v1410 = vadd.f32 %v1305, %v1409
      %v1411 = vpop.f32.mrb[0].mxu0
      %1412 = vmatprep.mubr.f32.mxu0 %v1182
      %1413 = vmatmul.mubr.f32.gmra.mrb[0].mxu0 %v1181
      %v1414 = vpop.f32.mrb[0].mxu0
      %v1415 = vadd.f32 %v1310, %v1414
      %v1416 = vpop.f32.mrb[0].mxu0
      %1417 = vmatprep.mubr.f32.mxu0 %v1187
      %1418 = vmatmul.mubr.f32.gmra.mrb[0].mxu0 %v1186
      %v1419 = vpop.f32.mrb[0].mxu0
      %v1420 = vadd.f32 %v1315, %v1419
      %v1421 = vpop.f32.mrb[0].mxu0
      %1422 = vmatprep.mubr.f32.mxu0 %v1192
      %1423 = vmatmul.mubr.f32.gmra.mrb[0].mxu0 %v1191
      %v1424 = vpop.f32.mrb[0].mxu0
      %v1425 = vadd.f32 %v1320, %v1424
      %v1426 = vpop.f32.mrb[0].mxu0
      %1427 = vmatprep.mubr.f32.mxu0 %v1197
      %1428 = vmatmul.mubr.f32.gmra.mrb[0].mxu0 %v1196
      %v1429 = vpop.f32.mrb[0].mxu0
      %v1430 = vadd.f32 %v1325, %v1429
      %v1431 = vpop.f32.mrb[0].mxu0
      %1432 = vmatprep.mubr.f32.mxu0 %v1202
      %1433 = vmatmul.mubr.f32.gmra.mrb[0].mxu0 %v1201
      %v1434 = vpop.f32.mrb[0].mxu0
      %v1435 = vadd.f32 %v1330, %v1434
      %v1436 = vpop.f32.mrb[0].mxu0
      %1437 = vdwg.mxu0
      %1438 = vmatprep.subr.mxu0 0.0
      %1439 = vmatpush1.msra.mxu0 %v397
      %1440 = vmatprep.subr.mxu0 0.0
      %1441 = vmatpush1.msra.mxu0 %v398
      %1442 = vmatprep.subr.mxu0 0.0
      %1443 = vmatpush1.msra.mxu0 %v399
      %1444 = vmatprep.subr.mxu0 0.0
      %1445 = vmatpush1.msra.mxu0 %v400
      %1446 = vmatprep.subr.mxu0 0.0
      %1447 = vmatpush1.msra.mxu0 %v401
      %1448 = vmatprep.subr.mxu0 0.0
      %1449 = vmatpush1.msra.mxu0 %v402
      %1450 = vmatprep.subr.mxu0 0.0
      %1451 = vmatpush1.msra.mxu0 %v403
      %1452 = vmatprep.subr.mxu0 0.0
      %1453 = vmatpush1.msra.mxu0 %v404
      %1454 = vmatprep.subr.mxu0 0.0
      %1455 = vmatpush1.msra.mxu0 0.0
      %1456 = vmatprep.subr.mxu0 0.0
      %1457 = vmatpush1.msra.mxu0 0.0
      %1458 = vmatprep.subr.mxu0 0.0
      %1459 = vmatpush1.msra.mxu0 0.0
      %1460 = vmatprep.subr.mxu0 0.0
      %1461 = vmatpush1.msra.mxu0 0.0
      %1462 = vmatprep.subr.mxu0 0.0
      %1463 = vmatpush1.msra.mxu0 0.0
      %1464 = vmatprep.subr.mxu0 0.0
      %1465 = vmatpush1.msra.mxu0 0.0
      %1466 = vmatprep.subr.mxu0 0.0
      %1467 = vmatpush1.msra.mxu0 0.0
      %1468 = vmatprep.subr.mxu0 0.0
      %1469 = vmatpush1.msra.mxu0 0.0
      %1470 = vmatprep.subr.mxu0 0.0
      %1471 = vmatpush1.msra.mxu0 0.0
      %1472 = vmatprep.subr.mxu0 0.0
      %1473 = vmatpush1.msra.mxu0 0.0
      %1474 = vmatprep.subr.mxu0 0.0
      %1475 = vmatpush1.msra.mxu0 0.0
      %1476 = vmatprep.subr.mxu0 0.0
      %1477 = vmatpush1.msra.mxu0 0.0
      %1478 = vmatprep.subr.mxu0 0.0
      %1479 = vmatpush1.msra.mxu0 0.0
      %1480 = vmatprep.subr.mxu0 0.0
      %1481 = vmatpush1.msra.mxu0 0.0
      %1482 = vmatprep.subr.mxu0 0.0
      %1483 = vmatpush1.msra.mxu0 0.0
      %1484 = vmatprep.subr.mxu0 0.0
      %1485 = vmatpush1.msra.mxu0 0.0
      %1486 = vmatprep.subr.mxu0 0.0
      %1487 = vmatpush1.msra.mxu0 0.0
      %1488 = vmatprep.subr.mxu0 0.0
      %1489 = vmatpush1.msra.mxu0 0.0
      %1490 = vmatprep.subr.mxu0 0.0
      %1491 = vmatpush1.msra.mxu0 0.0
      %1492 = vmatprep.subr.mxu0 0.0
      %1493 = vmatpush1.msra.mxu0 0.0
      %1494 = vmatprep.subr.mxu0 0.0
      %1495 = vmatpush1.msra.mxu0 0.0
      %1496 = vmatprep.subr.mxu0 0.0
      %1497 = vmatpush1.msra.mxu0 0.0
      %1498 = vmatprep.subr.mxu0 0.0
      %1499 = vmatpush1.msra.mxu0 0.0
      %1500 = vmatprep.subr.mxu0 0.0
      %1501 = vmatpush1.msra.mxu0 0.0
      %1502 = vmatprep.mubr.f32.mxu0 0.0
      %1503 = vmatmul.mubr.f32.gmra.mrb[0].mxu0 %v1205
      %v1504 = vpop.f32.mrb[0].mxu0
      %v1505 = vadd.f32 %v1400, %v1504
      %v1506 = vpop.f32.mrb[0].mxu0
      %1507 = vmatprep.mubr.f32.mxu0 0.0
      %1508 = vmatmul.mubr.f32.gmra.mrb[0].mxu0 %v1208
      %v1509 = vpop.f32.mrb[0].mxu0
      %v1510 = vadd.f32 %v1405, %v1509
      %v1511 = vpop.f32.mrb[0].mxu0
      %1512 = vmatprep.mubr.f32.mxu0 0.0
      %1513 = vmatmul.mubr.f32.gmra.mrb[0].mxu0 %v1211
      %v1514 = vpop.f32.mrb[0].mxu0
      %v1515 = vadd.f32 %v1410, %v1514
      %v1516 = vpop.f32.mrb[0].mxu0
      %1517 = vmatprep.mubr.f32.mxu0 0.0
      %1518 = vmatmul.mubr.f32.gmra.mrb[0].mxu0 %v1214
      %v1519 = vpop.f32.mrb[0].mxu0
      %v1520 = vadd.f32 %v1415, %v1519
      %v1521 = vpop.f32.mrb[0].mxu0
      %1522 = vmatprep.mubr.f32.mxu0 0.0
      %1523 = vmatmul.mubr.f32.gmra.mrb[0].mxu0 %v1217
      %v1524 = vpop.f32.mrb[0].mxu0
      %v1525 = vadd.f32 %v1420, %v1524
      %v1526 = vpop.f32.mrb[0].mxu0
      %1527 = vmatprep.mubr.f32.mxu0 0.0
      %1528 = vmatmul.mubr.f32.gmra.mrb[0].mxu0 %v1220
      %v1529 = vpop.f32.mrb[0].mxu0
      %v1530 = vadd.f32 %v1425, %v1529
      %v1531 = vpop.f32.mrb[0].mxu0
      %1532 = vmatprep.mubr.f32.mxu0 0.0
      %1533 = vmatmul.mubr.f32.gmra.mrb[0].mxu0 %v1223
      %v1534 = vpop.f32.mrb[0].mxu0
      %v1535 = vadd.f32 %v1430, %v1534
      %v1536 = vpop.f32.mrb[0].mxu0
      %1537 = vmatprep.mubr.f32.mxu0 0.0
      %1538 = vmatmul.mubr.f32.gmra.mrb[0].mxu0 %v1226
      %v1539 = vpop.f32.mrb[0].mxu0
      %v1540 = vadd.f32 %v1435, %v1539
      %v1541 = vpop.f32.mrb[0].mxu0
      %1542 = vdwg.mxu0
      %v1543 = vld [vmem:[%s325] sm:$0xff]
      %v1544 = vld [vmem:[%s325 + $0x8] sm:$0xff]
      %v1545 = vld [vmem:[%s325 + $0x10] sm:$0xff]
      %v1546 = vld [vmem:[%s325 + $0x18] sm:$0xff]
      %v1547 = vld [vmem:[%s325 + $0x20] sm:$0xff]
      %v1548 = vld [vmem:[%s325 + $0x28] sm:$0xff]
      %v1549 = vld [vmem:[%s325 + $0x30] sm:$0xff]
      %v1550 = vld [vmem:[%s325 + $0x38] sm:$0xff]
      %v1551 = vld [vmem:[%s325 + $0x40] sm:$0xff]
      %v1552 = vld [vmem:[%s325 + $0x48] sm:$0xff]
      %v1553 = vld [vmem:[%s325 + $0x50] sm:$0xff]
      %v1554 = vld [vmem:[%s325 + $0x58] sm:$0xff]
      %v1555 = vld [vmem:[%s325 + $0x60] sm:$0xff]
      %v1556 = vld [vmem:[%s325 + $0x68] sm:$0xff]
      %v1557 = vld [vmem:[%s325 + $0x70] sm:$0xff]
      %v1558 = vld [vmem:[%s325 + $0x78] sm:$0xff]
      %v1559 = vld [vmem:[%s325 + $0x80] sm:$0xff]
      %v1560 = vld [vmem:[%s325 + $0x88] sm:$0xff]
      %v1561 = vld [vmem:[%s325 + $0x90] sm:$0xff]
      %v1562 = vld [vmem:[%s325 + $0x98] sm:$0xff]
      %v1563 = vld [vmem:[%s325 + $0xa0] sm:$0xff]
      %v1564 = vld [vmem:[%s325 + $0xa8] sm:$0xff]
      %v1565 = vld [vmem:[%s325 + $0xb0] sm:$0xff]
      %v1566 = vld [vmem:[%s325 + $0xb8] sm:$0xff]
      %v1567 = vld [vmem:[%s325 + $0xc0] sm:$0xff]
      %v1568 = vld [vmem:[%s325 + $0xc8] sm:$0xff]
      %v1569 = vld [vmem:[%s325 + $0xd0] sm:$0xff]
      %v1570 = vld [vmem:[%s325 + $0xd8] sm:$0xff]
      %v1571 = vld [vmem:[%s325 + $0xe0] sm:$0xff]
      %v1572 = vld [vmem:[%s325 + $0xe8] sm:$0xff]
      %v1573 = vld [vmem:[%s325 + $0xf0] sm:$0xff]
      %v1574 = vld [vmem:[%s325 + $0xf8] sm:$0xff]
      %v1575 = vld [vmem:[%s325 + $0x100] sm:$0xff]
      %v1576 = vld [vmem:[%s325 + $0x108] sm:$0xff]
      %v1577 = vld [vmem:[%s325 + $0x110] sm:$0xff]
      %v1578 = vld [vmem:[%s325 + $0x118] sm:$0xff]
      %v1579 = vld [vmem:[%s325 + $0x120] sm:$0xff]
      %v1580 = vld [vmem:[%s325 + $0x128] sm:$0xff]
      %v1581 = vld [vmem:[%s325 + $0x130] sm:$0xff]
      %v1582 = vld [vmem:[%s325 + $0x138] sm:$0xff]
      %v1584 = vsel %vm445, %v1547, 0
      %v1587 = vsel %vm445, %v1552, 0
      %v1590 = vsel %vm445, %v1557, 0
      %v1593 = vsel %vm445, %v1562, 0
      %v1596 = vsel %vm445, %v1567, 0
      %v1599 = vsel %vm445, %v1572, 0
      %v1602 = vsel %vm445, %v1577, 0
      %v1605 = vsel %vm445, %v1582, 0
      %1607 = vmatprep.subr.mxu0 0.0
      %1608 = vmatpush1.msra.mxu0 %v333
      %1609 = vmatprep.subr.mxu0 0.0
      %1610 = vmatpush1.msra.mxu0 %v334
      %1611 = vmatprep.subr.mxu0 0.0
      %1612 = vmatpush1.msra.mxu0 %v335
      %1613 = vmatprep.subr.mxu0 0.0
      %1614 = vmatpush1.msra.mxu0 %v336
      %1615 = vmatprep.subr.mxu0 0.0
      %1616 = vmatpush1.msra.mxu0 %v337
      %1617 = vmatprep.subr.mxu0 0.0
      %1618 = vmatpush1.msra.mxu0 %v338
      %1619 = vmatprep.subr.mxu0 0.0
      %1620 = vmatpush1.msra.mxu0 %v339
      %1621 = vmatprep.subr.mxu0 0.0
      %1622 = vmatpush1.msra.mxu0 %v340
      %1623 = vmatprep.subr.mxu0 0.0
      %1624 = vmatpush1.msra.mxu0 %v341
      %1625 = vmatprep.subr.mxu0 0.0
      %1626 = vmatpush1.msra.mxu0 %v342
      %1627 = vmatprep.subr.mxu0 0.0
      %1628 = vmatpush1.msra.mxu0 %v343
      %1629 = vmatprep.subr.mxu0 0.0
      %1630 = vmatpush1.msra.mxu0 %v344
      %1631 = vmatprep.subr.mxu0 0.0
      %1632 = vmatpush1.msra.mxu0 %v345
      %1633 = vmatprep.subr.mxu0 0.0
      %1634 = vmatpush1.msra.mxu0 %v346
      %1635 = vmatprep.subr.mxu0 0.0
      %1636 = vmatpush1.msra.mxu0 %v347
      %1637 = vmatprep.subr.mxu0 0.0
      %1638 = vmatpush1.msra.mxu0 %v348
      %1639 = vmatprep.subr.mxu0 0.0
      %1640 = vmatpush1.msra.mxu0 %v349
      %1641 = vmatprep.subr.mxu0 0.0
      %1642 = vmatpush1.msra.mxu0 %v350
      %1643 = vmatprep.subr.mxu0 0.0
      %1644 = vmatpush1.msra.mxu0 %v351
      %1645 = vmatprep.subr.mxu0 0.0
      %1646 = vmatpush1.msra.mxu0 %v352
      %1647 = vmatprep.subr.mxu0 0.0
      %1648 = vmatpush1.msra.mxu0 %v353
      %1649 = vmatprep.subr.mxu0 0.0
      %1650 = vmatpush1.msra.mxu0 %v354
      %1651 = vmatprep.subr.mxu0 0.0
      %1652 = vmatpush1.msra.mxu0 %v355
      %1653 = vmatprep.subr.mxu0 0.0
      %1654 = vmatpush1.msra.mxu0 %v356
      %1655 = vmatprep.subr.mxu0 0.0
      %1656 = vmatpush1.msra.mxu0 %v357
      %1657 = vmatprep.subr.mxu0 0.0
      %1658 = vmatpush1.msra.mxu0 %v358
      %1659 = vmatprep.subr.mxu0 0.0
      %1660 = vmatpush1.msra.mxu0 %v359
      %1661 = vmatprep.subr.mxu0 0.0
      %1662 = vmatpush1.msra.mxu0 %v360
      %1663 = vmatprep.subr.mxu0 0.0
      %1664 = vmatpush1.msra.mxu0 %v361
      %1665 = vmatprep.subr.mxu0 0.0
      %1666 = vmatpush1.msra.mxu0 %v362
      %1667 = vmatprep.subr.mxu0 0.0
      %1668 = vmatpush1.msra.mxu0 %v363
      %1669 = vmatprep.subr.mxu0 0.0
      %1670 = vmatpush1.msra.mxu0 %v364
      %1671 = vmatprep.mubr.f32.mxu0 %v1544
      %1672 = vmatmul.mubr.f32.gmra.mrb[0].mxu0 %v1543
      %v1673 = vpop.f32.mrb[0].mxu0
      %v1674 = vadd.f32 0.0, %v1673
      %v1675 = vpop.f32.mrb[0].mxu0
      %1676 = vmatprep.mubr.f32.mxu0 %v1549
      %1677 = vmatmul.mubr.f32.gmra.mrb[0].mxu0 %v1548
      %v1678 = vpop.f32.mrb[0].mxu0
      %v1679 = vadd.f32 0.0, %v1678
      %v1680 = vpop.f32.mrb[0].mxu0
      %1681 = vmatprep.mubr.f32.mxu0 %v1554
      %1682 = vmatmul.mubr.f32.gmra.mrb[0].mxu0 %v1553
      %v1683 = vpop.f32.mrb[0].mxu0
      %v1684 = vadd.f32 0.0, %v1683
      %v1685 = vpop.f32.mrb[0].mxu0
      %1686 = vmatprep.mubr.f32.mxu0 %v1559
      %1687 = vmatmul.mubr.f32.gmra.mrb[0].mxu0 %v1558
      %v1688 = vpop.f32.mrb[0].mxu0
      %v1689 = vadd.f32 0.0, %v1688
      %v1690 = vpop.f32.mrb[0].mxu0
      %1691 = vmatprep.mubr.f32.mxu0 %v1564
      %1692 = vmatmul.mubr.f32.gmra.mrb[0].mxu0 %v1563
      %v1693 = vpop.f32.mrb[0].mxu0
      %v1694 = vadd.f32 0.0, %v1693
      %v1695 = vpop.f32.mrb[0].mxu0
      %1696 = vmatprep.mubr.f32.mxu0 %v1569
      %1697 = vmatmul.mubr.f32.gmra.mrb[0].mxu0 %v1568
      %v1698 = vpop.f32.mrb[0].mxu0
      %v1699 = vadd.f32 0.0, %v1698
      %v1700 = vpop.f32.mrb[0].mxu0
      %1701 = vmatprep.mubr.f32.mxu0 %v1574
      %1702 = vmatmul.mubr.f32.gmra.mrb[0].mxu0 %v1573
      %v1703 = vpop.f32.mrb[0].mxu0
      %v1704 = vadd.f32 0.0, %v1703
      %v1705 = vpop.f32.mrb[0].mxu0
      %1706 = vmatprep.mubr.f32.mxu0 %v1579
      %1707 = vmatmul.mubr.f32.gmra.mrb[0].mxu0 %v1578
      %v1708 = vpop.f32.mrb[0].mxu0
      %v1709 = vadd.f32 0.0, %v1708
      %v1710 = vpop.f32.mrb[0].mxu0
      %1711 = vdwg.mxu0
      %1712 = vmatprep.subr.mxu0 0.0
      %1713 = vmatpush1.msra.mxu0 %v365
      %1714 = vmatprep.subr.mxu0 0.0
      %1715 = vmatpush1.msra.mxu0 %v366
      %1716 = vmatprep.subr.mxu0 0.0
      %1717 = vmatpush1.msra.mxu0 %v367
      %1718 = vmatprep.subr.mxu0 0.0
      %1719 = vmatpush1.msra.mxu0 %v368
      %1720 = vmatprep.subr.mxu0 0.0
      %1721 = vmatpush1.msra.mxu0 %v369
      %1722 = vmatprep.subr.mxu0 0.0
      %1723 = vmatpush1.msra.mxu0 %v370
      %1724 = vmatprep.subr.mxu0 0.0
      %1725 = vmatpush1.msra.mxu0 %v371
      %1726 = vmatprep.subr.mxu0 0.0
      %1727 = vmatpush1.msra.mxu0 %v372
      %1728 = vmatprep.subr.mxu0 0.0
      %1729 = vmatpush1.msra.mxu0 %v373
      %1730 = vmatprep.subr.mxu0 0.0
      %1731 = vmatpush1.msra.mxu0 %v374
      %1732 = vmatprep.subr.mxu0 0.0
      %1733 = vmatpush1.msra.mxu0 %v375
      %1734 = vmatprep.subr.mxu0 0.0
      %1735 = vmatpush1.msra.mxu0 %v376
      %1736 = vmatprep.subr.mxu0 0.0
      %1737 = vmatpush1.msra.mxu0 %v377
      %1738 = vmatprep.subr.mxu0 0.0
      %1739 = vmatpush1.msra.mxu0 %v378
      %1740 = vmatprep.subr.mxu0 0.0
      %1741 = vmatpush1.msra.mxu0 %v379
      %1742 = vmatprep.subr.mxu0 0.0
      %1743 = vmatpush1.msra.mxu0 %v380
      %1744 = vmatprep.subr.mxu0 0.0
      %1745 = vmatpush1.msra.mxu0 %v381
      %1746 = vmatprep.subr.mxu0 0.0
      %1747 = vmatpush1.msra.mxu0 %v382
      %1748 = vmatprep.subr.mxu0 0.0
      %1749 = vmatpush1.msra.mxu0 %v383
      %1750 = vmatprep.subr.mxu0 0.0
      %1751 = vmatpush1.msra.mxu0 %v384
      %1752 = vmatprep.subr.mxu0 0.0
      %1753 = vmatpush1.msra.mxu0 %v385
      %1754 = vmatprep.subr.mxu0 0.0
      %1755 = vmatpush1.msra.mxu0 %v386
      %1756 = vmatprep.subr.mxu0 0.0
      %1757 = vmatpush1.msra.mxu0 %v387
      %1758 = vmatprep.subr.mxu0 0.0
      %1759 = vmatpush1.msra.mxu0 %v388
      %1760 = vmatprep.subr.mxu0 0.0
      %1761 = vmatpush1.msra.mxu0 %v389
      %1762 = vmatprep.subr.mxu0 0.0
      %1763 = vmatpush1.msra.mxu0 %v390
      %1764 = vmatprep.subr.mxu0 0.0
      %1765 = vmatpush1.msra.mxu0 %v391
      %1766 = vmatprep.subr.mxu0 0.0
      %1767 = vmatpush1.msra.mxu0 %v392
      %1768 = vmatprep.subr.mxu0 0.0
      %1769 = vmatpush1.msra.mxu0 %v393
      %1770 = vmatprep.subr.mxu0 0.0
      %1771 = vmatpush1.msra.mxu0 %v394
      %1772 = vmatprep.subr.mxu0 0.0
      %1773 = vmatpush1.msra.mxu0 %v395
      %1774 = vmatprep.subr.mxu0 0.0
      %1775 = vmatpush1.msra.mxu0 %v396
      %1776 = vmatprep.mubr.f32.mxu0 %v1546
      %1777 = vmatmul.mubr.f32.gmra.mrb[0].mxu0 %v1545
      %v1778 = vpop.f32.mrb[0].mxu0
      %v1779 = vadd.f32 %v1674, %v1778
      %v1780 = vpop.f32.mrb[0].mxu0
      %1781 = vmatprep.mubr.f32.mxu0 %v1551
      %1782 = vmatmul.mubr.f32.gmra.mrb[0].mxu0 %v1550
      %v1783 = vpop.f32.mrb[0].mxu0
      %v1784 = vadd.f32 %v1679, %v1783
      %v1785 = vpop.f32.mrb[0].mxu0
      %1786 = vmatprep.mubr.f32.mxu0 %v1556
      %1787 = vmatmul.mubr.f32.gmra.mrb[0].mxu0 %v1555
      %v1788 = vpop.f32.mrb[0].mxu0
      %v1789 = vadd.f32 %v1684, %v1788
      %v1790 = vpop.f32.mrb[0].mxu0
      %1791 = vmatprep.mubr.f32.mxu0 %v1561
      %1792 = vmatmul.mubr.f32.gmra.mrb[0].mxu0 %v1560
      %v1793 = vpop.f32.mrb[0].mxu0
      %v1794 = vadd.f32 %v1689, %v1793
      %v1795 = vpop.f32.mrb[0].mxu0
      %1796 = vmatprep.mubr.f32.mxu0 %v1566
      %1797 = vmatmul.mubr.f32.gmra.mrb[0].mxu0 %v1565
      %v1798 = vpop.f32.mrb[0].mxu0
      %v1799 = vadd.f32 %v1694, %v1798
      %v1800 = vpop.f32.mrb[0].mxu0
      %1801 = vmatprep.mubr.f32.mxu0 %v1571
      %1802 = vmatmul.mubr.f32.gmra.mrb[0].mxu0 %v1570
      %v1803 = vpop.f32.mrb[0].mxu0
      %v1804 = vadd.f32 %v1699, %v1803
      %v1805 = vpop.f32.mrb[0].mxu0
      %1806 = vmatprep.mubr.f32.mxu0 %v1576
      %1807 = vmatmul.mubr.f32.gmra.mrb[0].mxu0 %v1575
      %v1808 = vpop.f32.mrb[0].mxu0
      %v1809 = vadd.f32 %v1704, %v1808
      %v1810 = vpop.f32.mrb[0].mxu0
      %1811 = vmatprep.mubr.f32.mxu0 %v1581
      %1812 = vmatmul.mubr.f32.gmra.mrb[0].mxu0 %v1580
      %v1813 = vpop.f32.mrb[0].mxu0
      %v1814 = vadd.f32 %v1709, %v1813
      %v1815 = vpop.f32.mrb[0].mxu0
      %1816 = vdwg.mxu0
      %1817 = vmatprep.subr.mxu0 0.0
      %1818 = vmatpush1.msra.mxu0 %v397
      %1819 = vmatprep.subr.mxu0 0.0
      %1820 = vmatpush1.msra.mxu0 %v398
      %1821 = vmatprep.subr.mxu0 0.0
      %1822 = vmatpush1.msra.mxu0 %v399
      %1823 = vmatprep.subr.mxu0 0.0
      %1824 = vmatpush1.msra.mxu0 %v400
      %1825 = vmatprep.subr.mxu0 0.0
      %1826 = vmatpush1.msra.mxu0 %v401
      %1827 = vmatprep.subr.mxu0 0.0
      %1828 = vmatpush1.msra.mxu0 %v402
      %1829 = vmatprep.subr.mxu0 0.0
      %1830 = vmatpush1.msra.mxu0 %v403
      %1831 = vmatprep.subr.mxu0 0.0
      %1832 = vmatpush1.msra.mxu0 %v404
      %1833 = vmatprep.subr.mxu0 0.0
      %1834 = vmatpush1.msra.mxu0 0.0
      %1835 = vmatprep.subr.mxu0 0.0
      %1836 = vmatpush1.msra.mxu0 0.0
      %1837 = vmatprep.subr.mxu0 0.0
      %1838 = vmatpush1.msra.mxu0 0.0
      %1839 = vmatprep.subr.mxu0 0.0
      %1840 = vmatpush1.msra.mxu0 0.0
      %1841 = vmatprep.subr.mxu0 0.0
      %1842 = vmatpush1.msra.mxu0 0.0
      %1843 = vmatprep.subr.mxu0 0.0
      %1844 = vmatpush1.msra.mxu0 0.0
      %1845 = vmatprep.subr.mxu0 0.0
      %1846 = vmatpush1.msra.mxu0 0.0
      %1847 = vmatprep.subr.mxu0 0.0
      %1848 = vmatpush1.msra.mxu0 0.0
      %1849 = vmatprep.subr.mxu0 0.0
      %1850 = vmatpush1.msra.mxu0 0.0
      %1851 = vmatprep.subr.mxu0 0.0
      %1852 = vmatpush1.msra.mxu0 0.0
      %1853 = vmatprep.subr.mxu0 0.0
      %1854 = vmatpush1.msra.mxu0 0.0
      %1855 = vmatprep.subr.mxu0 0.0
      %1856 = vmatpush1.msra.mxu0 0.0
      %1857 = vmatprep.subr.mxu0 0.0
      %1858 = vmatpush1.msra.mxu0 0.0
      %1859 = vmatprep.subr.mxu0 0.0
      %1860 = vmatpush1.msra.mxu0 0.0
      %1861 = vmatprep.subr.mxu0 0.0
      %1862 = vmatpush1.msra.mxu0 0.0
      %1863 = vmatprep.subr.mxu0 0.0
      %1864 = vmatpush1.msra.mxu0 0.0
      %1865 = vmatprep.subr.mxu0 0.0
      %1866 = vmatpush1.msra.mxu0 0.0
      %1867 = vmatprep.subr.mxu0 0.0
      %1868 = vmatpush1.msra.mxu0 0.0
      %1869 = vmatprep.subr.mxu0 0.0
      %1870 = vmatpush1.msra.mxu0 0.0
      %1871 = vmatprep.subr.mxu0 0.0
      %1872 = vmatpush1.msra.mxu0 0.0
      %1873 = vmatprep.subr.mxu0 0.0
      %1874 = vmatpush1.msra.mxu0 0.0
      %1875 = vmatprep.subr.mxu0 0.0
      %1876 = vmatpush1.msra.mxu0 0.0
      %1877 = vmatprep.subr.mxu0 0.0
      %1878 = vmatpush1.msra.mxu0 0.0
      %1879 = vmatprep.subr.mxu0 0.0
      %1880 = vmatpush1.msra.mxu0 0.0
      %1881 = vmatprep.mubr.f32.mxu0 0.0
      %1882 = vmatmul.mubr.f32.gmra.mrb[0].mxu0 %v1584
      %v1883 = vpop.f32.mrb[0].mxu0
      %v1884 = vadd.f32 %v1779, %v1883
      %v1885 = vpop.f32.mrb[0].mxu0
      %1886 = vmatprep.mubr.f32.mxu0 0.0
      %1887 = vmatmul.mubr.f32.gmra.mrb[0].mxu0 %v1587
      %v1888 = vpop.f32.mrb[0].mxu0
      %v1889 = vadd.f32 %v1784, %v1888
      %v1890 = vpop.f32.mrb[0].mxu0
      %1891 = vmatprep.mubr.f32.mxu0 0.0
      %1892 = vmatmul.mubr.f32.gmra.mrb[0].mxu0 %v1590
      %v1893 = vpop.f32.mrb[0].mxu0
      %v1894 = vadd.f32 %v1789, %v1893
      %v1895 = vpop.f32.mrb[0].mxu0
      %1896 = vmatprep.mubr.f32.mxu0 0.0
      %1897 = vmatmul.mubr.f32.gmra.mrb[0].mxu0 %v1593
      %v1898 = vpop.f32.mrb[0].mxu0
      %v1899 = vadd.f32 %v1794, %v1898
      %v1900 = vpop.f32.mrb[0].mxu0
      %1901 = vmatprep.mubr.f32.mxu0 0.0
      %1902 = vmatmul.mubr.f32.gmra.mrb[0].mxu0 %v1596
      %v1903 = vpop.f32.mrb[0].mxu0
      %v1904 = vadd.f32 %v1799, %v1903
      %v1905 = vpop.f32.mrb[0].mxu0
      %1906 = vmatprep.mubr.f32.mxu0 0.0
      %1907 = vmatmul.mubr.f32.gmra.mrb[0].mxu0 %v1599
      %v1908 = vpop.f32.mrb[0].mxu0
      %v1909 = vadd.f32 %v1804, %v1908
      %v1910 = vpop.f32.mrb[0].mxu0
      %1911 = vmatprep.mubr.f32.mxu0 0.0
      %1912 = vmatmul.mubr.f32.gmra.mrb[0].mxu0 %v1602
      %v1913 = vpop.f32.mrb[0].mxu0
      %v1914 = vadd.f32 %v1809, %v1913
      %v1915 = vpop.f32.mrb[0].mxu0
      %1916 = vmatprep.mubr.f32.mxu0 0.0
      %1917 = vmatmul.mubr.f32.gmra.mrb[0].mxu0 %v1605
      %v1918 = vpop.f32.mrb[0].mxu0
      %v1919 = vadd.f32 %v1814, %v1918
      %v1920 = vpop.f32.mrb[0].mxu0
      %1921 = vdwg.mxu0
      %v1922 = vmax.f32 %v747, %v1126
      %v1923 = vmax.f32 %v752, %v1131
      %v1924 = vmax.f32 %v757, %v1136
      %v1925 = vmax.f32 %v762, %v1141
      %v1926 = vmax.f32 %v767, %v1146
      %v1927 = vmax.f32 %v772, %v1151
      %v1928 = vmax.f32 %v777, %v1156
      %v1929 = vmax.f32 %v782, %v1161
      %v1930 = vmax.f32 %v1505, %v1884
      %v1931 = vmax.f32 %v1510, %v1889
      %v1932 = vmax.f32 %v1515, %v1894
      %v1933 = vmax.f32 %v1520, %v1899
      %v1934 = vmax.f32 %v1525, %v1904
      %v1935 = vmax.f32 %v1530, %v1909
      %v1936 = vmax.f32 %v1535, %v1914
      %v1937 = vmax.f32 %v1540, %v1919
      %v1938 = vmax.f32 %v1922, %v1930
      %v1939 = vmax.f32 %v1923, %v1931
      %v1940 = vmax.f32 %v1924, %v1932
      %v1941 = vmax.f32 %v1925, %v1933
      %v1942 = vmax.f32 %v1926, %v1934
      %v1943 = vmax.f32 %v1927, %v1935
      %v1944 = vmax.f32 %v1928, %v1936
      %v1945 = vmax.f32 %v1929, %v1937
      %v1946 = vld [vmem:[%s5] sm:$0x1]
      %v1948 = vlaneseq
      %v1949 = vshrl.u32 %v1948, 7
      %v1950 = vsub.s32 0, %v1949
      %v1951 = vrot.slane %v1946, %v1950
      %v1953 = vadd.f32 %v1938, %v1951
      %v1954 = vadd.f32 %v1939, %v1951
      %v1955 = vadd.f32 %v1940, %v1951
      %v1956 = vadd.f32 %v1941, %v1951
      %v1957 = vadd.f32 %v1942, %v1951
      %v1958 = vadd.f32 %v1943, %v1951
      %v1959 = vadd.f32 %v1944, %v1951
      %v1960 = vadd.f32 %v1945, %v1951
      %v1961 = vmax.f32 %v1953, 0.0
      %v1962 = vmax.f32 %v1954, 0.0
      %v1963 = vmax.f32 %v1955, 0.0
      %v1964 = vmax.f32 %v1956, 0.0
      %v1965 = vmax.f32 %v1957, 0.0
      %v1966 = vmax.f32 %v1958, 0.0
      %v1967 = vmax.f32 %v1959, 0.0
      %v1968 = vmax.f32 %v1960, 0.0
      %1969 = vst [vmem:[%s331] sm:$0xff] %v1961
      %1970 = vst [vmem:[%s331 + $0x8] sm:$0xff] %v1962
      %1971 = vst [vmem:[%s331 + $0x10] sm:$0xff] %v1963
      %1972 = vst [vmem:[%s331 + $0x18] sm:$0xff] %v1964
      %1973 = vst [vmem:[%s331 + $0x20] sm:$0xff] %v1965
      %1974 = vst [vmem:[%s331 + $0x28] sm:$0xff] %v1966
      %1975 = vst [vmem:[%s331 + $0x30] sm:$0xff] %v1967
      %1976 = vst [vmem:[%s331 + $0x38] sm:$0xff] %v1968
      %s1977 = smul.u32 8, %s17
      %p1978 = scmp.lt.s32.totalorder %s1977, 15
      %s1979 = scalar_select %p1978, %s1977, 15
      %s1980 = smul.addr %s1979, 8
      %s1981 = scalar_lea.vmem %s6, %s1980
      // Predicated region
      $region45: #{bloodstain_forward.4} parent=43 // pred_check
        %p1982 = pneg %p181
      $region46: #{bloodstain_forward.4} parent=43 // pred_check_branch
        %1984 = sbr.rel (%p1982) target = $region48
      $region47: #{bloodstain_forward.4} parent=43 // pred_region
        %s1985 = smul.u32 8, %s17
      $region48: #{bloodstain_forward.4} parent=43 // pred_fallthru
        _
    $region44: #{bloodstain_forward.4} parent=5 // pred_fallthru
      _
    %p1986 = scmp.le.s32.totalorder 2, %s12
    // Predicated region
    $region49: #{bloodstain_forward.4} parent=5 // pred_check
      %p1987 = pneg %p1986
    $region50: #{bloodstain_forward.4} parent=5 // pred_check_branch
      %1989 = sbr.rel (%p1987) target = $region52
    $region51: #{bloodstain_forward.4} parent=5 // pred_region
      %s1990 = ssub.s32 %s12, 2
      // Predicated region
      $region53: #{bloodstain_forward.4} parent=51 // pred_check
        %p1991 = pneg %p187
      $region54: #{bloodstain_forward.4} parent=51 // pred_check_branch
        %1993 = sbr.rel (%p1991) target = $region56
      $region55: #{bloodstain_forward.4} parent=51 // pred_region
        %s1994 = smul.u32 8, %s18
        %p1995 = scmp.lt.s32.totalorder %s1994, 15
        %s1996 = scalar_select %p1995, %s1994, 15
        %s1997 = smul.addr %s1996, 8
        %s1998 = scalar_lea.vmem %s6, %s1997
      $region56: #{bloodstain_forward.4} parent=51 // pred_fallthru
        _
    $region52: #{bloodstain_forward.4} parent=5 // pred_fallthru
      _
  $region6: #{bloodstain_forward.4} parent=0 // loop_footer
    %s16 = sadd.s32 1, %s12
  $region7: #{bloodstain_forward.4} parent=0 // loop_footer_branch
    %11 = sbr.rel target = $region3
  $region8: #{bloodstain_forward.4} parent=0 // loop_exit
    _

// kernel: bloodstain_forward.5
$region0: #{bloodstain_forward.5}
  #allocation0 [shape = 'u32[]', space=smem, size = 0x4, offset = 0x4, fixed_abs, tag = 'smem constant byte address 0x4 - core index']
  #allocation1 [shape = 'u32[144,128]{1,0:T(1,128)}', space=vmem, size = 0x12000, scoped, tag = 'internal scratch']
  #allocation2 [shape = 'f32[2,256]{1,0:T(2,128)}', space=vmem, size = 0x800, scoped, tag = 'scratch operand']
  %s0 = inlined_call_operand.vmem [shape: f32[2,8192], index: 0, kind: input, shape index: {}]
  %s1 = inlined_call_operand.vmem [shape: f32[8192,256], index: 1, kind: input, shape index: {}]
  %s2 = inlined_call_operand.vmem [shape: f32[1,256], index: 2, kind: input, shape index: {}]
  %s3 = inlined_call_operand.vmem [shape: f32[256,2], index: 3, kind: input, shape index: {}]
  %s4 = inlined_call_operand.vmem [shape: f32[1,2], index: 4, kind: input, shape index: {}]
  %s5 = inlined_call_operand.hbm [shape: f32[2,2], index: 5, kind: output, shape index: {}]
  %s6 = sld [smem:[#allocation0]]
  $region61: #{bloodstain_forward.5} parent=0
    _
  %s8 = ssub.s32 1, %s6
  %s9 = scalar_select 0, %s8, %s6
  $region1: #{bloodstain_forward.5} parent=0
    #allocation3 [shape = 'u8[1024]{0}', space=vmem, size = 0x400, scoped, tag = 'output window, operand 0, single buffered']
    #allocation4 [shape = 's32[2]{0}', space=sflag, size = 0x8, scoped, tag = 'scoped memory for bloodstain_forward.5']
    %10 = vsyncpa [#allocation4], 0
    loop: start=0, step=1, limit=10
    $region2: #{bloodstain_forward.5} parent=1 // loop_pre_header
      _
    $region3: #{bloodstain_forward.5} parent=1 // loop_header
      %s12 = sphi 0, %s16
      %p13 = scmp.ge.s32.totalorder %s12, 10
      %s22 = sphi 0, %s24
      %s25 = sphi 0, %s22
      %s26 = sphi 0, %s25
      %s42 = sphi 0, %s26
      %s48 = sphi 0, %s50
      %s51 = sphi 0, %s48
      %s52 = sphi 0, %s51
      %s68 = sphi 0, %s52
      %s72 = sphi 0, %s72
      %s74 = sphi 0, %s72
      %s75 = sphi 0, %s74
      %s89 = sphi 0, %s75
      %s93 = sphi 0, %s93
      %s95 = sphi 0, %s93
      %s96 = sphi 0, %s95
      %s110 = sphi 0, %s96
      %s114 = sphi 0, %s114
      %s116 = sphi 0, %s114
      %s117 = sphi 0, %s116
      %s131 = sphi 0, %s117
      %s135 = sphi 0, %s135
      %s137 = sphi 0, %s135
      %s138 = sphi 0, %s137
      %s152 = sphi 0, %s138
    $region4: #{bloodstain_forward.5} parent=1 // loop_header_branch
      %15 = sbr.rel (%p13) target = $region8
    $region5: #{bloodstain_forward.5} parent=1 // loop_body
      %s17 = ssub.s32 %s12, 1
      %s18 = ssub.s32 %s12, 2
      %s19 = sadd.s32 %s12, 1
      %s20 = ssub.s32 %s12, %s19
      %p21 = scmp.eq.s32.totalorder %s20, 0
      %s23 = sadd.s32 %s22, 1
      %s24 = scalar_select %p21, %s22, %s23
      %p27 = pneg %p21
      %p28 = scmp.eq.s32.totalorder %s12, 7
      %p29 = por %p27, %p28
      %p30 = scmp.ne.s32.totalorder %s22, %s25
      %p31 = scmp.eq.s32.totalorder %s12, 0
      %p32 = por %p30, %p31
      %p33 = scmp.ne.s32.totalorder %s22, %s25
      %p34 = scmp.eq.s32.totalorder %s17, 7
      %p35 = por %p33, %p34
      %p36 = scmp.ne.s32.totalorder %s25, %s26
      %p37 = scmp.eq.s32.totalorder %s17, 0
      %p38 = por %p36, %p37
      %p39 = scmp.ne.s32.totalorder %s25, %s26
      %p40 = scmp.eq.s32.totalorder %s18, 7
      %p41 = por %p39, %p40
      %p43 = scmp.ne.s32.totalorder %s26, %s42
      %p44 = scmp.eq.s32.totalorder %s18, 0
      %p45 = por %p43, %p44
      %s46 = ssub.s32 %s12, %s19
      %p47 = scmp.eq.s32.totalorder %s46, 0
      %s49 = sadd.s32 %s48, 1
      %s50 = scalar_select %p47, %s48, %s49
      %p53 = pneg %p47
      %p54 = scmp.eq.s32.totalorder %s12, 7
      %p55 = por %p53, %p54
      %p56 = scmp.ne.s32.totalorder %s48, %s51
      %p57 = scmp.eq.s32.totalorder %s12, 0
      %p58 = por %p56, %p57
      %p59 = scmp.ne.s32.totalorder %s48, %s51
      %p60 = scmp.eq.s32.totalorder %s17, 7
      %p61 = por %p59, %p60
      %p62 = scmp.ne.s32.totalorder %s51, %s52
      %p63 = scmp.eq.s32.totalorder %s17, 0
      %p64 = por %p62, %p63
      %p65 = scmp.ne.s32.totalorder %s51, %s52
      %p66 = scmp.eq.s32.totalorder %s18, 7
      %p67 = por %p65, %p66
      %p69 = scmp.ne.s32.totalorder %s52, %s68
      %p70 = scmp.eq.s32.totalorder %s18, 0
      %p71 = por %p69, %p70
      %s73 = sadd.s32 %s72, 1
      %p76 = scmp.eq.s32.totalorder %s12, 7
      %p77 = scmp.ne.s32.totalorder %s72, %s74
      %p78 = scmp.eq.s32.totalorder %s12, 0
      %p79 = por %p77, %p78
      %p80 = scmp.ne.s32.totalorder %s72, %s74
      %p81 = scmp.eq.s32.totalorder %s17, 7
      %p82 = por %p80, %p81
      %p83 = scmp.ne.s32.totalorder %s74, %s75
      %p84 = scmp.eq.s32.totalorder %s17, 0
      %p85 = por %p83, %p84
      %p86 = scmp.ne.s32.totalorder %s74, %s75
      %p87 = scmp.eq.s32.totalorder %s18, 7
      %p88 = por %p86, %p87
      %p90 = scmp.ne.s32.totalorder %s75, %s89
      %p91 = scmp.eq.s32.totalorder %s18, 0
      %p92 = por %p90, %p91
      %s94 = sadd.s32 %s93, 1
      %p97 = scmp.eq.s32.totalorder %s12, 7
      %p98 = scmp.ne.s32.totalorder %s93, %s95
      %p99 = scmp.eq.s32.totalorder %s12, 0
      %p100 = por %p98, %p99
      %p101 = scmp.ne.s32.totalorder %s93, %s95
      %p102 = scmp.eq.s32.totalorder %s17, 7
      %p103 = por %p101, %p102
      %p104 = scmp.ne.s32.totalorder %s95, %s96
      %p105 = scmp.eq.s32.totalorder %s17, 0
      %p106 = por %p104, %p105
      %p107 = scmp.ne.s32.totalorder %s95, %s96
      %p108 = scmp.eq.s32.totalorder %s18, 7
      %p109 = por %p107, %p108
      %p111 = scmp.ne.s32.totalorder %s96, %s110
      %p112 = scmp.eq.s32.totalorder %s18, 0
      %p113 = por %p111, %p112
      %s115 = sadd.s32 %s114, 1
      %p118 = scmp.eq.s32.totalorder %s12, 7
      %p119 = scmp.ne.s32.totalorder %s114, %s116
      %p120 = scmp.eq.s32.totalorder %s12, 0
      %p121 = por %p119, %p120
      %p122 = scmp.ne.s32.totalorder %s114, %s116
      %p123 = scmp.eq.s32.totalorder %s17, 7
      %p124 = por %p122, %p123
      %p125 = scmp.ne.s32.totalorder %s116, %s117
      %p126 = scmp.eq.s32.totalorder %s17, 0
      %p127 = por %p125, %p126
      %p128 = scmp.ne.s32.totalorder %s116, %s117
      %p129 = scmp.eq.s32.totalorder %s18, 7
      %p130 = por %p128, %p129
      %p132 = scmp.ne.s32.totalorder %s117, %s131
      %p133 = scmp.eq.s32.totalorder %s18, 0
      %p134 = por %p132, %p133
      %s136 = sadd.s32 %s135, 1
      %p139 = scmp.eq.s32.totalorder %s12, 7
      %p140 = scmp.ne.s32.totalorder %s135, %s137
      %p141 = scmp.eq.s32.totalorder %s12, 0
      %p142 = por %p140, %p141
      %p143 = scmp.ne.s32.totalorder %s135, %s137
      %p144 = scmp.eq.s32.totalorder %s17, 7
      %p145 = por %p143, %p144
      %p146 = scmp.ne.s32.totalorder %s137, %s138
      %p147 = scmp.eq.s32.totalorder %s17, 0
      %p148 = por %p146, %p147
      %p149 = scmp.ne.s32.totalorder %s137, %s138
      %p150 = scmp.eq.s32.totalorder %s18, 7
      %p151 = por %p149, %p150
      %p153 = scmp.ne.s32.totalorder %s138, %s152
      %p154 = scmp.eq.s32.totalorder %s18, 0
      %p155 = por %p153, %p154
      %p156 = scmp.le.s32.totalorder 1, %s12
      %p157 = scmp.lt.s32.totalorder %s12, 9
      %p158 = pnand %p156, %p157
      %p159 = pneg %p158
      // Predicated region
      $region9: #{bloodstain_forward.5} parent=5 // pred_check
        _
      $region10: #{bloodstain_forward.5} parent=5 // pred_check_branch
        %161 = sbr.rel (%p158) target = $region12
      $region11: #{bloodstain_forward.5} parent=5 // pred_region
        %s162 = ssub.s32 %s12, 1
        // Predicated region
        $region13: #{bloodstain_forward.5} parent=11 // pred_check
          %p163 = pneg %p85
        $region14: #{bloodstain_forward.5} parent=11 // pred_check_branch
          %165 = sbr.rel (%p163) target = $region16
        $region15: #{bloodstain_forward.5} parent=11 // pred_region
          _
        $region16: #{bloodstain_forward.5} parent=11 // pred_fallthru
          _
        // Predicated region
        $region17: #{bloodstain_forward.5} parent=11 // pred_check
          %p166 = pneg %p106
        $region18: #{bloodstain_forward.5} parent=11 // pred_check_branch
          %168 = sbr.rel (%p166) target = $region20
        $region19: #{bloodstain_forward.5} parent=11 // pred_region
          _
        $region20: #{bloodstain_forward.5} parent=11 // pred_fallthru
          _
        // Predicated region
        $region21: #{bloodstain_forward.5} parent=11 // pred_check
          %p169 = pneg %p127
        $region22: #{bloodstain_forward.5} parent=11 // pred_check_branch
          %171 = sbr.rel (%p169) target = $region24
        $region23: #{bloodstain_forward.5} parent=11 // pred_region
          _
        $region24: #{bloodstain_forward.5} parent=11 // pred_fallthru
          _
      $region12: #{bloodstain_forward.5} parent=5 // pred_fallthru
        _
      %p172 = scmp.lt.s32.totalorder %s12, 8
      // Predicated region
      $region25: #{bloodstain_forward.5} parent=5 // pred_check
        %p173 = pneg %p172
      $region26: #{bloodstain_forward.5} parent=5 // pred_check_branch
        %175 = sbr.rel (%p173) target = $region28
      $region27: #{bloodstain_forward.5} parent=5 // pred_region
        // Predicated region
        $region29: #{bloodstain_forward.5} parent=27 // pred_check
          %p176 = pneg %p32
        $region30: #{bloodstain_forward.5} parent=27 // pred_check_branch
          %178 = sbr.rel (%p176) target = $region32
        $region31: #{bloodstain_forward.5} parent=27 // pred_region
          %s179 = smul.u32 8, %s12
          %p180 = scmp.lt.s32.totalorder %s179, 63
          %s181 = scalar_select %p180, %s179, 63
          %s182 = smul.addr %s181, 2
          %s183 = scalar_lea.vmem %s0, %s182
          %s184 = smul.u32 8, %s12
        $region32: #{bloodstain_forward.5} parent=27 // pred_fallthru
          _
        // Predicated region
        $region33: #{bloodstain_forward.5} parent=27 // pred_check
          %p185 = pneg %p58
        $region34: #{bloodstain_forward.5} parent=27 // pred_check_branch
          %187 = sbr.rel (%p185) target = $region36
        $region35: #{bloodstain_forward.5} parent=27 // pred_region
          %s188 = smul.u32 128, %s12
          %p189 = scmp.lt.s32.totalorder %s188, 1023
          %s190 = scalar_select %p189, %s188, 1023
          %s191 = smul.addr %s190, 2
          %s192 = smul.addr %s191, 8
          %s193 = scalar_lea.vmem %s1, %s192
          %s194 = smul.u32 128, %s12
        $region36: #{bloodstain_forward.5} parent=27 // pred_fallthru
          _
      $region28: #{bloodstain_forward.5} parent=5 // pred_fallthru
        _
      %p195 = scmp.le.s32.totalorder 1, %s12
      %p196 = scmp.lt.s32.totalorder %s12, 9
      %p197 = pnand %p195, %p196
      %p198 = pneg %p197
      // Predicated region
      $region37: #{bloodstain_forward.5} parent=5 // pred_check
        _
      $region38: #{bloodstain_forward.5} parent=5 // pred_check_branch
        %200 = sbr.rel (%p197) target = $region40
      $region39: #{bloodstain_forward.5} parent=5 // pred_region
        %s201 = ssub.s32 %s12, 1
        %s202 = smul.u32 8, %s17
        %p203 = scmp.lt.s32.totalorder %s202, 63
        %s204 = scalar_select %p203, %s202, 63
        %s205 = smul.addr %s204, 2
        %s206 = scalar_lea.vmem %s0, %s205
        %p207 = pneg %p38
        %p208 = pneg %p35
        %s209 = smul.u32 128, %s17
        %p210 = scmp.lt.s32.totalorder %s209, 1023
        %s211 = scalar_select %p210, %s209, 1023
        %s212 = smul.addr %s211, 2
        %s213 = smul.addr %s212, 8
        %s214 = scalar_lea.vmem %s1, %s213
        %p215 = pneg %p64
        %p216 = pneg %p61
        %p217 = pneg %p85
        %p218 = pneg %p82
        %p219 = pneg %p106
        %p220 = pneg %p103
        %p221 = pneg %p127
        %p222 = pneg %p124
        %p223 = pneg %p148
        %p224 = pneg %p145
        %s225 = smul.u32 8, %s17
        %p226 = scmp.lt.s32.totalorder %s225, 63
        %s227 = scalar_select %p226, %s225, 63
        %s228 = smul.addr %s227, 2
        %s229 = scalar_lea.vmem %s0, %s228
        %s230 = smul.u32 8, %s17
        %s231 = smul.u32 128, %s17
        %p232 = scmp.lt.s32.totalorder %s231, 1023
        %s233 = scalar_select %p232, %s231, 1023
        %s234 = smul.addr %s233, 2
        %s235 = smul.addr %s234, 8
        %s236 = scalar_lea.vmem %s1, %s235
        %s237 = smul.u32 128, %s17
        %p238 = scmp.eq.s32.totalorder %s17, 0
        // Predicated region
        $region41: #{bloodstain_forward.5} parent=39 // pred_check
          %p239 = pneg %p238
        $region42: #{bloodstain_forward.5} parent=39 // pred_check_branch
          %241 = sbr.rel (%p239) target = $region44
        $region43: #{bloodstain_forward.5} parent=39 // pred_region
          %242 = vst [vmem:[#allocation2] sm:$0xf] 0.0
        $region44: #{bloodstain_forward.5} parent=39 // pred_fallthru
          _
        %v243 = vld [vmem:[#allocation2] sm:$0xf]
        %v244 = vld [vmem:[%s229] sm:$0xff]
        %v245 = vld [vmem:[%s229 + $0x8] sm:$0xff]
        %v246 = vld [vmem:[%s236] sm:$0xff]
        %v247 = vld [vmem:[%s236 + $0x8] sm:$0xff]
        %v248 = vld [vmem:[%s236 + $0x10] sm:$0xff]
        %v249 = vld [vmem:[%s236 + $0x18] sm:$0xff]
        %v250 = vld [vmem:[%s236 + $0x20] sm:$0xff]
        %v251 = vld [vmem:[%s236 + $0x28] sm:$0xff]
        %v252 = vld [vmem:[%s236 + $0x30] sm:$0xff]
        %v253 = vld [vmem:[%s236 + $0x38] sm:$0xff]
        %v254 = vld [vmem:[%s236 + $0x40] sm:$0xff]
        %v255 = vld [vmem:[%s236 + $0x48] sm:$0xff]
        %v256 = vld [vmem:[%s236 + $0x50] sm:$0xff]
        %v257 = vld [vmem:[%s236 + $0x58] sm:$0xff]
        %v258 = vld [vmem:[%s236 + $0x60] sm:$0xff]
        %v259 = vld [vmem:[%s236 + $0x68] sm:$0xff]
        %v260 = vld [vmem:[%s236 + $0x70] sm:$0xff]
        %v261 = vld [vmem:[%s236 + $0x78] sm:$0xff]
        %v262 = vld [vmem:[%s236 + $0x80] sm:$0xff]
        %v263 = vld [vmem:[%s236 + $0x88] sm:$0xff]
        %v264 = vld [vmem:[%s236 + $0x90] sm:$0xff]
        %v265 = vld [vmem:[%s236 + $0x98] sm:$0xff]
        %v266 = vld [vmem:[%s236 + $0xa0] sm:$0xff]
        %v267 = vld [vmem:[%s236 + $0xa8] sm:$0xff]
        %v268 = vld [vmem:[%s236 + $0xb0] sm:$0xff]
        %v269 = vld [vmem:[%s236 + $0xb8] sm:$0xff]
        %v270 = vld [vmem:[%s236 + $0xc0] sm:$0xff]
        %v271 = vld [vmem:[%s236 + $0xc8] sm:$0xff]
        %v272 = vld [vmem:[%s236 + $0xd0] sm:$0xff]
        %v273 = vld [vmem:[%s236 + $0xd8] sm:$0xff]
        %v274 = vld [vmem:[%s236 + $0xe0] sm:$0xff]
        %v275 = vld [vmem:[%s236 + $0xe8] sm:$0xff]
        %v276 = vld [vmem:[%s236 + $0xf0] sm:$0xff]
        %v277 = vld [vmem:[%s236 + $0xf8] sm:$0xff]
        %v278 = vld [vmem:[%s236 + $0x100] sm:$0xff]
        %v279 = vld [vmem:[%s236 + $0x108] sm:$0xff]
        %v280 = vld [vmem:[%s236 + $0x110] sm:$0xff]
        %v281 = vld [vmem:[%s236 + $0x118] sm:$0xff]
        %v282 = vld [vmem:[%s236 + $0x120] sm:$0xff]
        %v283 = vld [vmem:[%s236 + $0x128] sm:$0xff]
        %v284 = vld [vmem:[%s236 + $0x130] sm:$0xff]
        %v285 = vld [vmem:[%s236 + $0x138] sm:$0xff]
        %v286 = vld [vmem:[%s236 + $0x140] sm:$0xff]
        %v287 = vld [vmem:[%s236 + $0x148] sm:$0xff]
        %v288 = vld [vmem:[%s236 + $0x150] sm:$0xff]
        %v289 = vld [vmem:[%s236 + $0x158] sm:$0xff]
        %v290 = vld [vmem:[%s236 + $0x160] sm:$0xff]
        %v291 = vld [vmem:[%s236 + $0x168] sm:$0xff]
        %v292 = vld [vmem:[%s236 + $0x170] sm:$0xff]
        %v293 = vld [vmem:[%s236 + $0x178] sm:$0xff]
        %v294 = vld [vmem:[%s236 + $0x180] sm:$0xff]
        %v295 = vld [vmem:[%s236 + $0x188] sm:$0xff]
        %v296 = vld [vmem:[%s236 + $0x190] sm:$0xff]
        %v297 = vld [vmem:[%s236 + $0x198] sm:$0xff]
        %v298 = vld [vmem:[%s236 + $0x1a0] sm:$0xff]
        %v299 = vld [vmem:[%s236 + $0x1a8] sm:$0xff]
        %v300 = vld [vmem:[%s236 + $0x1b0] sm:$0xff]
        %v301 = vld [vmem:[%s236 + $0x1b8] sm:$0xff]
        %v302 = vld [vmem:[%s236 + $0x1c0] sm:$0xff]
        %v303 = vld [vmem:[%s236 + $0x1c8] sm:$0xff]
        %v304 = vld [vmem:[%s236 + $0x1d0] sm:$0xff]
        %v305 = vld [vmem:[%s236 + $0x1d8] sm:$0xff]
        %v306 = vld [vmem:[%s236 + $0x1e0] sm:$0xff]
        %v307 = vld [vmem:[%s236 + $0x1e8] sm:$0xff]
        %v308 = vld [vmem:[%s236 + $0x1f0] sm:$0xff]
        %v309 = vld [vmem:[%s236 + $0x1f8] sm:$0xff]
        %v310 = vld [vmem:[%s236 + $0x200] sm:$0xff]
        %v311 = vld [vmem:[%s236 + $0x208] sm:$0xff]
        %v312 = vld [vmem:[%s236 + $0x210] sm:$0xff]
        %v313 = vld [vmem:[%s236 + $0x218] sm:$0xff]
        %v314 = vld [vmem:[%s236 + $0x220] sm:$0xff]
        %v315 = vld [vmem:[%s236 + $0x228] sm:$0xff]
        %v316 = vld [vmem:[%s236 + $0x230] sm:$0xff]
        %v317 = vld [vmem:[%s236 + $0x238] sm:$0xff]
        %v318 = vld [vmem:[%s236 + $0x240] sm:$0xff]
        %v319 = vld [vmem:[%s236 + $0x248] sm:$0xff]
        %v320 = vld [vmem:[%s236 + $0x250] sm:$0xff]
        %v321 = vld [vmem:[%s236 + $0x258] sm:$0xff]
        %v322 = vld [vmem:[%s236 + $0x260] sm:$0xff]
        %v323 = vld [vmem:[%s236 + $0x268] sm:$0xff]
        %v324 = vld [vmem:[%s236 + $0x270] sm:$0xff]
        %v325 = vld [vmem:[%s236 + $0x278] sm:$0xff]
        %v326 = vld [vmem:[%s236 + $0x280] sm:$0xff]
        %v327 = vld [vmem:[%s236 + $0x288] sm:$0xff]
        %v328 = vld [vmem:[%s236 + $0x290] sm:$0xff]
        %v329 = vld [vmem:[%s236 + $0x298] sm:$0xff]
        %v330 = vld [vmem:[%s236 + $0x2a0] sm:$0xff]
        %v331 = vld [vmem:[%s236 + $0x2a8] sm:$0xff]
        %v332 = vld [vmem:[%s236 + $0x2b0] sm:$0xff]
        %v333 = vld [vmem:[%s236 + $0x2b8] sm:$0xff]
        %v334 = vld [vmem:[%s236 + $0x2c0] sm:$0xff]
        %v335 = vld [vmem:[%s236 + $0x2c8] sm:$0xff]
        %v336 = vld [vmem:[%s236 + $0x2d0] sm:$0xff]
        %v337 = vld [vmem:[%s236 + $0x2d8] sm:$0xff]
        %v338 = vld [vmem:[%s236 + $0x2e0] sm:$0xff]
        %v339 = vld [vmem:[%s236 + $0x2e8] sm:$0xff]
        %v340 = vld [vmem:[%s236 + $0x2f0] sm:$0xff]
        %v341 = vld [vmem:[%s236 + $0x2f8] sm:$0xff]
        %v342 = vld [vmem:[%s236 + $0x300] sm:$0xff]
        %v343 = vld [vmem:[%s236 + $0x308] sm:$0xff]
        %v344 = vld [vmem:[%s236 + $0x310] sm:$0xff]
        %v345 = vld [vmem:[%s236 + $0x318] sm:$0xff]
        %v346 = vld [vmem:[%s236 + $0x320] sm:$0xff]
        %v347 = vld [vmem:[%s236 + $0x328] sm:$0xff]
        %v348 = vld [vmem:[%s236 + $0x330] sm:$0xff]
        %v349 = vld [vmem:[%s236 + $0x338] sm:$0xff]
        %v350 = vld [vmem:[%s236 + $0x340] sm:$0xff]
        %v351 = vld [vmem:[%s236 + $0x348] sm:$0xff]
        %v352 = vld [vmem:[%s236 + $0x350] sm:$0xff]
        %v353 = vld [vmem:[%s236 + $0x358] sm:$0xff]
        %v354 = vld [vmem:[%s236 + $0x360] sm:$0xff]
        %v355 = vld [vmem:[%s236 + $0x368] sm:$0xff]
        %v356 = vld [vmem:[%s236 + $0x370] sm:$0xff]
        %v357 = vld [vmem:[%s236 + $0x378] sm:$0xff]
        %v358 = vld [vmem:[%s236 + $0x380] sm:$0xff]
        %v359 = vld [vmem:[%s236 + $0x388] sm:$0xff]
        %v360 = vld [vmem:[%s236 + $0x390] sm:$0xff]
        %v361 = vld [vmem:[%s236 + $0x398] sm:$0xff]
        %v362 = vld [vmem:[%s236 + $0x3a0] sm:$0xff]
        %v363 = vld [vmem:[%s236 + $0x3a8] sm:$0xff]
        %v364 = vld [vmem:[%s236 + $0x3b0] sm:$0xff]
        %v365 = vld [vmem:[%s236 + $0x3b8] sm:$0xff]
        %v366 = vld [vmem:[%s236 + $0x3c0] sm:$0xff]
        %v367 = vld [vmem:[%s236 + $0x3c8] sm:$0xff]
        %v368 = vld [vmem:[%s236 + $0x3d0] sm:$0xff]
        %v369 = vld [vmem:[%s236 + $0x3d8] sm:$0xff]
        %v370 = vld [vmem:[%s236 + $0x3e0] sm:$0xff]
        %v371 = vld [vmem:[%s236 + $0x3e8] sm:$0xff]
        %v372 = vld [vmem:[%s236 + $0x3f0] sm:$0xff]
        %v373 = vld [vmem:[%s236 + $0x3f8] sm:$0xff]
        %v374 = vld [vmem:[%s236 + $0x400] sm:$0xff]
        %v375 = vld [vmem:[%s236 + $0x408] sm:$0xff]
        %v376 = vld [vmem:[%s236 + $0x410] sm:$0xff]
        %v377 = vld [vmem:[%s236 + $0x418] sm:$0xff]
        %v378 = vld [vmem:[%s236 + $0x420] sm:$0xff]
        %v379 = vld [vmem:[%s236 + $0x428] sm:$0xff]
        %v380 = vld [vmem:[%s236 + $0x430] sm:$0xff]
        %v381 = vld [vmem:[%s236 + $0x438] sm:$0xff]
        %v382 = vld [vmem:[%s236 + $0x440] sm:$0xff]
        %v383 = vld [vmem:[%s236 + $0x448] sm:$0xff]
        %v384 = vld [vmem:[%s236 + $0x450] sm:$0xff]
        %v385 = vld [vmem:[%s236 + $0x458] sm:$0xff]
        %v386 = vld [vmem:[%s236 + $0x460] sm:$0xff]
        %v387 = vld [vmem:[%s236 + $0x468] sm:$0xff]
        %v388 = vld [vmem:[%s236 + $0x470] sm:$0xff]
        %v389 = vld [vmem:[%s236 + $0x478] sm:$0xff]
        %v390 = vld [vmem:[%s236 + $0x480] sm:$0xff]
        %v391 = vld [vmem:[%s236 + $0x488] sm:$0xff]
        %v392 = vld [vmem:[%s236 + $0x490] sm:$0xff]
        %v393 = vld [vmem:[%s236 + $0x498] sm:$0xff]
        %v394 = vld [vmem:[%s236 + $0x4a0] sm:$0xff]
        %v395 = vld [vmem:[%s236 + $0x4a8] sm:$0xff]
        %v396 = vld [vmem:[%s236 + $0x4b0] sm:$0xff]
        %v397 = vld [vmem:[%s236 + $0x4b8] sm:$0xff]
        %v398 = vld [vmem:[%s236 + $0x4c0] sm:$0xff]
        %v399 = vld [vmem:[%s236 + $0x4c8] sm:$0xff]
        %v400 = vld [vmem:[%s236 + $0x4d0] sm:$0xff]
        %v401 = vld [vmem:[%s236 + $0x4d8] sm:$0xff]
        %v402 = vld [vmem:[%s236 + $0x4e0] sm:$0xff]
        %v403 = vld [vmem:[%s236 + $0x4e8] sm:$0xff]
        %v404 = vld [vmem:[%s236 + $0x4f0] sm:$0xff]
        %v405 = vld [vmem:[%s236 + $0x4f8] sm:$0xff]
        %v406 = vld [vmem:[%s236 + $0x500] sm:$0xff]
        %v407 = vld [vmem:[%s236 + $0x508] sm:$0xff]
        %v408 = vld [vmem:[%s236 + $0x510] sm:$0xff]
        %v409 = vld [vmem:[%s236 + $0x518] sm:$0xff]
        %v410 = vld [vmem:[%s236 + $0x520] sm:$0xff]
        %v411 = vld [vmem:[%s236 + $0x528] sm:$0xff]
        %v412 = vld [vmem:[%s236 + $0x530] sm:$0xff]
        %v413 = vld [vmem:[%s236 + $0x538] sm:$0xff]
        %v414 = vld [vmem:[%s236 + $0x540] sm:$0xff]
        %v415 = vld [vmem:[%s236 + $0x548] sm:$0xff]
        %v416 = vld [vmem:[%s236 + $0x550] sm:$0xff]
        %v417 = vld [vmem:[%s236 + $0x558] sm:$0xff]
        %v418 = vld [vmem:[%s236 + $0x560] sm:$0xff]
        %v419 = vld [vmem:[%s236 + $0x568] sm:$0xff]
        %v420 = vld [vmem:[%s236 + $0x570] sm:$0xff]
        %v421 = vld [vmem:[%s236 + $0x578] sm:$0xff]
        %v422 = vld [vmem:[%s236 + $0x580] sm:$0xff]
        %v423 = vld [vmem:[%s236 + $0x588] sm:$0xff]
        %v424 = vld [vmem:[%s236 + $0x590] sm:$0xff]
        %v425 = vld [vmem:[%s236 + $0x598] sm:$0xff]
        %v426 = vld [vmem:[%s236 + $0x5a0] sm:$0xff]
        %v427 = vld [vmem:[%s236 + $0x5a8] sm:$0xff]
        %v428 = vld [vmem:[%s236 + $0x5b0] sm:$0xff]
        %v429 = vld [vmem:[%s236 + $0x5b8] sm:$0xff]
        %v430 = vld [vmem:[%s236 + $0x5c0] sm:$0xff]
        %v431 = vld [vmem:[%s236 + $0x5c8] sm:$0xff]
        %v432 = vld [vmem:[%s236 + $0x5d0] sm:$0xff]
        %v433 = vld [vmem:[%s236 + $0x5d8] sm:$0xff]
        %v434 = vld [vmem:[%s236 + $0x5e0] sm:$0xff]
        %v435 = vld [vmem:[%s236 + $0x5e8] sm:$0xff]
        %v436 = vld [vmem:[%s236 + $0x5f0] sm:$0xff]
        %v437 = vld [vmem:[%s236 + $0x5f8] sm:$0xff]
        %v438 = vld [vmem:[%s236 + $0x600] sm:$0xff]
        %v439 = vld [vmem:[%s236 + $0x608] sm:$0xff]
        %v440 = vld [vmem:[%s236 + $0x610] sm:$0xff]
        %v441 = vld [vmem:[%s236 + $0x618] sm:$0xff]
        %v442 = vld [vmem:[%s236 + $0x620] sm:$0xff]
        %v443 = vld [vmem:[%s236 + $0x628] sm:$0xff]
        %v444 = vld [vmem:[%s236 + $0x630] sm:$0xff]
        %v445 = vld [vmem:[%s236 + $0x638] sm:$0xff]
        %v446 = vld [vmem:[%s236 + $0x640] sm:$0xff]
        %v447 = vld [vmem:[%s236 + $0x648] sm:$0xff]
        %v448 = vld [vmem:[%s236 + $0x650] sm:$0xff]
        %v449 = vld [vmem:[%s236 + $0x658] sm:$0xff]
        %v450 = vld [vmem:[%s236 + $0x660] sm:$0xff]
        %v451 = vld [vmem:[%s236 + $0x668] sm:$0xff]
        %v452 = vld [vmem:[%s236 + $0x670] sm:$0xff]
        %v453 = vld [vmem:[%s236 + $0x678] sm:$0xff]
        %v454 = vld [vmem:[%s236 + $0x680] sm:$0xff]
        %v455 = vld [vmem:[%s236 + $0x688] sm:$0xff]
        %v456 = vld [vmem:[%s236 + $0x690] sm:$0xff]
        %v457 = vld [vmem:[%s236 + $0x698] sm:$0xff]
        %v458 = vld [vmem:[%s236 + $0x6a0] sm:$0xff]
        %v459 = vld [vmem:[%s236 + $0x6a8] sm:$0xff]
        %v460 = vld [vmem:[%s236 + $0x6b0] sm:$0xff]
        %v461 = vld [vmem:[%s236 + $0x6b8] sm:$0xff]
        %v462 = vld [vmem:[%s236 + $0x6c0] sm:$0xff]
        %v463 = vld [vmem:[%s236 + $0x6c8] sm:$0xff]
        %v464 = vld [vmem:[%s236 + $0x6d0] sm:$0xff]
        %v465 = vld [vmem:[%s236 + $0x6d8] sm:$0xff]
        %v466 = vld [vmem:[%s236 + $0x6e0] sm:$0xff]
        %v467 = vld [vmem:[%s236 + $0x6e8] sm:$0xff]
        %v468 = vld [vmem:[%s236 + $0x6f0] sm:$0xff]
        %v469 = vld [vmem:[%s236 + $0x6f8] sm:$0xff]
        %v470 = vld [vmem:[%s236 + $0x700] sm:$0xff]
        %v471 = vld [vmem:[%s236 + $0x708] sm:$0xff]
        %v472 = vld [vmem:[%s236 + $0x710] sm:$0xff]
        %v473 = vld [vmem:[%s236 + $0x718] sm:$0xff]
        %v474 = vld [vmem:[%s236 + $0x720] sm:$0xff]
        %v475 = vld [vmem:[%s236 + $0x728] sm:$0xff]
        %v476 = vld [vmem:[%s236 + $0x730] sm:$0xff]
        %v477 = vld [vmem:[%s236 + $0x738] sm:$0xff]
        %v478 = vld [vmem:[%s236 + $0x740] sm:$0xff]
        %v479 = vld [vmem:[%s236 + $0x748] sm:$0xff]
        %v480 = vld [vmem:[%s236 + $0x750] sm:$0xff]
        %v481 = vld [vmem:[%s236 + $0x758] sm:$0xff]
        %v482 = vld [vmem:[%s236 + $0x760] sm:$0xff]
        %v483 = vld [vmem:[%s236 + $0x768] sm:$0xff]
        %v484 = vld [vmem:[%s236 + $0x770] sm:$0xff]
        %v485 = vld [vmem:[%s236 + $0x778] sm:$0xff]
        %v486 = vld [vmem:[%s236 + $0x780] sm:$0xff]
        %v487 = vld [vmem:[%s236 + $0x788] sm:$0xff]
        %v488 = vld [vmem:[%s236 + $0x790] sm:$0xff]
        %v489 = vld [vmem:[%s236 + $0x798] sm:$0xff]
        %v490 = vld [vmem:[%s236 + $0x7a0] sm:$0xff]
        %v491 = vld [vmem:[%s236 + $0x7a8] sm:$0xff]
        %v492 = vld [vmem:[%s236 + $0x7b0] sm:$0xff]
        %v493 = vld [vmem:[%s236 + $0x7b8] sm:$0xff]
        %v494 = vld [vmem:[%s236 + $0x7c0] sm:$0xff]
        %v495 = vld [vmem:[%s236 + $0x7c8] sm:$0xff]
        %v496 = vld [vmem:[%s236 + $0x7d0] sm:$0xff]
        %v497 = vld [vmem:[%s236 + $0x7d8] sm:$0xff]
        %v498 = vld [vmem:[%s236 + $0x7e0] sm:$0xff]
        %v499 = vld [vmem:[%s236 + $0x7e8] sm:$0xff]
        %v500 = vld [vmem:[%s236 + $0x7f0] sm:$0xff]
        %v501 = vld [vmem:[%s236 + $0x7f8] sm:$0xff]
        %v504 = vcombine.high %v244, %v244
        %v506 = vunpack.c.l.s4 1983009808
        %v507 = vunpack.c.0.s8 %v506
        %v508 = vlaneseq
        %v509 = vshrl.u32 %v508, 7
        %v510 = vsub.s32 %v507, %v509
        %v511 = vrot.slane %v244, %v510
        %v513 = vunpack.c.l.s4 1983009808
        %v514 = vunpack.c.0.s8 %v513
        %v515 = vlaneseq
        %v516 = vshrl.u32 %v515, 7
        %v517 = vsub.s32 %v514, %v516
        %v518 = vrot.slane %v504, %v517
        %v519 = vcombine.high %v511, %v511
        %v520 = vcombine.high %v518, %v518
        %v521 = vcombine.high %v245, %v245
        %v523 = vunpack.c.l.s4 1983009808
        %v524 = vunpack.c.0.s8 %v523
        %v525 = vlaneseq
        %v526 = vshrl.u32 %v525, 7
        %v527 = vsub.s32 %v524, %v526
        %v528 = vrot.slane %v245, %v527
        %v530 = vunpack.c.l.s4 1983009808
        %v531 = vunpack.c.0.s8 %v530
        %v532 = vlaneseq
        %v533 = vshrl.u32 %v532, 7
        %v534 = vsub.s32 %v531, %v533
        %v535 = vrot.slane %v521, %v534
        %v536 = vcombine.high %v528, %v528
        %v537 = vcombine.high %v535, %v535
        %546 = vmatprep.subr.mxu0 %v247
        %547 = vmatpush1.msra.mxu0 %v246
        %548 = vmatprep.subr.mxu0 %v249
        %549 = vmatpush1.msra.mxu0 %v248
        %550 = vmatprep.subr.mxu0 %v251
        %551 = vmatpush1.msra.mxu0 %v250
        %552 = vmatprep.subr.mxu0 %v253
        %553 = vmatpush1.msra.mxu0 %v252
        %554 = vmatprep.subr.mxu0 %v255
        %555 = vmatpush1.msra.mxu0 %v254
        %556 = vmatprep.subr.mxu0 %v257
        %557 = vmatpush1.msra.mxu0 %v256
        %558 = vmatprep.subr.mxu0 %v259
        %559 = vmatpush1.msra.mxu0 %v258
        %560 = vmatprep.subr.mxu0 %v261
        %561 = vmatpush1.msra.mxu0 %v260
        %562 = vmatprep.subr.mxu0 %v263
        %563 = vmatpush1.msra.mxu0 %v262
        %564 = vmatprep.subr.mxu0 %v265
        %565 = vmatpush1.msra.mxu0 %v264
        %566 = vmatprep.subr.mxu0 %v267
        %567 = vmatpush1.msra.mxu0 %v266
        %568 = vmatprep.subr.mxu0 %v269
        %569 = vmatpush1.msra.mxu0 %v268
        %570 = vmatprep.subr.mxu0 %v271
        %571 = vmatpush1.msra.mxu0 %v270
        %572 = vmatprep.subr.mxu0 %v273
        %573 = vmatpush1.msra.mxu0 %v272
        %574 = vmatprep.subr.mxu0 %v275
        %575 = vmatpush1.msra.mxu0 %v274
        %576 = vmatprep.subr.mxu0 %v277
        %577 = vmatpush1.msra.mxu0 %v276
        %578 = vmatprep.subr.mxu0 %v279
        %579 = vmatpush1.msra.mxu0 %v278
        %580 = vmatprep.subr.mxu0 %v281
        %581 = vmatpush1.msra.mxu0 %v280
        %582 = vmatprep.subr.mxu0 %v283
        %583 = vmatpush1.msra.mxu0 %v282
        %584 = vmatprep.subr.mxu0 %v285
        %585 = vmatpush1.msra.mxu0 %v284
        %586 = vmatprep.subr.mxu0 %v287
        %587 = vmatpush1.msra.mxu0 %v286
        %588 = vmatprep.subr.mxu0 %v289
        %589 = vmatpush1.msra.mxu0 %v288
        %590 = vmatprep.subr.mxu0 %v291
        %591 = vmatpush1.msra.mxu0 %v290
        %592 = vmatprep.subr.mxu0 %v293
        %593 = vmatpush1.msra.mxu0 %v292
        %594 = vmatprep.subr.mxu0 %v295
        %595 = vmatpush1.msra.mxu0 %v294
        %596 = vmatprep.subr.mxu0 %v297
        %597 = vmatpush1.msra.mxu0 %v296
        %598 = vmatprep.subr.mxu0 %v299
        %599 = vmatpush1.msra.mxu0 %v298
        %600 = vmatprep.subr.mxu0 %v301
        %601 = vmatpush1.msra.mxu0 %v300
        %602 = vmatprep.subr.mxu0 %v303
        %603 = vmatpush1.msra.mxu0 %v302
        %604 = vmatprep.subr.mxu0 %v305
        %605 = vmatpush1.msra.mxu0 %v304
        %606 = vmatprep.subr.mxu0 %v307
        %607 = vmatpush1.msra.mxu0 %v306
        %608 = vmatprep.subr.mxu0 %v309
        %609 = vmatpush1.msra.mxu0 %v308
        %610 = vmatprep.mubr.f32.mxu0 %v519
        %611 = vmatmul.mubr.f32.gmra.mrb[0].mxu0 %v511
        %v612 = vpop.f32.mrb[0].mxu0
        %v613 = vadd.f32 0.0, %v612
        %v614 = vpop.f32.mrb[0].mxu0
        %v615 = vadd.f32 0.0, %v614
        %616 = vdwg.mxu0
        %617 = vmatprep.subr.mxu0 %v311
        %618 = vmatpush1.msra.mxu0 %v310
        %619 = vmatprep.subr.mxu0 %v313
        %620 = vmatpush1.msra.mxu0 %v312
        %621 = vmatprep.subr.mxu0 %v315
        %622 = vmatpush1.msra.mxu0 %v314
        %623 = vmatprep.subr.mxu0 %v317
        %624 = vmatpush1.msra.mxu0 %v316
        %625 = vmatprep.subr.mxu0 %v319
        %626 = vmatpush1.msra.mxu0 %v318
        %627 = vmatprep.subr.mxu0 %v321
        %628 = vmatpush1.msra.mxu0 %v320
        %629 = vmatprep.subr.mxu0 %v323
        %630 = vmatpush1.msra.mxu0 %v322
        %631 = vmatprep.subr.mxu0 %v325
        %632 = vmatpush1.msra.mxu0 %v324
        %633 = vmatprep.subr.mxu0 %v327
        %634 = vmatpush1.msra.mxu0 %v326
        %635 = vmatprep.subr.mxu0 %v329
        %636 = vmatpush1.msra.mxu0 %v328
        %637 = vmatprep.subr.mxu0 %v331
        %638 = vmatpush1.msra.mxu0 %v330
        %639 = vmatprep.subr.mxu0 %v333
        %640 = vmatpush1.msra.mxu0 %v332
        %641 = vmatprep.subr.mxu0 %v335
        %642 = vmatpush1.msra.mxu0 %v334
        %643 = vmatprep.subr.mxu0 %v337
        %644 = vmatpush1.msra.mxu0 %v336
        %645 = vmatprep.subr.mxu0 %v339
        %646 = vmatpush1.msra.mxu0 %v338
        %647 = vmatprep.subr.mxu0 %v341
        %648 = vmatpush1.msra.mxu0 %v340
        %649 = vmatprep.subr.mxu0 %v343
        %650 = vmatpush1.msra.mxu0 %v342
        %651 = vmatprep.subr.mxu0 %v345
        %652 = vmatpush1.msra.mxu0 %v344
        %653 = vmatprep.subr.mxu0 %v347
        %654 = vmatpush1.msra.mxu0 %v346
        %655 = vmatprep.subr.mxu0 %v349
        %656 = vmatpush1.msra.mxu0 %v348
        %657 = vmatprep.subr.mxu0 %v351
        %658 = vmatpush1.msra.mxu0 %v350
        %659 = vmatprep.subr.mxu0 %v353
        %660 = vmatpush1.msra.mxu0 %v352
        %661 = vmatprep.subr.mxu0 %v355
        %662 = vmatpush1.msra.mxu0 %v354
        %663 = vmatprep.subr.mxu0 %v357
        %664 = vmatpush1.msra.mxu0 %v356
        %665 = vmatprep.subr.mxu0 %v359
        %666 = vmatpush1.msra.mxu0 %v358
        %667 = vmatprep.subr.mxu0 %v361
        %668 = vmatpush1.msra.mxu0 %v360
        %669 = vmatprep.subr.mxu0 %v363
        %670 = vmatpush1.msra.mxu0 %v362
        %671 = vmatprep.subr.mxu0 %v365
        %672 = vmatpush1.msra.mxu0 %v364
        %673 = vmatprep.subr.mxu0 %v367
        %674 = vmatpush1.msra.mxu0 %v366
        %675 = vmatprep.subr.mxu0 %v369
        %676 = vmatpush1.msra.mxu0 %v368
        %677 = vmatprep.subr.mxu0 %v371
        %678 = vmatpush1.msra.mxu0 %v370
        %679 = vmatprep.subr.mxu0 %v373
        %680 = vmatpush1.msra.mxu0 %v372
        %681 = vmatprep.mubr.f32.mxu0 %v520
        %682 = vmatmul.mubr.f32.gmra.mrb[0].mxu0 %v518
        %v683 = vpop.f32.mrb[0].mxu0
        %v684 = vadd.f32 %v613, %v683
        %v685 = vpop.f32.mrb[0].mxu0
        %v686 = vadd.f32 %v615, %v685
        %687 = vdwg.mxu0
        %688 = vmatprep.subr.mxu0 %v375
        %689 = vmatpush1.msra.mxu0 %v374
        %690 = vmatprep.subr.mxu0 %v377
        %691 = vmatpush1.msra.mxu0 %v376
        %692 = vmatprep.subr.mxu0 %v379
        %693 = vmatpush1.msra.mxu0 %v378
        %694 = vmatprep.subr.mxu0 %v381
        %695 = vmatpush1.msra.mxu0 %v380
        %696 = vmatprep.subr.mxu0 %v383
        %697 = vmatpush1.msra.mxu0 %v382
        %698 = vmatprep.subr.mxu0 %v385
        %699 = vmatpush1.msra.mxu0 %v384
        %700 = vmatprep.subr.mxu0 %v387
        %701 = vmatpush1.msra.mxu0 %v386
        %702 = vmatprep.subr.mxu0 %v389
        %703 = vmatpush1.msra.mxu0 %v388
        %704 = vmatprep.subr.mxu0 %v391
        %705 = vmatpush1.msra.mxu0 %v390
        %706 = vmatprep.subr.mxu0 %v393
        %707 = vmatpush1.msra.mxu0 %v392
        %708 = vmatprep.subr.mxu0 %v395
        %709 = vmatpush1.msra.mxu0 %v394
        %710 = vmatprep.subr.mxu0 %v397
        %711 = vmatpush1.msra.mxu0 %v396
        %712 = vmatprep.subr.mxu0 %v399
        %713 = vmatpush1.msra.mxu0 %v398
        %714 = vmatprep.subr.mxu0 %v401
        %715 = vmatpush1.msra.mxu0 %v400
        %716 = vmatprep.subr.mxu0 %v403
        %717 = vmatpush1.msra.mxu0 %v402
        %718 = vmatprep.subr.mxu0 %v405
        %719 = vmatpush1.msra.mxu0 %v404
        %720 = vmatprep.subr.mxu0 %v407
        %721 = vmatpush1.msra.mxu0 %v406
        %722 = vmatprep.subr.mxu0 %v409
        %723 = vmatpush1.msra.mxu0 %v408
        %724 = vmatprep.subr.mxu0 %v411
        %725 = vmatpush1.msra.mxu0 %v410
        %726 = vmatprep.subr.mxu0 %v413
        %727 = vmatpush1.msra.mxu0 %v412
        %728 = vmatprep.subr.mxu0 %v415
        %729 = vmatpush1.msra.mxu0 %v414
        %730 = vmatprep.subr.mxu0 %v417
        %731 = vmatpush1.msra.mxu0 %v416
        %732 = vmatprep.subr.mxu0 %v419
        %733 = vmatpush1.msra.mxu0 %v418
        %734 = vmatprep.subr.mxu0 %v421
        %735 = vmatpush1.msra.mxu0 %v420
        %736 = vmatprep.subr.mxu0 %v423
        %737 = vmatpush1.msra.mxu0 %v422
        %738 = vmatprep.subr.mxu0 %v425
        %739 = vmatpush1.msra.mxu0 %v424
        %740 = vmatprep.subr.mxu0 %v427
        %741 = vmatpush1.msra.mxu0 %v426
        %742 = vmatprep.subr.mxu0 %v429
        %743 = vmatpush1.msra.mxu0 %v428
        %744 = vmatprep.subr.mxu0 %v431
        %745 = vmatpush1.msra.mxu0 %v430
        %746 = vmatprep.subr.mxu0 %v433
        %747 = vmatpush1.msra.mxu0 %v432
        %748 = vmatprep.subr.mxu0 %v435
        %749 = vmatpush1.msra.mxu0 %v434
        %750 = vmatprep.subr.mxu0 %v437
        %751 = vmatpush1.msra.mxu0 %v436
        %752 = vmatprep.mubr.f32.mxu0 %v536
        %753 = vmatmul.mubr.f32.gmra.mrb[0].mxu0 %v528
        %v754 = vpop.f32.mrb[0].mxu0
        %v755 = vadd.f32 %v684, %v754
        %v756 = vpop.f32.mrb[0].mxu0
        %v757 = vadd.f32 %v686, %v756
        %758 = vdwg.mxu0
        %759 = vmatprep.subr.mxu0 %v439
        %760 = vmatpush1.msra.mxu0 %v438
        %761 = vmatprep.subr.mxu0 %v441
        %762 = vmatpush1.msra.mxu0 %v440
        %763 = vmatprep.subr.mxu0 %v443
        %764 = vmatpush1.msra.mxu0 %v442
        %765 = vmatprep.subr.mxu0 %v445
        %766 = vmatpush1.msra.mxu0 %v444
        %767 = vmatprep.subr.mxu0 %v447
        %768 = vmatpush1.msra.mxu0 %v446
        %769 = vmatprep.subr.mxu0 %v449
        %770 = vmatpush1.msra.mxu0 %v448
        %771 = vmatprep.subr.mxu0 %v451
        %772 = vmatpush1.msra.mxu0 %v450
        %773 = vmatprep.subr.mxu0 %v453
        %774 = vmatpush1.msra.mxu0 %v452
        %775 = vmatprep.subr.mxu0 %v455
        %776 = vmatpush1.msra.mxu0 %v454
        %777 = vmatprep.subr.mxu0 %v457
        %778 = vmatpush1.msra.mxu0 %v456
        %779 = vmatprep.subr.mxu0 %v459
        %780 = vmatpush1.msra.mxu0 %v458
        %781 = vmatprep.subr.mxu0 %v461
        %782 = vmatpush1.msra.mxu0 %v460
        %783 = vmatprep.subr.mxu0 %v463
        %784 = vmatpush1.msra.mxu0 %v462
        %785 = vmatprep.subr.mxu0 %v465
        %786 = vmatpush1.msra.mxu0 %v464
        %787 = vmatprep.subr.mxu0 %v467
        %788 = vmatpush1.msra.mxu0 %v466
        %789 = vmatprep.subr.mxu0 %v469
        %790 = vmatpush1.msra.mxu0 %v468
        %791 = vmatprep.subr.mxu0 %v471
        %792 = vmatpush1.msra.mxu0 %v470
        %793 = vmatprep.subr.mxu0 %v473
        %794 = vmatpush1.msra.mxu0 %v472
        %795 = vmatprep.subr.mxu0 %v475
        %796 = vmatpush1.msra.mxu0 %v474
        %797 = vmatprep.subr.mxu0 %v477
        %798 = vmatpush1.msra.mxu0 %v476
        %799 = vmatprep.subr.mxu0 %v479
        %800 = vmatpush1.msra.mxu0 %v478
        %801 = vmatprep.subr.mxu0 %v481
        %802 = vmatpush1.msra.mxu0 %v480
        %803 = vmatprep.subr.mxu0 %v483
        %804 = vmatpush1.msra.mxu0 %v482
        %805 = vmatprep.subr.mxu0 %v485
        %806 = vmatpush1.msra.mxu0 %v484
        %807 = vmatprep.subr.mxu0 %v487
        %808 = vmatpush1.msra.mxu0 %v486
        %809 = vmatprep.subr.mxu0 %v489
        %810 = vmatpush1.msra.mxu0 %v488
        %811 = vmatprep.subr.mxu0 %v491
        %812 = vmatpush1.msra.mxu0 %v490
        %813 = vmatprep.subr.mxu0 %v493
        %814 = vmatpush1.msra.mxu0 %v492
        %815 = vmatprep.subr.mxu0 %v495
        %816 = vmatpush1.msra.mxu0 %v494
        %817 = vmatprep.subr.mxu0 %v497
        %818 = vmatpush1.msra.mxu0 %v496
        %819 = vmatprep.subr.mxu0 %v499
        %820 = vmatpush1.msra.mxu0 %v498
        %821 = vmatprep.subr.mxu0 %v501
        %822 = vmatpush1.msra.mxu0 %v500
        %823 = vmatprep.mubr.f32.mxu0 %v537
        %824 = vmatmul.mubr.f32.gmra.mrb[0].mxu0 %v535
        %v825 = vpop.f32.mrb[0].mxu0
        %v826 = vadd.f32 %v755, %v825
        %v827 = vpop.f32.mrb[0].mxu0
        %v828 = vadd.f32 %v757, %v827
        %829 = vdwg.mxu0
        %v832 = vcombine.low %v826, %v828
        %v834 = vunpack.c.l.s4 1983009808
        %v835 = vunpack.c.0.s8 %v834
        %v836 = vlaneseq
        %v837 = vshrl.u32 %v836, 7
        %v838 = vsub.s32 %v835, %v837
        %v839 = vrot.slane %v832, %v838
        %v841 = vadd.f32 %v243, %v839
        %842 = vst [vmem:[#allocation2] sm:$0xf] %v841
        %p843 = scmp.eq.s32.totalorder %s17, 7
        // Predicated region
        $region45: #{bloodstain_forward.5} parent=39 // pred_check
          %p844 = pneg %p843
        $region46: #{bloodstain_forward.5} parent=39 // pred_check_branch
          %846 = sbr.rel (%p844) target = $region48
        $region47: #{bloodstain_forward.5} parent=39 // pred_region
          %v847 = vld [vmem:[#allocation2] sm:$0xf]
          %v848 = vld [vmem:[%s2] sm:$0x3]
          %v850 = vlaneseq
          %v851 = vshrl.u32 %v850, 7
          %v852 = vsub.s32 0, %v851
          %v853 = vrot.slane %v848, %v852
          %v854 = vlaneseq
          %v855 = vshrl.u32 %v854, 7
          %v856 = vsub.s32 1, %v855
          %v857 = vrot.slane %v848, %v856
          %v858 = vcombine.low %v853, %v857
          %v860 = vunpack.c.l.s4 1983009808
          %v861 = vunpack.c.0.s8 %v860
          %v862 = vlaneseq
          %v863 = vshrl.u32 %v862, 7
          %v864 = vsub.s32 %v861, %v863
          %v865 = vrot.slane %v858, %v864
          %v867 = vadd.f32 %v847, %v865
          %v868 = vmax.f32 %v867, 0.0
          %v869 = vld [vmem:[%s3] sm:$0xff]
          %v870 = vld [vmem:[%s3 + $0x8] sm:$0xff]
          %v871 = vld [vmem:[%s3 + $0x10] sm:$0xff]
          %v872 = vld [vmem:[%s3 + $0x18] sm:$0xff]
          %v873 = vld [vmem:[%s3 + $0x20] sm:$0xff]
          %v874 = vld [vmem:[%s3 + $0x28] sm:$0xff]
          %v875 = vld [vmem:[%s3 + $0x30] sm:$0xff]
          %v876 = vld [vmem:[%s3 + $0x38] sm:$0xff]
          %v877 = vld [vmem:[%s3 + $0x40] sm:$0xff]
          %v878 = vld [vmem:[%s3 + $0x48] sm:$0xff]
          %v879 = vld [vmem:[%s3 + $0x50] sm:$0xff]
          %v880 = vld [vmem:[%s3 + $0x58] sm:$0xff]
          %v881 = vld [vmem:[%s3 + $0x60] sm:$0xff]
          %v882 = vld [vmem:[%s3 + $0x68] sm:$0xff]
          %v883 = vld [vmem:[%s3 + $0x70] sm:$0xff]
          %v884 = vld [vmem:[%s3 + $0x78] sm:$0xff]
          %v885 = vld [vmem:[%s3 + $0x80] sm:$0xff]
          %v886 = vld [vmem:[%s3 + $0x88] sm:$0xff]
          %v887 = vld [vmem:[%s3 + $0x90] sm:$0xff]
          %v888 = vld [vmem:[%s3 + $0x98] sm:$0xff]
          %v889 = vld [vmem:[%s3 + $0xa0] sm:$0xff]
          %v890 = vld [vmem:[%s3 + $0xa8] sm:$0xff]
          %v891 = vld [vmem:[%s3 + $0xb0] sm:$0xff]
          %v892 = vld [vmem:[%s3 + $0xb8] sm:$0xff]
          %v893 = vld [vmem:[%s3 + $0xc0] sm:$0xff]
          %v894 = vld [vmem:[%s3 + $0xc8] sm:$0xff]
          %v895 = vld [vmem:[%s3 + $0xd0] sm:$0xff]
          %v896 = vld [vmem:[%s3 + $0xd8] sm:$0xff]
          %v897 = vld [vmem:[%s3 + $0xe0] sm:$0xff]
          %v898 = vld [vmem:[%s3 + $0xe8] sm:$0xff]
          %v899 = vld [vmem:[%s3 + $0xf0] sm:$0xff]
          %v900 = vld [vmem:[%s3 + $0xf8] sm:$0xff]
          %v901 = vld [vmem:[%s4] sm:$0x1]
          %v903 = vlaneseq
          %v904 = vshrl.u32 %v903, 7
          %v905 = vsub.s32 0, %v904
          %v906 = vrot.slane %v901, %v905
          %v910 = vunpack.c.l.s4 1983009808
          %v911 = vunpack.c.0.s8 %v910
          %v912 = vlaneseq
          %v913 = vshrl.u32 %v912, 7
          %v914 = vsub.s32 %v911, %v913
          %v915 = vrot.slane %v868, %v914
          %v916 = vcombine.high %v915, %v915
          %919 = vmatprep.subr.mxu0 0.0
          %920 = vmatpush1.msra.mxu0 %v869
          %921 = vmatprep.subr.mxu0 0.0
          %922 = vmatpush1.msra.mxu0 %v870
          %923 = vmatprep.subr.mxu0 0.0
          %924 = vmatpush1.msra.mxu0 %v871
          %925 = vmatprep.subr.mxu0 0.0
          %926 = vmatpush1.msra.mxu0 %v872
          %927 = vmatprep.subr.mxu0 0.0
          %928 = vmatpush1.msra.mxu0 %v873
          %929 = vmatprep.subr.mxu0 0.0
          %930 = vmatpush1.msra.mxu0 %v874
          %931 = vmatprep.subr.mxu0 0.0
          %932 = vmatpush1.msra.mxu0 %v875
          %933 = vmatprep.subr.mxu0 0.0
          %934 = vmatpush1.msra.mxu0 %v876
          %935 = vmatprep.subr.mxu0 0.0
          %936 = vmatpush1.msra.mxu0 %v877
          %937 = vmatprep.subr.mxu0 0.0
          %938 = vmatpush1.msra.mxu0 %v878
          %939 = vmatprep.subr.mxu0 0.0
          %940 = vmatpush1.msra.mxu0 %v879
          %941 = vmatprep.subr.mxu0 0.0
          %942 = vmatpush1.msra.mxu0 %v880
          %943 = vmatprep.subr.mxu0 0.0
          %944 = vmatpush1.msra.mxu0 %v881
          %945 = vmatprep.subr.mxu0 0.0
          %946 = vmatpush1.msra.mxu0 %v882
          %947 = vmatprep.subr.mxu0 0.0
          %948 = vmatpush1.msra.mxu0 %v883
          %949 = vmatprep.subr.mxu0 0.0
          %950 = vmatpush1.msra.mxu0 %v884
          %951 = vmatprep.subr.mxu0 0.0
          %952 = vmatpush1.msra.mxu0 %v885
          %953 = vmatprep.subr.mxu0 0.0
          %954 = vmatpush1.msra.mxu0 %v886
          %955 = vmatprep.subr.mxu0 0.0
          %956 = vmatpush1.msra.mxu0 %v887
          %957 = vmatprep.subr.mxu0 0.0
          %958 = vmatpush1.msra.mxu0 %v888
          %959 = vmatprep.subr.mxu0 0.0
          %960 = vmatpush1.msra.mxu0 %v889
          %961 = vmatprep.subr.mxu0 0.0
          %962 = vmatpush1.msra.mxu0 %v890
          %963 = vmatprep.subr.mxu0 0.0
          %964 = vmatpush1.msra.mxu0 %v891
          %965 = vmatprep.subr.mxu0 0.0
          %966 = vmatpush1.msra.mxu0 %v892
          %967 = vmatprep.subr.mxu0 0.0
          %968 = vmatpush1.msra.mxu0 %v893
          %969 = vmatprep.subr.mxu0 0.0
          %970 = vmatpush1.msra.mxu0 %v894
          %971 = vmatprep.subr.mxu0 0.0
          %972 = vmatpush1.msra.mxu0 %v895
          %973 = vmatprep.subr.mxu0 0.0
          %974 = vmatpush1.msra.mxu0 %v896
          %975 = vmatprep.subr.mxu0 0.0
          %976 = vmatpush1.msra.mxu0 %v897
          %977 = vmatprep.subr.mxu0 0.0
          %978 = vmatpush1.msra.mxu0 %v898
          %979 = vmatprep.subr.mxu0 0.0
          %980 = vmatpush1.msra.mxu0 %v899
          %981 = vmatprep.subr.mxu0 0.0
          %982 = vmatpush1.msra.mxu0 %v900
          %983 = vmatprep.mubr.f32.mxu0 %v916
          %984 = vmatmul.mubr.f32.gmra.mrb[0].mxu0 %v915
          %v985 = vpop.f32.mrb[0].mxu0
          %v986 = vadd.f32 %v906, %v985
          %v987 = vpop.f32.mrb[0].mxu0
          %988 = vdwg.mxu0
          %vm989 = vcmask 9216
          %990 = vst.msk [vmem:[#allocation3] sm:$0x3] %vm989, %v986
        $region48: #{bloodstain_forward.5} parent=39 // pred_fallthru
          _
        // Predicated region
        $region49: #{bloodstain_forward.5} parent=39 // pred_check
          %p991 = pneg %p145
        $region50: #{bloodstain_forward.5} parent=39 // pred_check_branch
          %993 = sbr.rel (%p991) target = $region52
        $region51: #{bloodstain_forward.5} parent=39 // pred_region
          %s995 = ssub.s32 32, 32
          %996 = vsyncadd [#allocation4], %s995
          %s998 = sshll.u32 [#allocation3], 4
          %s999 = int_to_ptr.vmem [resolvable:$true] %s998
          %1001 = dma.vmem_to_hbm [thread:$0]  %s999, 32, %s5, [#allocation4]
        $region52: #{bloodstain_forward.5} parent=39 // pred_fallthru
          _
        // Predicated region
        $region53: #{bloodstain_forward.5} parent=39 // pred_check
          %p1002 = pneg %p145
        $region54: #{bloodstain_forward.5} parent=39 // pred_check_branch
          %1004 = sbr.rel (%p1002) target = $region56
        $region55: #{bloodstain_forward.5} parent=39 // pred_region
          %1005 = dma.done [#allocation4], 32
        $region56: #{bloodstain_forward.5} parent=39 // pred_fallthru
          _
      $region40: #{bloodstain_forward.5} parent=5 // pred_fallthru
        _
      %p1006 = scmp.le.s32.totalorder 2, %s12
      // Predicated region
      $region57: #{bloodstain_forward.5} parent=5 // pred_check
        %p1007 = pneg %p1006
      $region58: #{bloodstain_forward.5} parent=5 // pred_check_branch
        %1009 = sbr.rel (%p1007) target = $region60
      $region59: #{bloodstain_forward.5} parent=5 // pred_region
        %s1010 = ssub.s32 %s12, 2
      $region60: #{bloodstain_forward.5} parent=5 // pred_fallthru
        _
    $region6: #{bloodstain_forward.5} parent=1 // loop_footer
      %s16 = sadd.s32 1, %s12
    $region7: #{bloodstain_forward.5} parent=1 // loop_footer_branch
      %11 = sbr.rel target = $region3
    $region8: #{bloodstain_forward.5} parent=1 // loop_exit
      _
    %1011 = vsyncpa [#allocation4], 1
    %s1012 = scalar_lea.sflag [#allocation4], 1
    %1013 = vsyncpa %s1012, 1

</llo_original>
